<compile_context>
chip_gen: v5e
topology: v5e:2x2
jax: 0.10.0
libtpu: 0.0.40
codegen_flags: <defaults>
</compile_context>

<pallas_src>
import functools

import jax
import jax.numpy as jnp
import numpy as np
from jax.experimental import pallas as pl
from jax.experimental.pallas import tpu as pltpu


def _fused_double_conv_kernel(x_ref, w1_ref, sb1_ref, w2_ref, sb2_ref,
                              o_ref, acc1_ref, y1_ref, acc2_ref):
    """Fused (conv3x3 -> BN -> ReLU) x 2 for one (batch, row-strip) grid step.

    x_ref   : (1, H+4, W+2, Cin)   zero-padded input image (resident per batch n)
    w1_ref  : (3, 3*Cin, C1)       layer-1 weights, dx folded into contraction
    sb1_ref : (2, C1)              row 0 = scale, row 1 = shift (bias+BN folded)
    w2_ref  : (3, 3*C1, C2)        layer-2 weights, dx folded into contraction
    sb2_ref : (2, C2)
    o_ref   : (1, TH*W, C2)        output strip (pixels row-major, lane = C2)
    acc1_ref: ((TH+2)*W, C1) f32   layer-1 accumulator (incl. 1-row halo)
    y1_ref  : (TH+2, W+2, C1) f32  staged layer-1 activations with zero halo
    acc2_ref: (TH*W, C2) f32       layer-2 accumulator
    """
    si = pl.program_id(1)
    n_strips = pl.num_programs(1)

    Cin = x_ref.shape[3]
    W = x_ref.shape[2] - 2
    C1 = y1_ref.shape[2]
    TH = y1_ref.shape[0] - 2

    def dx_fold(sl, c):
        # (rows, W+2, c) -> (rows*W, 3*c): concatenate the three W-shifted
        # slices along the channel (lane) axis so the 3 dx taps join the
        # matmul contraction dimension.
        rows = sl.shape[0]
        p = jnp.concatenate(
            [sl[:, 0:W, :], sl[:, 1:W + 1, :], sl[:, 2:W + 2, :]], axis=-1)
        return p.reshape(rows * W, 3 * c)

    # ---------------- layer 1: conv3x3 over TH+2 rows (incl. 1-row halo) ------
    r0 = pl.multiple_of(si * TH, TH)        # padded-row offset of this strip
    acc1_ref[...] = jnp.zeros_like(acc1_ref)
    for dy in range(3):
        sl = x_ref[0, pl.ds(r0 + dy, TH + 2), :, :]        # (TH+2, W+2, Cin)
        acc1_ref[...] += jnp.dot(dx_fold(sl, Cin), w1_ref[dy],
                                 preferred_element_type=jnp.float32)

    y1 = acc1_ref[...] * sb1_ref[0, :][None, :] + sb1_ref[1, :][None, :]
    y1 = jnp.maximum(y1, 0.0)

    # Stage layer-1 activations in VMEM with a zero 1-pixel halo (conv2's SAME
    # padding). The top/bottom halo rows are zeroed only at the true image
    # boundary; interior strips keep the recomputed neighbouring row.
    y1_ref[:, 1:W + 1, :] = y1.reshape(TH + 2, W, C1)
    zcol = jnp.zeros((TH + 2, 1, C1), jnp.float32)
    y1_ref[:, 0:1, :] = zcol
    y1_ref[:, W + 1:W + 2, :] = zcol

    @pl.when(si == 0)
    def _zero_top_halo():
        y1_ref[0:1, :, :] = jnp.zeros((1, W + 2, C1), jnp.float32)

    @pl.when(si == n_strips - 1)
    def _zero_bottom_halo():
        y1_ref[TH + 1:TH + 2, :, :] = jnp.zeros((1, W + 2, C1), jnp.float32)

    # ---------------- layer 2: conv3x3 over the TH output rows ----------------
    acc2_ref[...] = jnp.zeros_like(acc2_ref)
    for dy in range(3):
        sl = y1_ref[dy:dy + TH, :, :]                      # (TH, W+2, C1)
        acc2_ref[...] += jnp.dot(dx_fold(sl, C1), w2_ref[dy],
                                 preferred_element_type=jnp.float32)

    y2 = acc2_ref[...] * sb2_ref[0, :][None, :] + sb2_ref[1, :][None, :]
    y2 = jnp.maximum(y2, 0.0)
    o_ref[0] = y2.astype(o_ref.dtype)


def _choose_strip_rows(H, W, c1, c2, max_bytes=6 << 20, min_strips=2):
    """Pick the row-strip height TH (a divisor of H).

    Keeps the per-strip f32 working set (accumulators + staged layer-1
    activations + double-buffered output block) under `max_bytes` — a budget
    that is safe on v5e/v6e/v7x scoped-VMEM defaults — while preferring at
    least `min_strips` strips so the grid exposes >=2 parallel steps even when
    the batch is 1 (two TensorCores on v7x).
    """
    def strip_bytes(th):
        rows1 = (th + 2) * W
        rows2 = th * W
        return 4 * (rows1 * c1                  # layer-1 accumulator
                    + (th + 2) * (W + 2) * c1   # staged layer-1 activations
                    + rows2 * c2                # layer-2 accumulator
                    + 2 * rows2 * c2            # double-buffered output block
                    + rows1 * 3 * c1)           # transient dx-folded patch

    divisors = [t for t in range(1, H + 1) if H % t == 0]
    ok = [t for t in divisors
          if ((t * W) % 8 == 0 or t == H) and strip_bytes(t) <= max_bytes]
    if not ok:
        return H
    multi = [t for t in ok if H // t >= min_strips]
    return max(multi) if multi else max(ok)


def fused_double_conv(x_nhwc, w1, scale1, bias1, w2, scale2, bias2):
    """x_nhwc: (N,H,W,Cin) f32; w*: (3,3,Cin,C*) HWIO; scale*/bias*: (C*,)."""
    N, H, W, Cin = x_nhwc.shape
    C1 = w1.shape[-1]
    C2 = w2.shape[-1]
    TH = _choose_strip_rows(H, W, C1, C2)
    n_strips = H // TH

    # Spatial zero halo for the two stacked 3x3 SAME convs (2 rows / 1 col).
    # XLA fuses this pad with the NCHW->NHWC transpose feeding it, so it does
    # not add a separate HBM pass.
    x_pad = jnp.pad(x_nhwc, ((0, 0), (2, 2), (1, 1), (0, 0)))

    w1f = w1.reshape(3, 3 * Cin, C1)   # fold dx into the contraction dim
    w2f = w2.reshape(3, 3 * C1, C2)
    sb1 = jnp.stack([scale1, bias1], axis=0)   # (2, C1)
    sb2 = jnp.stack([scale2, bias2], axis=0)   # (2, C2)

    flops = 2 * N * H * W * 9 * (Cin * C1 + C1 * C2)
    bytes_accessed = 4 * (x_pad.size + w1f.size + w2f.size + sb1.size
                          + sb2.size + N * H * W * C2)

    out_flat = pl.pallas_call(
        _fused_double_conv_kernel,
        out_shape=jax.ShapeDtypeStruct((N, H * W, C2), x_nhwc.dtype),
        grid_spec=pltpu.PrefetchScalarGridSpec(
            num_scalar_prefetch=0,
            grid=(N, n_strips),
            in_specs=[
                # Full padded image per batch element; block index only depends
                # on n, so it stays resident across the strips of that element.
                pl.BlockSpec((1, H + 4, W + 2, Cin), lambda n, s: (n, 0, 0, 0)),
                pl.BlockSpec((3, 3 * Cin, C1), lambda n, s: (0, 0, 0)),
                pl.BlockSpec((2, C1), lambda n, s: (0, 0)),
                pl.BlockSpec((3, 3 * C1, C2), lambda n, s: (0, 0, 0)),
                pl.BlockSpec((2, C2), lambda n, s: (0, 0)),
            ],
            out_specs=pl.BlockSpec((1, TH * W, C2), lambda n, s: (n, s, 0)),
            scratch_shapes=[
                pltpu.VMEM(((TH + 2) * W, C1), jnp.float32),   # layer-1 acc
                pltpu.VMEM((TH + 2, W + 2, C1), jnp.float32),  # staged layer-1
                pltpu.VMEM((TH * W, C2), jnp.float32),         # layer-2 acc
            ],
        ),
        compiler_params=pltpu.CompilerParams(
            dimension_semantics=("parallel", "parallel"),
            vmem_limit_bytes=32 * 1024 * 1024),
        cost_estimate=pl.CostEstimate(flops=flops, transcendentals=0,
                                      bytes_accessed=bytes_accessed),
    )(x_pad, w1f, sb1, w2f, sb2)

    return out_flat.reshape(N, H, W, C2)


def init_inconv_params(key, in_ch, out_ch):
    """Deterministic synthetic params mirroring DoubleConv(use_resnet=False)."""
    ks = jax.random.split(key, 8)
    eps = 1e-5

    def make_layer(k_w, k_b, k_g, k_beta, cin, cout):
        w = jax.random.normal(k_w, (3, 3, cin, cout), jnp.float32) * 0.1  # HWIO
        b = jax.random.normal(k_b, (cout,), jnp.float32) * 0.1
        gamma = 1.0 + 0.1 * jax.random.normal(k_g, (cout,), jnp.float32)
        beta = 0.1 * jax.random.normal(k_beta, (cout,), jnp.float32)
        running_mean = jnp.zeros((cout,), jnp.float32)
        running_var = jnp.ones((cout,), jnp.float32)
        # Fold conv bias + BN (eval mode) into scale/shift applied post-matmul.
        scale = gamma / jnp.sqrt(running_var + eps)
        shift = beta + (b - running_mean) * scale
        return w, scale, shift

    w1, s1, sh1 = make_layer(ks[0], ks[1], ks[2], ks[3], in_ch, out_ch)
    w2, s2, sh2 = make_layer(ks[4], ks[5], ks[6], ks[7], out_ch, out_ch)
    return dict(w1=w1, scale1=s1, bias1=sh1, w2=w2, scale2=s2, bias2=sh2)


@jax.jit
def inconv_forward(x_nchw, params):
    """InConv forward. Input NCHW (PyTorch convention), output NCHW.

    The NCHW<->NHWC transposes are kept only to preserve the PyTorch layout at
    the module boundary; in an NHWC end-to-end model they would be dropped.
    """
    x = jnp.transpose(x_nchw, (0, 2, 3, 1))   # NCHW -> NHWC
    y = fused_double_conv(x,
                          params["w1"], params["scale1"], params["bias1"],
                          params["w2"], params["scale2"], params["bias2"])
    return jnp.transpose(y, (0, 3, 1, 2))     # NHWC -> NCHW


def _reference(x_nchw, params):
    """Pure-JAX reference (lax conv) for verification."""
    x = jnp.transpose(x_nchw, (0, 2, 3, 1))
    dn = jax.lax.conv_dimension_numbers(x.shape, params["w1"].shape,
                                        ("NHWC", "HWIO", "NHWC"))

    def layer(x, w, scale, bias):
        y = jax.lax.conv_general_dilated(x, w, (1, 1), "SAME",
                                         dimension_numbers=dn)
        y = y * scale[None, None, None, :] + bias[None, None, None, :]
        return jnp.maximum(y, 0.0)

    x = layer(x, params["w1"], params["scale1"], params["bias1"])
    x = layer(x, params["w2"], params["scale2"], params["bias2"])
    return jnp.transpose(x, (0, 3, 1, 2))


if __name__ == "__main__":
    key = jax.random.PRNGKey(0)
    k_x, k_p = jax.random.split(key)

    in_ch, out_ch = 4, 8
    N, H, W = 2, 16, 16
    x = jax.random.normal(k_x, (N, in_ch, H, W), jnp.float32)  # NCHW like PyTorch

    params = init_inconv_params(k_p, in_ch, out_ch)

    out = jax.block_until_ready(inconv_forward(x, params))
    ref = jax.block_until_ready(_reference(x, params))
    np.testing.assert_allclose(np.asarray(out), np.asarray(ref),
                               rtol=1e-4, atol=1e-4)

    print("KERNEL_OK")
</pallas_src>

<mosaic_0001>
module attributes {stable_mosaic.version = 11 : i64} {
  func.func @_fused_double_conv_kernel(%arg0: i32, %arg1: i32, %arg2: memref<1x20x18x4xf32, #tpu.memory_space<vmem>>, %arg3: memref<3x12x8xf32, #tpu.memory_space<vmem>>, %arg4: memref<2x8xf32, #tpu.memory_space<vmem>>, %arg5: memref<3x24x8xf32, #tpu.memory_space<vmem>>, %arg6: memref<2x8xf32, #tpu.memory_space<vmem>>, %arg7: memref<1x128x8xf32, #tpu.memory_space<vmem>>, %arg8: memref<160x8xf32, #tpu.memory_space<vmem>>, %arg9: memref<10x18x8xf32, #tpu.memory_space<vmem>>, %arg10: memref<128x8xf32, #tpu.memory_space<vmem>>) attributes {dimension_semantics = [#tpu.dimension_semantics<parallel>, #tpu.dimension_semantics<parallel>], iteration_bounds = array<i64: 2, 2>, scalar_prefetch = 0 : i64, scratch_operands = 3 : i64, tpu.core_type = #tpu.core_type<tc>, window_params = [{transform_indices = @transform_0, window_bounds = array<i64: 1, 20, 18, 4>}, {pipeline_mode = #tpu.pipeline_mode<synchronous>, transform_indices = @transform_1, window_bounds = array<i64: 3, 12, 8>}, {pipeline_mode = #tpu.pipeline_mode<synchronous>, transform_indices = @transform_2, window_bounds = array<i64: 2, 8>}, {pipeline_mode = #tpu.pipeline_mode<synchronous>, transform_indices = @transform_3, window_bounds = array<i64: 3, 24, 8>}, {pipeline_mode = #tpu.pipeline_mode<synchronous>, transform_indices = @transform_4, window_bounds = array<i64: 2, 8>}, {transform_indices = @transform_5, window_bounds = array<i64: 1, 128, 8>}]} {
    %c8_i32 = arith.constant 8 : i32
    %0 = arith.muli %arg1, %c8_i32 : i32
    %1 = tpu.assume_multiple %0, 8 : i32
    %cst = arith.constant 0.000000e+00 : f32
    %2 = vector.broadcast %cst : f32 to vector<160x8xf32>
    %c0 = arith.constant 0 : index
    %c0_0 = arith.constant 0 : index
    %3 = vector.load %arg8[%c0, %c0_0] : memref<160x8xf32, #tpu.memory_space<vmem>>, vector<160x8xf32>
    tpu.vector_store %arg8[%c0, %c0_0], %2 {strides = array<i32>} : memref<160x8xf32, #tpu.memory_space<vmem>>, vector<160x8xf32>,
    %c0_i32 = arith.constant 0 : i32
    %4 = arith.addi %1, %c0_i32 : i32
    %c0_1 = arith.constant 0 : index
    %5 = arith.index_cast %4 : i32 to index
    %c0_2 = arith.constant 0 : index
    %c0_3 = arith.constant 0 : index
    %6 = vector.load %arg2[%c0_1, %5, %c0_2, %c0_3] : memref<1x20x18x4xf32, #tpu.memory_space<vmem>>, vector<1x10x18x4xf32>
    %7 = vector.shape_cast %6 : vector<1x10x18x4xf32> to vector<10x18x4xf32>
    %c0_4 = arith.constant 0 : index
    %c0_5 = arith.constant 0 : index
    %8 = vector.load %arg8[%c0_4, %c0_5] : memref<160x8xf32, #tpu.memory_space<vmem>>, vector<160x8xf32>
    %9 = vector.extract_strided_slice %7 {offsets = [0, 0, 0], sizes = [10, 16, 4], strides = [1, 1, 1]} : vector<10x18x4xf32> to vector<10x16x4xf32>
    %10 = vector.extract_strided_slice %7 {offsets = [0, 1, 0], sizes = [10, 16, 4], strides = [1, 1, 1]} : vector<10x18x4xf32> to vector<10x16x4xf32>
    %11 = vector.extract_strided_slice %7 {offsets = [0, 2, 0], sizes = [10, 16, 4], strides = [1, 1, 1]} : vector<10x18x4xf32> to vector<10x16x4xf32>
    %12 = tpu.concatenate %9, %10, %11 in 2 : vector<10x16x4xf32>, vector<10x16x4xf32>, vector<10x16x4xf32> -> vector<10x16x12xf32>
    %13 = vector.shape_cast %12 : vector<10x16x12xf32> to vector<160x12xf32>
    %c0_6 = arith.constant 0 : index
    %c0_7 = arith.constant 0 : index
    %c0_8 = arith.constant 0 : index
    %14 = vector.load %arg3[%c0_6, %c0_7, %c0_8] : memref<3x12x8xf32, #tpu.memory_space<vmem>>, vector<1x12x8xf32>
    %15 = vector.shape_cast %14 : vector<1x12x8xf32> to vector<12x8xf32>
    %cst_9 = arith.constant dense<0.000000e+00> : vector<160x8xf32>
    %16 = tpu.matmul %13, %15, %cst_9 {dimension_numbers = #tpu.dot_dimension_numbers<[1], [0], [0], [1], [0, 0, 1, 1], [], []>} : vector<160x12xf32>, vector<12x8xf32>, vector<160x8xf32> -> vector<160x8xf32>
    %17 = arith.addf %8, %16 : vector<160x8xf32>
    %c0_10 = arith.constant 0 : index
    %c0_11 = arith.constant 0 : index
    %18 = vector.load %arg8[%c0_10, %c0_11] : memref<160x8xf32, #tpu.memory_space<vmem>>, vector<160x8xf32>
    tpu.vector_store %arg8[%c0_10, %c0_11], %17 {strides = array<i32>} : memref<160x8xf32, #tpu.memory_space<vmem>>, vector<160x8xf32>,
    %c1_i32 = arith.constant 1 : i32
    %19 = arith.addi %1, %c1_i32 : i32
    %c0_12 = arith.constant 0 : index
    %20 = arith.index_cast %19 : i32 to index
    %c0_13 = arith.constant 0 : index
    %c0_14 = arith.constant 0 : index
    %21 = vector.load %arg2[%c0_12, %20, %c0_13, %c0_14] : memref<1x20x18x4xf32, #tpu.memory_space<vmem>>, vector<1x10x18x4xf32>
    %22 = vector.shape_cast %21 : vector<1x10x18x4xf32> to vector<10x18x4xf32>
    %c0_15 = arith.constant 0 : index
    %c0_16 = arith.constant 0 : index
    %23 = vector.load %arg8[%c0_15, %c0_16] : memref<160x8xf32, #tpu.memory_space<vmem>>, vector<160x8xf32>
    %24 = vector.extract_strided_slice %22 {offsets = [0, 0, 0], sizes = [10, 16, 4], strides = [1, 1, 1]} : vector<10x18x4xf32> to vector<10x16x4xf32>
    %25 = vector.extract_strided_slice %22 {offsets = [0, 1, 0], sizes = [10, 16, 4], strides = [1, 1, 1]} : vector<10x18x4xf32> to vector<10x16x4xf32>
    %26 = vector.extract_strided_slice %22 {offsets = [0, 2, 0], sizes = [10, 16, 4], strides = [1, 1, 1]} : vector<10x18x4xf32> to vector<10x16x4xf32>
    %27 = tpu.concatenate %24, %25, %26 in 2 : vector<10x16x4xf32>, vector<10x16x4xf32>, vector<10x16x4xf32> -> vector<10x16x12xf32>
    %28 = vector.shape_cast %27 : vector<10x16x12xf32> to vector<160x12xf32>
    %c1 = arith.constant 1 : index
    %c0_17 = arith.constant 0 : index
    %c0_18 = arith.constant 0 : index
    %29 = vector.load %arg3[%c1, %c0_17, %c0_18] : memref<3x12x8xf32, #tpu.memory_space<vmem>>, vector<1x12x8xf32>
    %30 = vector.shape_cast %29 : vector<1x12x8xf32> to vector<12x8xf32>
    %cst_19 = arith.constant dense<0.000000e+00> : vector<160x8xf32>
    %31 = tpu.matmul %28, %30, %cst_19 {dimension_numbers = #tpu.dot_dimension_numbers<[1], [0], [0], [1], [0, 0, 1, 1], [], []>} : vector<160x12xf32>, vector<12x8xf32>, vector<160x8xf32> -> vector<160x8xf32>
    %32 = arith.addf %23, %31 : vector<160x8xf32>
    %c0_20 = arith.constant 0 : index
    %c0_21 = arith.constant 0 : index
    %33 = vector.load %arg8[%c0_20, %c0_21] : memref<160x8xf32, #tpu.memory_space<vmem>>, vector<160x8xf32>
    tpu.vector_store %arg8[%c0_20, %c0_21], %32 {strides = array<i32>} : memref<160x8xf32, #tpu.memory_space<vmem>>, vector<160x8xf32>,
    %c2_i32 = arith.constant 2 : i32
    %34 = arith.addi %1, %c2_i32 : i32
    %c0_22 = arith.constant 0 : index
    %35 = arith.index_cast %34 : i32 to index
    %c0_23 = arith.constant 0 : index
    %c0_24 = arith.constant 0 : index
    %36 = vector.load %arg2[%c0_22, %35, %c0_23, %c0_24] : memref<1x20x18x4xf32, #tpu.memory_space<vmem>>, vector<1x10x18x4xf32>
    %37 = vector.shape_cast %36 : vector<1x10x18x4xf32> to vector<10x18x4xf32>
    %c0_25 = arith.constant 0 : index
    %c0_26 = arith.constant 0 : index
    %38 = vector.load %arg8[%c0_25, %c0_26] : memref<160x8xf32, #tpu.memory_space<vmem>>, vector<160x8xf32>
    %39 = vector.extract_strided_slice %37 {offsets = [0, 0, 0], sizes = [10, 16, 4], strides = [1, 1, 1]} : vector<10x18x4xf32> to vector<10x16x4xf32>
    %40 = vector.extract_strided_slice %37 {offsets = [0, 1, 0], sizes = [10, 16, 4], strides = [1, 1, 1]} : vector<10x18x4xf32> to vector<10x16x4xf32>
    %41 = vector.extract_strided_slice %37 {offsets = [0, 2, 0], sizes = [10, 16, 4], strides = [1, 1, 1]} : vector<10x18x4xf32> to vector<10x16x4xf32>
    %42 = tpu.concatenate %39, %40, %41 in 2 : vector<10x16x4xf32>, vector<10x16x4xf32>, vector<10x16x4xf32> -> vector<10x16x12xf32>
    %43 = vector.shape_cast %42 : vector<10x16x12xf32> to vector<160x12xf32>
    %c2 = arith.constant 2 : index
    %c0_27 = arith.constant 0 : index
    %c0_28 = arith.constant 0 : index
    %44 = vector.load %arg3[%c2, %c0_27, %c0_28] : memref<3x12x8xf32, #tpu.memory_space<vmem>>, vector<1x12x8xf32>
    %45 = vector.shape_cast %44 : vector<1x12x8xf32> to vector<12x8xf32>
    %cst_29 = arith.constant dense<0.000000e+00> : vector<160x8xf32>
    %46 = tpu.matmul %43, %45, %cst_29 {dimension_numbers = #tpu.dot_dimension_numbers<[1], [0], [0], [1], [0, 0, 1, 1], [], []>} : vector<160x12xf32>, vector<12x8xf32>, vector<160x8xf32> -> vector<160x8xf32>
    %47 = arith.addf %38, %46 : vector<160x8xf32>
    %c0_30 = arith.constant 0 : index
    %c0_31 = arith.constant 0 : index
    %48 = vector.load %arg8[%c0_30, %c0_31] : memref<160x8xf32, #tpu.memory_space<vmem>>, vector<160x8xf32>
    tpu.vector_store %arg8[%c0_30, %c0_31], %47 {strides = array<i32>} : memref<160x8xf32, #tpu.memory_space<vmem>>, vector<160x8xf32>,
    %c0_32 = arith.constant 0 : index
    %c0_33 = arith.constant 0 : index
    %49 = vector.load %arg8[%c0_32, %c0_33] : memref<160x8xf32, #tpu.memory_space<vmem>>, vector<160x8xf32>
    %c0_34 = arith.constant 0 : index
    %c0_35 = arith.constant 0 : index
    %50 = vector.load %arg4[%c0_34, %c0_35] : memref<2x8xf32, #tpu.memory_space<vmem>>, vector<1x8xf32>
    %51 = vector.shape_cast %50 : vector<1x8xf32> to vector<8xf32>
    %52 = vector.shape_cast %51 : vector<8xf32> to vector<1x8xf32>
    %53 = vector.broadcast %52 : vector<1x8xf32> to vector<160x8xf32>
    %54 = arith.mulf %49, %53 : vector<160x8xf32>
    %c1_36 = arith.constant 1 : index
    %c0_37 = arith.constant 0 : index
    %55 = vector.load %arg4[%c1_36, %c0_37] : memref<2x8xf32, #tpu.memory_space<vmem>>, vector<1x8xf32>
    %56 = vector.shape_cast %55 : vector<1x8xf32> to vector<8xf32>
    %57 = vector.shape_cast %56 : vector<8xf32> to vector<1x8xf32>
    %58 = vector.broadcast %57 : vector<1x8xf32> to vector<160x8xf32>
    %59 = arith.addf %54, %58 : vector<160x8xf32>
    %cst_38 = arith.constant 0.000000e+00 : f32
    %60 = vector.broadcast %cst_38 : f32 to vector<160x8xf32>
    %61 = arith.maximumf %59, %60 : vector<160x8xf32>
    %62 = vector.shape_cast %61 : vector<160x8xf32> to vector<10x16x8xf32>
    %c0_39 = arith.constant 0 : index
    %c1_40 = arith.constant 1 : index
    %c0_41 = arith.constant 0 : index
    %63 = vector.load %arg9[%c0_39, %c1_40, %c0_41] : memref<10x18x8xf32, #tpu.memory_space<vmem>>, vector<10x16x8xf32>
    tpu.vector_store %arg9[%c0_39, %c1_40, %c0_41], %62 {strides = array<i32>} : memref<10x18x8xf32, #tpu.memory_space<vmem>>, vector<10x16x8xf32>,
    %cst_42 = arith.constant 0.000000e+00 : f32
    %64 = vector.broadcast %cst_42 : f32 to vector<10x1x8xf32>
    %c0_43 = arith.constant 0 : index
    %c0_44 = arith.constant 0 : index
    %c0_45 = arith.constant 0 : index
    %65 = vector.load %arg9[%c0_43, %c0_44, %c0_45] : memref<10x18x8xf32, #tpu.memory_space<vmem>>, vector<10x1x8xf32>
    tpu.vector_store %arg9[%c0_43, %c0_44, %c0_45], %64 {strides = array<i32>} : memref<10x18x8xf32, #tpu.memory_space<vmem>>, vector<10x1x8xf32>,
    %c0_46 = arith.constant 0 : index
    %c17 = arith.constant 17 : index
    %c0_47 = arith.constant 0 : index
    %66 = vector.load %arg9[%c0_46, %c17, %c0_47] : memref<10x18x8xf32, #tpu.memory_space<vmem>>, vector<10x1x8xf32>
    tpu.vector_store %arg9[%c0_46, %c17, %c0_47], %64 {strides = array<i32>} : memref<10x18x8xf32, #tpu.memory_space<vmem>>, vector<10x1x8xf32>,
    %c0_i32_48 = arith.constant 0 : i32
    %67 = arith.cmpi eq, %arg1, %c0_i32_48 : i32
    %68 = arith.extui %67 : i1 to i32
    %c0_i32_49 = arith.constant 0 : i32
    %69 = arith.cmpi ne, %68, %c0_i32_49 : i32
    scf.if %69 {
      %cst_98 = arith.constant 0.000000e+00 : f32
      %127 = vector.broadcast %cst_98 : f32 to vector<1x18x8xf32>
      %c0_99 = arith.constant 0 : index
      %c0_100 = arith.constant 0 : index
      %c0_101 = arith.constant 0 : index
      %128 = vector.load %arg9[%c0_99, %c0_100, %c0_101] : memref<10x18x8xf32, #tpu.memory_space<vmem>>, vector<1x18x8xf32>
      tpu.vector_store %arg9[%c0_99, %c0_100, %c0_101], %127 {strides = array<i32>} : memref<10x18x8xf32, #tpu.memory_space<vmem>>, vector<1x18x8xf32>,
    } else {
    }
    %c1_i32_50 = arith.constant 1 : i32
    %70 = arith.cmpi eq, %arg1, %c1_i32_50 : i32
    %71 = arith.extui %70 : i1 to i32
    %c0_i32_51 = arith.constant 0 : i32
    %72 = arith.cmpi ne, %71, %c0_i32_51 : i32
    scf.if %72 {
      %cst_98 = arith.constant 0.000000e+00 : f32
      %127 = vector.broadcast %cst_98 : f32 to vector<1x18x8xf32>
      %c9 = arith.constant 9 : index
      %c0_99 = arith.constant 0 : index
      %c0_100 = arith.constant 0 : index
      %128 = vector.load %arg9[%c9, %c0_99, %c0_100] : memref<10x18x8xf32, #tpu.memory_space<vmem>>, vector<1x18x8xf32>
      tpu.vector_store %arg9[%c9, %c0_99, %c0_100], %127 {strides = array<i32>} : memref<10x18x8xf32, #tpu.memory_space<vmem>>, vector<1x18x8xf32>,
    } else {
    }
    %cst_52 = arith.constant 0.000000e+00 : f32
    %73 = vector.broadcast %cst_52 : f32 to vector<128x8xf32>
    %c0_53 = arith.constant 0 : index
    %c0_54 = arith.constant 0 : index
    %74 = vector.load %arg10[%c0_53, %c0_54] : memref<128x8xf32, #tpu.memory_space<vmem>>, vector<128x8xf32>
    tpu.vector_store %arg10[%c0_53, %c0_54], %73 {strides = array<i32>} : memref<128x8xf32, #tpu.memory_space<vmem>>, vector<128x8xf32>,
    %c0_55 = arith.constant 0 : index
    %c0_56 = arith.constant 0 : index
    %c0_57 = arith.constant 0 : index
    %75 = vector.load %arg9[%c0_55, %c0_56, %c0_57] : memref<10x18x8xf32, #tpu.memory_space<vmem>>, vector<8x18x8xf32>
    %c0_58 = arith.constant 0 : index
    %c0_59 = arith.constant 0 : index
    %76 = vector.load %arg10[%c0_58, %c0_59] : memref<128x8xf32, #tpu.memory_space<vmem>>, vector<128x8xf32>
    %77 = vector.extract_strided_slice %75 {offsets = [0, 0, 0], sizes = [8, 16, 8], strides = [1, 1, 1]} : vector<8x18x8xf32> to vector<8x16x8xf32>
    %78 = vector.extract_strided_slice %75 {offsets = [0, 1, 0], sizes = [8, 16, 8], strides = [1, 1, 1]} : vector<8x18x8xf32> to vector<8x16x8xf32>
    %79 = vector.extract_strided_slice %75 {offsets = [0, 2, 0], sizes = [8, 16, 8], strides = [1, 1, 1]} : vector<8x18x8xf32> to vector<8x16x8xf32>
    %80 = tpu.concatenate %77, %78, %79 in 2 : vector<8x16x8xf32>, vector<8x16x8xf32>, vector<8x16x8xf32> -> vector<8x16x24xf32>
    %81 = vector.shape_cast %80 : vector<8x16x24xf32> to vector<128x24xf32>
    %c0_60 = arith.constant 0 : index
    %c0_61 = arith.constant 0 : index
    %c0_62 = arith.constant 0 : index
    %82 = vector.load %arg5[%c0_60, %c0_61, %c0_62] : memref<3x24x8xf32, #tpu.memory_space<vmem>>, vector<1x24x8xf32>
    %83 = vector.shape_cast %82 : vector<1x24x8xf32> to vector<24x8xf32>
    %cst_63 = arith.constant dense<0.000000e+00> : vector<128x8xf32>
    %84 = tpu.matmul %81, %83, %cst_63 {dimension_numbers = #tpu.dot_dimension_numbers<[1], [0], [0], [1], [0, 0, 1, 1], [], []>} : vector<128x24xf32>, vector<24x8xf32>, vector<128x8xf32> -> vector<128x8xf32>
    %85 = arith.addf %76, %84 : vector<128x8xf32>
    %c0_64 = arith.constant 0 : index
    %c0_65 = arith.constant 0 : index
    %86 = vector.load %arg10[%c0_64, %c0_65] : memref<128x8xf32, #tpu.memory_space<vmem>>, vector<128x8xf32>
    tpu.vector_store %arg10[%c0_64, %c0_65], %85 {strides = array<i32>} : memref<128x8xf32, #tpu.memory_space<vmem>>, vector<128x8xf32>,
    %c1_66 = arith.constant 1 : index
    %c0_67 = arith.constant 0 : index
    %c0_68 = arith.constant 0 : index
    %87 = vector.load %arg9[%c1_66, %c0_67, %c0_68] : memref<10x18x8xf32, #tpu.memory_space<vmem>>, vector<8x18x8xf32>
    %c0_69 = arith.constant 0 : index
    %c0_70 = arith.constant 0 : index
    %88 = vector.load %arg10[%c0_69, %c0_70] : memref<128x8xf32, #tpu.memory_space<vmem>>, vector<128x8xf32>
    %89 = vector.extract_strided_slice %87 {offsets = [0, 0, 0], sizes = [8, 16, 8], strides = [1, 1, 1]} : vector<8x18x8xf32> to vector<8x16x8xf32>
    %90 = vector.extract_strided_slice %87 {offsets = [0, 1, 0], sizes = [8, 16, 8], strides = [1, 1, 1]} : vector<8x18x8xf32> to vector<8x16x8xf32>
    %91 = vector.extract_strided_slice %87 {offsets = [0, 2, 0], sizes = [8, 16, 8], strides = [1, 1, 1]} : vector<8x18x8xf32> to vector<8x16x8xf32>
    %92 = tpu.concatenate %89, %90, %91 in 2 : vector<8x16x8xf32>, vector<8x16x8xf32>, vector<8x16x8xf32> -> vector<8x16x24xf32>
    %93 = vector.shape_cast %92 : vector<8x16x24xf32> to vector<128x24xf32>
    %c1_71 = arith.constant 1 : index
    %c0_72 = arith.constant 0 : index
    %c0_73 = arith.constant 0 : index
    %94 = vector.load %arg5[%c1_71, %c0_72, %c0_73] : memref<3x24x8xf32, #tpu.memory_space<vmem>>, vector<1x24x8xf32>
    %95 = vector.shape_cast %94 : vector<1x24x8xf32> to vector<24x8xf32>
    %cst_74 = arith.constant dense<0.000000e+00> : vector<128x8xf32>
    %96 = tpu.matmul %93, %95, %cst_74 {dimension_numbers = #tpu.dot_dimension_numbers<[1], [0], [0], [1], [0, 0, 1, 1], [], []>} : vector<128x24xf32>, vector<24x8xf32>, vector<128x8xf32> -> vector<128x8xf32>
    %97 = arith.addf %88, %96 : vector<128x8xf32>
    %c0_75 = arith.constant 0 : index
    %c0_76 = arith.constant 0 : index
    %98 = vector.load %arg10[%c0_75, %c0_76] : memref<128x8xf32, #tpu.memory_space<vmem>>, vector<128x8xf32>
    tpu.vector_store %arg10[%c0_75, %c0_76], %97 {strides = array<i32>} : memref<128x8xf32, #tpu.memory_space<vmem>>, vector<128x8xf32>,
    %c2_77 = arith.constant 2 : index
    %c0_78 = arith.constant 0 : index
    %c0_79 = arith.constant 0 : index
    %99 = vector.load %arg9[%c2_77, %c0_78, %c0_79] : memref<10x18x8xf32, #tpu.memory_space<vmem>>, vector<8x18x8xf32>
    %c0_80 = arith.constant 0 : index
    %c0_81 = arith.constant 0 : index
    %100 = vector.load %arg10[%c0_80, %c0_81] : memref<128x8xf32, #tpu.memory_space<vmem>>, vector<128x8xf32>
    %101 = vector.extract_strided_slice %99 {offsets = [0, 0, 0], sizes = [8, 16, 8], strides = [1, 1, 1]} : vector<8x18x8xf32> to vector<8x16x8xf32>
    %102 = vector.extract_strided_slice %99 {offsets = [0, 1, 0], sizes = [8, 16, 8], strides = [1, 1, 1]} : vector<8x18x8xf32> to vector<8x16x8xf32>
    %103 = vector.extract_strided_slice %99 {offsets = [0, 2, 0], sizes = [8, 16, 8], strides = [1, 1, 1]} : vector<8x18x8xf32> to vector<8x16x8xf32>
    %104 = tpu.concatenate %101, %102, %103 in 2 : vector<8x16x8xf32>, vector<8x16x8xf32>, vector<8x16x8xf32> -> vector<8x16x24xf32>
    %105 = vector.shape_cast %104 : vector<8x16x24xf32> to vector<128x24xf32>
    %c2_82 = arith.constant 2 : index
    %c0_83 = arith.constant 0 : index
    %c0_84 = arith.constant 0 : index
    %106 = vector.load %arg5[%c2_82, %c0_83, %c0_84] : memref<3x24x8xf32, #tpu.memory_space<vmem>>, vector<1x24x8xf32>
    %107 = vector.shape_cast %106 : vector<1x24x8xf32> to vector<24x8xf32>
    %cst_85 = arith.constant dense<0.000000e+00> : vector<128x8xf32>
    %108 = tpu.matmul %105, %107, %cst_85 {dimension_numbers = #tpu.dot_dimension_numbers<[1], [0], [0], [1], [0, 0, 1, 1], [], []>} : vector<128x24xf32>, vector<24x8xf32>, vector<128x8xf32> -> vector<128x8xf32>
    %109 = arith.addf %100, %108 : vector<128x8xf32>
    %c0_86 = arith.constant 0 : index
    %c0_87 = arith.constant 0 : index
    %110 = vector.load %arg10[%c0_86, %c0_87] : memref<128x8xf32, #tpu.memory_space<vmem>>, vector<128x8xf32>
    tpu.vector_store %arg10[%c0_86, %c0_87], %109 {strides = array<i32>} : memref<128x8xf32, #tpu.memory_space<vmem>>, vector<128x8xf32>,
    %c0_88 = arith.constant 0 : index
    %c0_89 = arith.constant 0 : index
    %111 = vector.load %arg10[%c0_88, %c0_89] : memref<128x8xf32, #tpu.memory_space<vmem>>, vector<128x8xf32>
    %c0_90 = arith.constant 0 : index
    %c0_91 = arith.constant 0 : index
    %112 = vector.load %arg6[%c0_90, %c0_91] : memref<2x8xf32, #tpu.memory_space<vmem>>, vector<1x8xf32>
    %113 = vector.shape_cast %112 : vector<1x8xf32> to vector<8xf32>
    %114 = vector.shape_cast %113 : vector<8xf32> to vector<1x8xf32>
    %115 = vector.broadcast %114 : vector<1x8xf32> to vector<128x8xf32>
    %116 = arith.mulf %111, %115 : vector<128x8xf32>
    %c1_92 = arith.constant 1 : index
    %c0_93 = arith.constant 0 : index
    %117 = vector.load %arg6[%c1_92, %c0_93] : memref<2x8xf32, #tpu.memory_space<vmem>>, vector<1x8xf32>
    %118 = vector.shape_cast %117 : vector<1x8xf32> to vector<8xf32>
    %119 = vector.shape_cast %118 : vector<8xf32> to vector<1x8xf32>
    %120 = vector.broadcast %119 : vector<1x8xf32> to vector<128x8xf32>
    %121 = arith.addf %116, %120 : vector<128x8xf32>
    %cst_94 = arith.constant 0.000000e+00 : f32
    %122 = vector.broadcast %cst_94 : f32 to vector<128x8xf32>
    %123 = arith.maximumf %121, %122 : vector<128x8xf32>
    %c0_95 = arith.constant 0 : index
    %c0_96 = arith.constant 0 : index
    %c0_97 = arith.constant 0 : index
    %124 = vector.load %arg7[%c0_95, %c0_96, %c0_97] : memref<1x128x8xf32, #tpu.memory_space<vmem>>, vector<1x128x8xf32>
    %125 = vector.shape_cast %124 : vector<1x128x8xf32> to vector<128x8xf32>
    %126 = vector.shape_cast %123 : vector<128x8xf32> to vector<1x128x8xf32>
    tpu.vector_store %arg7[%c0_95, %c0_96, %c0_97], %126 {strides = array<i32>} : memref<1x128x8xf32, #tpu.memory_space<vmem>>, vector<1x128x8xf32>,
    return
  }
  func.func @transform_0(%arg0: i32, %arg1: i32) -> (i32, i32, i32, i32) {
    %c0_i32 = arith.constant 0 : i32
    %c0_i32_0 = arith.constant 0 : i32
    %c0_i32_1 = arith.constant 0 : i32
    %c0_i32_2 = arith.constant 0 : i32
    return %arg0, %c0_i32, %c0_i32_0, %c0_i32_1 : i32, i32, i32, i32
  }
  func.func @transform_1(%arg0: i32, %arg1: i32) -> (i32, i32, i32) {
    %c0_i32 = arith.constant 0 : i32
    %c0_i32_0 = arith.constant 0 : i32
    %c0_i32_1 = arith.constant 0 : i32
    %c0_i32_2 = arith.constant 0 : i32
    return %c0_i32, %c0_i32_0, %c0_i32_1 : i32, i32, i32
  }
  func.func @transform_2(%arg0: i32, %arg1: i32) -> (i32, i32) {
    %c0_i32 = arith.constant 0 : i32
    %c0_i32_0 = arith.constant 0 : i32
    %c0_i32_1 = arith.constant 0 : i32
    return %c0_i32, %c0_i32_0 : i32, i32
  }
  func.func @transform_3(%arg0: i32, %arg1: i32) -> (i32, i32, i32) {
    %c0_i32 = arith.constant 0 : i32
    %c0_i32_0 = arith.constant 0 : i32
    %c0_i32_1 = arith.constant 0 : i32
    %c0_i32_2 = arith.constant 0 : i32
    return %c0_i32, %c0_i32_0, %c0_i32_1 : i32, i32, i32
  }
  func.func @transform_4(%arg0: i32, %arg1: i32) -> (i32, i32) {
    %c0_i32 = arith.constant 0 : i32
    %c0_i32_0 = arith.constant 0 : i32
    %c0_i32_1 = arith.constant 0 : i32
    return %c0_i32, %c0_i32_0 : i32, i32
  }
  func.func @transform_5(%arg0: i32, %arg1: i32) -> (i32, i32, i32) {
    %c0_i32 = arith.constant 0 : i32
    %c0_i32_0 = arith.constant 0 : i32
    return %arg0, %arg1, %c0_i32 : i32, i32, i32
  }
}

</mosaic_0001>

<llo_original>
// kernel: inconv_forward.1
$region0: #{inconv_forward.1}
  #allocation0 [shape = 'u32[]', space=smem, size = 0x4, offset = 0x4, fixed_abs, tag = 'smem constant byte address 0x4 - core index']
  #allocation1 [shape = 'u32[72,128]{1,0:T(1,128)}', space=vmem, size = 0x9000, scoped, tag = 'internal scratch']
  #allocation2 [shape = 'f32[160,8]{1,0:T(8,128)}', space=vmem, size = 0x14000, scoped, tag = 'scratch operand']
  #allocation3 [shape = 'f32[10,18,8]{2,1,0:T(8,128)}', space=vmem, size = 0x1e000, scoped, tag = 'scratch operand']
  #allocation4 [shape = 'f32[128,8]{1,0:T(8,128)}', space=vmem, size = 0x10000, scoped, tag = 'scratch operand']
  %s0 = inlined_call_operand.vmem [shape: f32[2,20,18,4], index: 0, kind: input, shape index: {}]
  %s1 = inlined_call_operand.vmem [shape: f32[3,12,8], index: 1, kind: input, shape index: {}]
  %s2 = inlined_call_operand.vmem [shape: f32[2,8], index: 2, kind: input, shape index: {}]
  %s3 = inlined_call_operand.vmem [shape: f32[3,24,8], index: 3, kind: input, shape index: {}]
  %s4 = inlined_call_operand.vmem [shape: f32[2,8], index: 4, kind: input, shape index: {}]
  %s5 = inlined_call_operand.vmem [shape: f32[2,256,8], index: 5, kind: output, shape index: {}]
  %s6 = sld [smem:[#allocation0]]
  $region61: #{inconv_forward.1} parent=0
    _
  %s8 = ssub.s32 1, %s6
  %s9 = scalar_select 0, %s8, %s6
  loop: start=0, step=1, limit=6
  $region2: #{inconv_forward.1} parent=0 // loop_pre_header
    _
  $region3: #{inconv_forward.1} parent=0 // loop_header
    %s11 = sphi 0, %s15
    %p12 = scmp.ge.s32.totalorder %s11, 6
    %s18 = sphi 0, %s30
    %s19 = sphi 0, %s26
    %s20 = sphi 0, %s18
    %s21 = sphi 0, %s19
    %s22 = sphi 0, %s20
    %s23 = sphi 0, %s21
    %s33 = sphi 0, %s35
    %s36 = sphi 0, %s33
    %s37 = sphi 0, %s36
    %s53 = sphi 0, %s37
    %s57 = sphi 0, %s57
    %s59 = sphi 0, %s57
    %s60 = sphi 0, %s59
    %s74 = sphi 0, %s60
    %s78 = sphi 0, %s78
    %s80 = sphi 0, %s78
    %s81 = sphi 0, %s80
    %s95 = sphi 0, %s81
    %s99 = sphi 0, %s99
    %s101 = sphi 0, %s99
    %s102 = sphi 0, %s101
    %s116 = sphi 0, %s102
    %s120 = sphi 0, %s120
    %s122 = sphi 0, %s120
    %s123 = sphi 0, %s122
    %s137 = sphi 0, %s123
    %s145 = sphi 0, %s147
    %s148 = sphi 0, %s145
    %s149 = sphi 0, %s148
    %s165 = sphi 0, %s149
  $region4: #{inconv_forward.1} parent=0 // loop_header_branch
    %14 = sbr.rel (%p12) target = $region8
  $region5: #{inconv_forward.1} parent=0 // loop_body
    %s16 = ssub.s32 %s11, 1
    %s17 = ssub.s32 %s11, 2
    %s24 = sadd.s32 1, %s19
    %p25 = scmp.ge.s32.totalorder %s24, 2
    %s26 = scalar_select %p25, 0, %s24
    %s27 = sadd.s32 1, %s18
    %s28 = scalar_select %p25, %s27, %s18
    %p29 = scmp.ge.s32.totalorder %s28, 2
    %s30 = scalar_select %p29, 0, %s28
    %s31 = ssub.s32 %s18, %s30
    %p32 = scmp.eq.s32.totalorder %s31, 0
    %s34 = sadd.s32 %s33, 1
    %s35 = scalar_select %p32, %s33, %s34
    %p38 = pneg %p32
    %p39 = scmp.eq.s32.totalorder %s11, 3
    %p40 = por %p38, %p39
    %p41 = scmp.ne.s32.totalorder %s33, %s36
    %p42 = scmp.eq.s32.totalorder %s11, 0
    %p43 = por %p41, %p42
    %p44 = scmp.ne.s32.totalorder %s33, %s36
    %p45 = scmp.eq.s32.totalorder %s16, 3
    %p46 = por %p44, %p45
    %p47 = scmp.ne.s32.totalorder %s36, %s37
    %p48 = scmp.eq.s32.totalorder %s16, 0
    %p49 = por %p47, %p48
    %p50 = scmp.ne.s32.totalorder %s36, %s37
    %p51 = scmp.eq.s32.totalorder %s17, 3
    %p52 = por %p50, %p51
    %p54 = scmp.ne.s32.totalorder %s37, %s53
    %p55 = scmp.eq.s32.totalorder %s17, 0
    %p56 = por %p54, %p55
    %s58 = sadd.s32 %s57, 1
    %p61 = scmp.eq.s32.totalorder %s11, 3
    %p62 = scmp.ne.s32.totalorder %s57, %s59
    %p63 = scmp.eq.s32.totalorder %s11, 0
    %p64 = por %p62, %p63
    %p65 = scmp.ne.s32.totalorder %s57, %s59
    %p66 = scmp.eq.s32.totalorder %s16, 3
    %p67 = por %p65, %p66
    %p68 = scmp.ne.s32.totalorder %s59, %s60
    %p69 = scmp.eq.s32.totalorder %s16, 0
    %p70 = por %p68, %p69
    %p71 = scmp.ne.s32.totalorder %s59, %s60
    %p72 = scmp.eq.s32.totalorder %s17, 3
    %p73 = por %p71, %p72
    %p75 = scmp.ne.s32.totalorder %s60, %s74
    %p76 = scmp.eq.s32.totalorder %s17, 0
    %p77 = por %p75, %p76
    %s79 = sadd.s32 %s78, 1
    %p82 = scmp.eq.s32.totalorder %s11, 3
    %p83 = scmp.ne.s32.totalorder %s78, %s80
    %p84 = scmp.eq.s32.totalorder %s11, 0
    %p85 = por %p83, %p84
    %p86 = scmp.ne.s32.totalorder %s78, %s80
    %p87 = scmp.eq.s32.totalorder %s16, 3
    %p88 = por %p86, %p87
    %p89 = scmp.ne.s32.totalorder %s80, %s81
    %p90 = scmp.eq.s32.totalorder %s16, 0
    %p91 = por %p89, %p90
    %p92 = scmp.ne.s32.totalorder %s80, %s81
    %p93 = scmp.eq.s32.totalorder %s17, 3
    %p94 = por %p92, %p93
    %p96 = scmp.ne.s32.totalorder %s81, %s95
    %p97 = scmp.eq.s32.totalorder %s17, 0
    %p98 = por %p96, %p97
    %s100 = sadd.s32 %s99, 1
    %p103 = scmp.eq.s32.totalorder %s11, 3
    %p104 = scmp.ne.s32.totalorder %s99, %s101
    %p105 = scmp.eq.s32.totalorder %s11, 0
    %p106 = por %p104, %p105
    %p107 = scmp.ne.s32.totalorder %s99, %s101
    %p108 = scmp.eq.s32.totalorder %s16, 3
    %p109 = por %p107, %p108
    %p110 = scmp.ne.s32.totalorder %s101, %s102
    %p111 = scmp.eq.s32.totalorder %s16, 0
    %p112 = por %p110, %p111
    %p113 = scmp.ne.s32.totalorder %s101, %s102
    %p114 = scmp.eq.s32.totalorder %s17, 3
    %p115 = por %p113, %p114
    %p117 = scmp.ne.s32.totalorder %s102, %s116
    %p118 = scmp.eq.s32.totalorder %s17, 0
    %p119 = por %p117, %p118
    %s121 = sadd.s32 %s120, 1
    %p124 = scmp.eq.s32.totalorder %s11, 3
    %p125 = scmp.ne.s32.totalorder %s120, %s122
    %p126 = scmp.eq.s32.totalorder %s11, 0
    %p127 = por %p125, %p126
    %p128 = scmp.ne.s32.totalorder %s120, %s122
    %p129 = scmp.eq.s32.totalorder %s16, 3
    %p130 = por %p128, %p129
    %p131 = scmp.ne.s32.totalorder %s122, %s123
    %p132 = scmp.eq.s32.totalorder %s16, 0
    %p133 = por %p131, %p132
    %p134 = scmp.ne.s32.totalorder %s122, %s123
    %p135 = scmp.eq.s32.totalorder %s17, 3
    %p136 = por %p134, %p135
    %p138 = scmp.ne.s32.totalorder %s123, %s137
    %p139 = scmp.eq.s32.totalorder %s17, 0
    %p140 = por %p138, %p139
    %s141 = ssub.s32 %s18, %s30
    %s142 = ssub.s32 %s19, %s26
    %s143 = sor.u32 %s141, %s142
    %p144 = scmp.eq.s32.totalorder %s143, 0
    %s146 = sadd.s32 %s145, 1
    %s147 = scalar_select %p144, %s145, %s146
    %p150 = pneg %p144
    %p151 = scmp.eq.s32.totalorder %s11, 3
    %p152 = por %p150, %p151
    %p153 = scmp.ne.s32.totalorder %s145, %s148
    %p154 = scmp.eq.s32.totalorder %s11, 0
    %p155 = por %p153, %p154
    %p156 = scmp.ne.s32.totalorder %s145, %s148
    %p157 = scmp.eq.s32.totalorder %s16, 3
    %p158 = por %p156, %p157
    %p159 = scmp.ne.s32.totalorder %s148, %s149
    %p160 = scmp.eq.s32.totalorder %s16, 0
    %p161 = por %p159, %p160
    %p162 = scmp.ne.s32.totalorder %s148, %s149
    %p163 = scmp.eq.s32.totalorder %s17, 3
    %p164 = por %p162, %p163
    %p166 = scmp.ne.s32.totalorder %s149, %s165
    %p167 = scmp.eq.s32.totalorder %s17, 0
    %p168 = por %p166, %p167
    %p169 = scmp.le.s32.totalorder 1, %s11
    %p170 = scmp.lt.s32.totalorder %s11, 5
    %p171 = pnand %p169, %p170
    %p172 = pneg %p171
    // Predicated region
    $region9: #{inconv_forward.1} parent=5 // pred_check
      _
    $region10: #{inconv_forward.1} parent=5 // pred_check_branch
      %174 = sbr.rel (%p171) target = $region12
    $region11: #{inconv_forward.1} parent=5 // pred_region
      %s175 = ssub.s32 %s11, 1
      // Predicated region
      $region13: #{inconv_forward.1} parent=11 // pred_check
        %p176 = pneg %p70
      $region14: #{inconv_forward.1} parent=11 // pred_check_branch
        %178 = sbr.rel (%p176) target = $region16
      $region15: #{inconv_forward.1} parent=11 // pred_region
        _
      $region16: #{inconv_forward.1} parent=11 // pred_fallthru
        _
      // Predicated region
      $region17: #{inconv_forward.1} parent=11 // pred_check
        %p179 = pneg %p91
      $region18: #{inconv_forward.1} parent=11 // pred_check_branch
        %181 = sbr.rel (%p179) target = $region20
      $region19: #{inconv_forward.1} parent=11 // pred_region
        _
      $region20: #{inconv_forward.1} parent=11 // pred_fallthru
        _
      // Predicated region
      $region21: #{inconv_forward.1} parent=11 // pred_check
        %p182 = pneg %p112
      $region22: #{inconv_forward.1} parent=11 // pred_check_branch
        %184 = sbr.rel (%p182) target = $region24
      $region23: #{inconv_forward.1} parent=11 // pred_region
        _
      $region24: #{inconv_forward.1} parent=11 // pred_fallthru
        _
      // Predicated region
      $region25: #{inconv_forward.1} parent=11 // pred_check
        %p185 = pneg %p133
      $region26: #{inconv_forward.1} parent=11 // pred_check_branch
        %187 = sbr.rel (%p185) target = $region28
      $region27: #{inconv_forward.1} parent=11 // pred_region
        _
      $region28: #{inconv_forward.1} parent=11 // pred_fallthru
        _
    $region12: #{inconv_forward.1} parent=5 // pred_fallthru
      _
    %p188 = scmp.lt.s32.totalorder %s11, 4
    // Predicated region
    $region29: #{inconv_forward.1} parent=5 // pred_check
      %p189 = pneg %p188
    $region30: #{inconv_forward.1} parent=5 // pred_check_branch
      %191 = sbr.rel (%p189) target = $region32
    $region31: #{inconv_forward.1} parent=5 // pred_region
      // Predicated region
      $region33: #{inconv_forward.1} parent=31 // pred_check
        %p192 = pneg %p43
      $region34: #{inconv_forward.1} parent=31 // pred_check_branch
        %194 = sbr.rel (%p192) target = $region36
      $region35: #{inconv_forward.1} parent=31 // pred_region
        %p195 = scmp.lt.s32.totalorder %s18, 1
        %s196 = scalar_select %p195, %s18, 1
        %s197 = smul.addr %s196, 60
        %s198 = smul.addr %s197, 8
        %s199 = scalar_lea.vmem %s0, %s198
      $region36: #{inconv_forward.1} parent=31 // pred_fallthru
        _
    $region32: #{inconv_forward.1} parent=5 // pred_fallthru
      _
    %p200 = scmp.le.s32.totalorder 1, %s11
    %p201 = scmp.lt.s32.totalorder %s11, 5
    %p202 = pnand %p200, %p201
    %p203 = pneg %p202
    // Predicated region
    $region37: #{inconv_forward.1} parent=5 // pred_check
      _
    $region38: #{inconv_forward.1} parent=5 // pred_check_branch
      %205 = sbr.rel (%p202) target = $region40
    $region39: #{inconv_forward.1} parent=5 // pred_region
      %s206 = ssub.s32 %s11, 1
      %p207 = scmp.lt.s32.totalorder %s20, 1
      %s208 = scalar_select %p207, %s20, 1
      %s209 = smul.addr %s208, 60
      %s210 = smul.addr %s209, 8
      %s211 = scalar_lea.vmem %s0, %s210
      %p212 = pneg %p49
      %p213 = pneg %p46
      %p214 = pneg %p70
      %p215 = pneg %p67
      %p216 = pneg %p91
      %p217 = pneg %p88
      %p218 = pneg %p112
      %p219 = pneg %p109
      %p220 = pneg %p133
      %p221 = pneg %p130
      %p222 = pneg %p161
      %p223 = pneg %p158
      %s224 = smul.u32 16, %s21
      %p225 = scmp.lt.s32.totalorder %s20, 1
      %s226 = scalar_select %p225, %s20, 1
      %p227 = scmp.lt.s32.totalorder %s224, 31
      %s228 = scalar_select %p227, %s224, 31
      %s229 = smul.addr %s226, 32
      %s230 = sadd.s32 %s228, %s229
      %s231 = smul.addr %s230, 8
      %s232 = scalar_lea.vmem %s5, %s231
      %p233 = scmp.lt.s32.totalorder %s20, 1
      %s234 = scalar_select %p233, %s20, 1
      %s235 = smul.addr %s234, 60
      %s236 = smul.addr %s235, 8
      %s237 = scalar_lea.vmem %s0, %s236
      %s238 = smul.u32 16, %s21
      %p239 = scmp.lt.s32.totalorder %s20, 1
      %s240 = scalar_select %p239, %s20, 1
      %p241 = scmp.lt.s32.totalorder %s238, 31
      %s242 = scalar_select %p241, %s238, 31
      %s243 = smul.addr %s240, 32
      %s244 = sadd.s32 %s242, %s243
      %s245 = smul.addr %s244, 8
      %s246 = scalar_lea.vmem %s5, %s245
      %s247 = smul.u32 16, %s21
      %s248 = smul.u32 %s21, 8
      %vm249 = vcmask 64512
      %250 = vst.msk [vmem:[#allocation2] sm:$0xff] %vm249, 0.0
      %251 = vst.msk [vmem:[#allocation2 + $0x8] sm:$0xff] %vm249, 0.0
      %252 = vst.msk [vmem:[#allocation2 + $0x10] sm:$0xff] %vm249, 0.0
      %253 = vst.msk [vmem:[#allocation2 + $0x18] sm:$0xff] %vm249, 0.0
      %254 = vst.msk [vmem:[#allocation2 + $0x20] sm:$0xff] %vm249, 0.0
      %255 = vst.msk [vmem:[#allocation2 + $0x28] sm:$0xff] %vm249, 0.0
      %256 = vst.msk [vmem:[#allocation2 + $0x30] sm:$0xff] %vm249, 0.0
      %257 = vst.msk [vmem:[#allocation2 + $0x38] sm:$0xff] %vm249, 0.0
      %258 = vst.msk [vmem:[#allocation2 + $0x40] sm:$0xff] %vm249, 0.0
      %259 = vst.msk [vmem:[#allocation2 + $0x48] sm:$0xff] %vm249, 0.0
      %260 = vst.msk [vmem:[#allocation2 + $0x50] sm:$0xff] %vm249, 0.0
      %261 = vst.msk [vmem:[#allocation2 + $0x58] sm:$0xff] %vm249, 0.0
      %262 = vst.msk [vmem:[#allocation2 + $0x60] sm:$0xff] %vm249, 0.0
      %263 = vst.msk [vmem:[#allocation2 + $0x68] sm:$0xff] %vm249, 0.0
      %264 = vst.msk [vmem:[#allocation2 + $0x70] sm:$0xff] %vm249, 0.0
      %265 = vst.msk [vmem:[#allocation2 + $0x78] sm:$0xff] %vm249, 0.0
      %266 = vst.msk [vmem:[#allocation2 + $0x80] sm:$0xff] %vm249, 0.0
      %267 = vst.msk [vmem:[#allocation2 + $0x88] sm:$0xff] %vm249, 0.0
      %268 = vst.msk [vmem:[#allocation2 + $0x90] sm:$0xff] %vm249, 0.0
      %269 = vst.msk [vmem:[#allocation2 + $0x98] sm:$0xff] %vm249, 0.0
      %s270 = smul.u32 %s248, 24
      %s271 = scalar_lea.vmem %s237, %s270
      %v272 = vld [vmem:[%s271] sm:$0xff]
      %v273 = vld [vmem:[%s271 + $0x8] sm:$0xff]
      %v274 = vld [vmem:[%s271 + $0x10] sm:$0x3]
      %v275 = vld [vmem:[%s271 + $0x18] sm:$0xff]
      %v276 = vld [vmem:[%s271 + $0x20] sm:$0xff]
      %v277 = vld [vmem:[%s271 + $0x28] sm:$0x3]
      %v278 = vld [vmem:[%s271 + $0x30] sm:$0xff]
      %v279 = vld [vmem:[%s271 + $0x38] sm:$0xff]
      %v280 = vld [vmem:[%s271 + $0x40] sm:$0x3]
      %v281 = vld [vmem:[%s271 + $0x48] sm:$0xff]
      %v282 = vld [vmem:[%s271 + $0x50] sm:$0xff]
      %v283 = vld [vmem:[%s271 + $0x58] sm:$0x3]
      %v284 = vld [vmem:[%s271 + $0x60] sm:$0xff]
      %v285 = vld [vmem:[%s271 + $0x68] sm:$0xff]
      %v286 = vld [vmem:[%s271 + $0x70] sm:$0x3]
      %v287 = vld [vmem:[%s271 + $0x78] sm:$0xff]
      %v288 = vld [vmem:[%s271 + $0x80] sm:$0xff]
      %v289 = vld [vmem:[%s271 + $0x88] sm:$0x3]
      %v290 = vld [vmem:[%s271 + $0x90] sm:$0xff]
      %v291 = vld [vmem:[%s271 + $0x98] sm:$0xff]
      %v292 = vld [vmem:[%s271 + $0xa0] sm:$0x3]
      %v293 = vld [vmem:[%s271 + $0xa8] sm:$0xff]
      %v294 = vld [vmem:[%s271 + $0xb0] sm:$0xff]
      %v295 = vld [vmem:[%s271 + $0xb8] sm:$0x3]
      %v296 = vld [vmem:[%s271 + $0xc0] sm:$0xff]
      %v297 = vld [vmem:[%s271 + $0xc8] sm:$0xff]
      %v298 = vld [vmem:[%s271 + $0xd0] sm:$0x3]
      %v299 = vld [vmem:[%s271 + $0xd8] sm:$0xff]
      %v300 = vld [vmem:[%s271 + $0xe0] sm:$0xff]
      %v301 = vld [vmem:[%s271 + $0xe8] sm:$0x3]
      %v302 = vld [vmem:[#allocation2] sm:$0xff]
      %v303 = vld [vmem:[#allocation2 + $0x8] sm:$0xff]
      %v304 = vld [vmem:[#allocation2 + $0x10] sm:$0xff]
      %v305 = vld [vmem:[#allocation2 + $0x18] sm:$0xff]
      %v306 = vld [vmem:[#allocation2 + $0x20] sm:$0xff]
      %v307 = vld [vmem:[#allocation2 + $0x28] sm:$0xff]
      %v308 = vld [vmem:[#allocation2 + $0x30] sm:$0xff]
      %v309 = vld [vmem:[#allocation2 + $0x38] sm:$0xff]
      %v310 = vld [vmem:[#allocation2 + $0x40] sm:$0xff]
      %v311 = vld [vmem:[#allocation2 + $0x48] sm:$0xff]
      %v312 = vld [vmem:[#allocation2 + $0x50] sm:$0xff]
      %v313 = vld [vmem:[#allocation2 + $0x58] sm:$0xff]
      %v314 = vld [vmem:[#allocation2 + $0x60] sm:$0xff]
      %v315 = vld [vmem:[#allocation2 + $0x68] sm:$0xff]
      %v316 = vld [vmem:[#allocation2 + $0x70] sm:$0xff]
      %v317 = vld [vmem:[#allocation2 + $0x78] sm:$0xff]
      %v318 = vld [vmem:[#allocation2 + $0x80] sm:$0xff]
      %v319 = vld [vmem:[#allocation2 + $0x88] sm:$0xff]
      %v320 = vld [vmem:[#allocation2 + $0x90] sm:$0xff]
      %v321 = vld [vmem:[#allocation2 + $0x98] sm:$0xff]
      %vm352 = vcmask 1046528
      %v353 = vrot.slane %v272, 1
      %v354 = vrot.slane %v273, 1
      %v355 = vsel %vm352, %v353, %v354
      %v356 = vrot.slane %v274, 1
      %v357 = vsel %vm352, %v354, %v356
      %v358 = vrot.slane %v275, 1
      %v359 = vrot.slane %v276, 1
      %v360 = vsel %vm352, %v358, %v359
      %v361 = vrot.slane %v277, 1
      %v362 = vsel %vm352, %v359, %v361
      %v363 = vrot.slane %v278, 1
      %v364 = vrot.slane %v279, 1
      %v365 = vsel %vm352, %v363, %v364
      %v366 = vrot.slane %v280, 1
      %v367 = vsel %vm352, %v364, %v366
      %v368 = vrot.slane %v281, 1
      %v369 = vrot.slane %v282, 1
      %v370 = vsel %vm352, %v368, %v369
      %v371 = vrot.slane %v283, 1
      %v372 = vsel %vm352, %v369, %v371
      %v373 = vrot.slane %v284, 1
      %v374 = vrot.slane %v285, 1
      %v375 = vsel %vm352, %v373, %v374
      %v376 = vrot.slane %v286, 1
      %v377 = vsel %vm352, %v374, %v376
      %v378 = vrot.slane %v287, 1
      %v379 = vrot.slane %v288, 1
      %v380 = vsel %vm352, %v378, %v379
      %v381 = vrot.slane %v289, 1
      %v382 = vsel %vm352, %v379, %v381
      %v383 = vrot.slane %v290, 1
      %v384 = vrot.slane %v291, 1
      %v385 = vsel %vm352, %v383, %v384
      %v386 = vrot.slane %v292, 1
      %v387 = vsel %vm352, %v384, %v386
      %v388 = vrot.slane %v293, 1
      %v389 = vrot.slane %v294, 1
      %v390 = vsel %vm352, %v388, %v389
      %v391 = vrot.slane %v295, 1
      %v392 = vsel %vm352, %v389, %v391
      %v393 = vrot.slane %v296, 1
      %v394 = vrot.slane %v297, 1
      %v395 = vsel %vm352, %v393, %v394
      %v396 = vrot.slane %v298, 1
      %v397 = vsel %vm352, %v394, %v396
      %v398 = vrot.slane %v299, 1
      %v399 = vrot.slane %v300, 1
      %v400 = vsel %vm352, %v398, %v399
      %v401 = vrot.slane %v301, 1
      %v402 = vsel %vm352, %v399, %v401
      %403 = vrot.lane.b32.xlu0 %v355, 4
      %v404 = vpop.permute.xlu0 %403
      %405 = vrot.lane.b32.xlu0 %v357, 4
      %v406 = vpop.permute.xlu0 %405
      %407 = vrot.lane.b32.xlu0 %v360, 4
      %v408 = vpop.permute.xlu0 %407
      %409 = vrot.lane.b32.xlu0 %v362, 4
      %v410 = vpop.permute.xlu0 %409
      %411 = vrot.lane.b32.xlu0 %v365, 4
      %v412 = vpop.permute.xlu0 %411
      %413 = vrot.lane.b32.xlu0 %v367, 4
      %v414 = vpop.permute.xlu0 %413
      %415 = vrot.lane.b32.xlu0 %v370, 4
      %v416 = vpop.permute.xlu0 %415
      %417 = vrot.lane.b32.xlu0 %v372, 4
      %v418 = vpop.permute.xlu0 %417
      %419 = vrot.lane.b32.xlu0 %v375, 4
      %v420 = vpop.permute.xlu0 %419
      %421 = vrot.lane.b32.xlu0 %v377, 4
      %v422 = vpop.permute.xlu0 %421
      %423 = vrot.lane.b32.xlu0 %v380, 4
      %v424 = vpop.permute.xlu0 %423
      %425 = vrot.lane.b32.xlu0 %v382, 4
      %v426 = vpop.permute.xlu0 %425
      %427 = vrot.lane.b32.xlu0 %v385, 4
      %v428 = vpop.permute.xlu0 %427
      %429 = vrot.lane.b32.xlu0 %v387, 4
      %v430 = vpop.permute.xlu0 %429
      %431 = vrot.lane.b32.xlu0 %v390, 4
      %v432 = vpop.permute.xlu0 %431
      %433 = vrot.lane.b32.xlu0 %v392, 4
      %v434 = vpop.permute.xlu0 %433
      %435 = vrot.lane.b32.xlu0 %v395, 4
      %v436 = vpop.permute.xlu0 %435
      %437 = vrot.lane.b32.xlu0 %v397, 4
      %v438 = vpop.permute.xlu0 %437
      %439 = vrot.lane.b32.xlu0 %v400, 4
      %v440 = vpop.permute.xlu0 %439
      %441 = vrot.lane.b32.xlu0 %v402, 4
      %v442 = vpop.permute.xlu0 %441
      %vm463 = vcmask 1045504
      %v464 = vrot.slane %v272, 2
      %v465 = vrot.slane %v273, 2
      %v466 = vsel %vm463, %v464, %v465
      %v467 = vrot.slane %v274, 2
      %v468 = vsel %vm463, %v465, %v467
      %v469 = vrot.slane %v275, 2
      %v470 = vrot.slane %v276, 2
      %v471 = vsel %vm463, %v469, %v470
      %v472 = vrot.slane %v277, 2
      %v473 = vsel %vm463, %v470, %v472
      %v474 = vrot.slane %v278, 2
      %v475 = vrot.slane %v279, 2
      %v476 = vsel %vm463, %v474, %v475
      %v477 = vrot.slane %v280, 2
      %v478 = vsel %vm463, %v475, %v477
      %v479 = vrot.slane %v281, 2
      %v480 = vrot.slane %v282, 2
      %v481 = vsel %vm463, %v479, %v480
      %v482 = vrot.slane %v283, 2
      %v483 = vsel %vm463, %v480, %v482
      %v484 = vrot.slane %v284, 2
      %v485 = vrot.slane %v285, 2
      %v486 = vsel %vm463, %v484, %v485
      %v487 = vrot.slane %v286, 2
      %v488 = vsel %vm463, %v485, %v487
      %v489 = vrot.slane %v287, 2
      %v490 = vrot.slane %v288, 2
      %v491 = vsel %vm463, %v489, %v490
      %v492 = vrot.slane %v289, 2
      %v493 = vsel %vm463, %v490, %v492
      %v494 = vrot.slane %v290, 2
      %v495 = vrot.slane %v291, 2
      %v496 = vsel %vm463, %v494, %v495
      %v497 = vrot.slane %v292, 2
      %v498 = vsel %vm463, %v495, %v497
      %v499 = vrot.slane %v293, 2
      %v500 = vrot.slane %v294, 2
      %v501 = vsel %vm463, %v499, %v500
      %v502 = vrot.slane %v295, 2
      %v503 = vsel %vm463, %v500, %v502
      %v504 = vrot.slane %v296, 2
      %v505 = vrot.slane %v297, 2
      %v506 = vsel %vm463, %v504, %v505
      %v507 = vrot.slane %v298, 2
      %v508 = vsel %vm463, %v505, %v507
      %v509 = vrot.slane %v299, 2
      %v510 = vrot.slane %v300, 2
      %v511 = vsel %vm463, %v509, %v510
      %v512 = vrot.slane %v301, 2
      %v513 = vsel %vm463, %v510, %v512
      %514 = vrot.lane.b32.xlu0 %v466, 8
      %v515 = vpop.permute.xlu0 %514
      %516 = vrot.lane.b32.xlu0 %v468, 8
      %v517 = vpop.permute.xlu0 %516
      %518 = vrot.lane.b32.xlu0 %v471, 8
      %v519 = vpop.permute.xlu0 %518
      %520 = vrot.lane.b32.xlu0 %v473, 8
      %v521 = vpop.permute.xlu0 %520
      %522 = vrot.lane.b32.xlu0 %v476, 8
      %v523 = vpop.permute.xlu0 %522
      %524 = vrot.lane.b32.xlu0 %v478, 8
      %v525 = vpop.permute.xlu0 %524
      %526 = vrot.lane.b32.xlu0 %v481, 8
      %v527 = vpop.permute.xlu0 %526
      %528 = vrot.lane.b32.xlu0 %v483, 8
      %v529 = vpop.permute.xlu0 %528
      %530 = vrot.lane.b32.xlu0 %v486, 8
      %v531 = vpop.permute.xlu0 %530
      %532 = vrot.lane.b32.xlu0 %v488, 8
      %v533 = vpop.permute.xlu0 %532
      %534 = vrot.lane.b32.xlu0 %v491, 8
      %v535 = vpop.permute.xlu0 %534
      %536 = vrot.lane.b32.xlu0 %v493, 8
      %v537 = vpop.permute.xlu0 %536
      %538 = vrot.lane.b32.xlu0 %v496, 8
      %v539 = vpop.permute.xlu0 %538
      %540 = vrot.lane.b32.xlu0 %v498, 8
      %v541 = vpop.permute.xlu0 %540
      %542 = vrot.lane.b32.xlu0 %v501, 8
      %v543 = vpop.permute.xlu0 %542
      %544 = vrot.lane.b32.xlu0 %v503, 8
      %v545 = vpop.permute.xlu0 %544
      %546 = vrot.lane.b32.xlu0 %v506, 8
      %v547 = vpop.permute.xlu0 %546
      %548 = vrot.lane.b32.xlu0 %v508, 8
      %v549 = vpop.permute.xlu0 %548
      %550 = vrot.lane.b32.xlu0 %v511, 8
      %v551 = vpop.permute.xlu0 %550
      %552 = vrot.lane.b32.xlu0 %v513, 8
      %v553 = vpop.permute.xlu0 %552
      %vm574 = vcmask 31744
      %v575 = vsel %vm574, %v272, %v404
      %v576 = vsel %vm574, %v273, %v406
      %v577 = vsel %vm574, %v275, %v408
      %v578 = vsel %vm574, %v276, %v410
      %v579 = vsel %vm574, %v278, %v412
      %v580 = vsel %vm574, %v279, %v414
      %v581 = vsel %vm574, %v281, %v416
      %v582 = vsel %vm574, %v282, %v418
      %v583 = vsel %vm574, %v284, %v420
      %v584 = vsel %vm574, %v285, %v422
      %v585 = vsel %vm574, %v287, %v424
      %v586 = vsel %vm574, %v288, %v426
      %v587 = vsel %vm574, %v290, %v428
      %v588 = vsel %vm574, %v291, %v430
      %v589 = vsel %vm574, %v293, %v432
      %v590 = vsel %vm574, %v294, %v434
      %v591 = vsel %vm574, %v296, %v436
      %v592 = vsel %vm574, %v297, %v438
      %v593 = vsel %vm574, %v299, %v440
      %v594 = vsel %vm574, %v300, %v442
      %v595 = vsel %vm249, %v575, %v515
      %v596 = vsel %vm249, %v576, %v517
      %v597 = vsel %vm249, %v577, %v519
      %v598 = vsel %vm249, %v578, %v521
      %v599 = vsel %vm249, %v579, %v523
      %v600 = vsel %vm249, %v580, %v525
      %v601 = vsel %vm249, %v581, %v527
      %v602 = vsel %vm249, %v582, %v529
      %v603 = vsel %vm249, %v583, %v531
      %v604 = vsel %vm249, %v584, %v533
      %v605 = vsel %vm249, %v585, %v535
      %v606 = vsel %vm249, %v586, %v537
      %v607 = vsel %vm249, %v587, %v539
      %v608 = vsel %vm249, %v588, %v541
      %v609 = vsel %vm249, %v589, %v543
      %v610 = vsel %vm249, %v590, %v545
      %v611 = vsel %vm249, %v591, %v547
      %v612 = vsel %vm249, %v592, %v549
      %v613 = vsel %vm249, %v593, %v551
      %v614 = vsel %vm249, %v594, %v553
      %v615 = vld [vmem:[%s1] sm:$0xff]
      %v616 = vld [vmem:[%s1 + $0x8] sm:$0xf]
      %vm617 = vcmask 97280
      %v619 = vsel %vm617, %v595, 0
      %v622 = vsel %vm617, %v596, 0
      %v625 = vsel %vm617, %v597, 0
      %v628 = vsel %vm617, %v598, 0
      %v631 = vsel %vm617, %v599, 0
      %v634 = vsel %vm617, %v600, 0
      %v637 = vsel %vm617, %v601, 0
      %v640 = vsel %vm617, %v602, 0
      %v643 = vsel %vm617, %v603, 0
      %v646 = vsel %vm617, %v604, 0
      %v649 = vsel %vm617, %v605, 0
      %v652 = vsel %vm617, %v606, 0
      %v655 = vsel %vm617, %v607, 0
      %v658 = vsel %vm617, %v608, 0
      %v661 = vsel %vm617, %v609, 0
      %v664 = vsel %vm617, %v610, 0
      %v667 = vsel %vm617, %v611, 0
      %v670 = vsel %vm617, %v612, 0
      %v673 = vsel %vm617, %v613, 0
      %v676 = vsel %vm617, %v614, 0
      %vm678 = vcmask 1043456
      %v680 = vsel %vm678, %v616, 0
      %682 = vmatpush.msra.mxu0 0.0
      %683 = vmatpush.msra.mxu0 0.0
      %684 = vmatpush.msra.mxu0 0.0
      %685 = vmatpush.msra.mxu0 0.0
      %686 = vmatpush.msra.mxu0 0.0
      %687 = vmatpush.msra.mxu0 0.0
      %688 = vmatpush.msra.mxu0 0.0
      %689 = vmatpush.msra.mxu0 0.0
      %690 = vmatpush.msra.mxu0 0.0
      %691 = vmatpush.msra.mxu0 0.0
      %692 = vmatpush.msra.mxu0 0.0
      %693 = vmatpush.msra.mxu0 0.0
      %694 = vmatpush.msra.mxu0 0.0
      %695 = vmatpush.msra.mxu0 0.0
      %696 = vmatpush.msra.mxu0 %v680
      %697 = vmatpush.msra.mxu0 %v615
      %698 = vmatmul.f32.gmra.mxu0 %v619
      %v699 = vpop.f32.mrf.mxu0
      %v700 = vadd.f32 0.0, %v699
      %701 = vmatmul.f32.gmra.mxu0 %v622
      %v702 = vpop.f32.mrf.mxu0
      %v703 = vadd.f32 0.0, %v702
      %704 = vmatmul.f32.gmra.mxu0 %v625
      %v705 = vpop.f32.mrf.mxu0
      %v706 = vadd.f32 0.0, %v705
      %707 = vmatmul.f32.gmra.mxu0 %v628
      %v708 = vpop.f32.mrf.mxu0
      %v709 = vadd.f32 0.0, %v708
      %710 = vmatmul.f32.gmra.mxu0 %v631
      %v711 = vpop.f32.mrf.mxu0
      %v712 = vadd.f32 0.0, %v711
      %713 = vmatmul.f32.gmra.mxu0 %v634
      %v714 = vpop.f32.mrf.mxu0
      %v715 = vadd.f32 0.0, %v714
      %716 = vmatmul.f32.gmra.mxu0 %v637
      %v717 = vpop.f32.mrf.mxu0
      %v718 = vadd.f32 0.0, %v717
      %719 = vmatmul.f32.gmra.mxu0 %v640
      %v720 = vpop.f32.mrf.mxu0
      %v721 = vadd.f32 0.0, %v720
      %722 = vmatmul.f32.gmra.mxu0 %v643
      %v723 = vpop.f32.mrf.mxu0
      %v724 = vadd.f32 0.0, %v723
      %725 = vmatmul.f32.gmra.mxu0 %v646
      %v726 = vpop.f32.mrf.mxu0
      %v727 = vadd.f32 0.0, %v726
      %728 = vmatmul.f32.gmra.mxu0 %v649
      %v729 = vpop.f32.mrf.mxu0
      %v730 = vadd.f32 0.0, %v729
      %731 = vmatmul.f32.gmra.mxu0 %v652
      %v732 = vpop.f32.mrf.mxu0
      %v733 = vadd.f32 0.0, %v732
      %734 = vmatmul.f32.gmra.mxu0 %v655
      %v735 = vpop.f32.mrf.mxu0
      %v736 = vadd.f32 0.0, %v735
      %737 = vmatmul.f32.gmra.mxu0 %v658
      %v738 = vpop.f32.mrf.mxu0
      %v739 = vadd.f32 0.0, %v738
      %740 = vmatmul.f32.gmra.mxu0 %v661
      %v741 = vpop.f32.mrf.mxu0
      %v742 = vadd.f32 0.0, %v741
      %743 = vmatmul.f32.gmra.mxu0 %v664
      %v744 = vpop.f32.mrf.mxu0
      %v745 = vadd.f32 0.0, %v744
      %746 = vmatmul.f32.gmra.mxu0 %v667
      %v747 = vpop.f32.mrf.mxu0
      %v748 = vadd.f32 0.0, %v747
      %749 = vmatmul.f32.gmra.mxu0 %v670
      %v750 = vpop.f32.mrf.mxu0
      %v751 = vadd.f32 0.0, %v750
      %752 = vmatmul.f32.gmra.mxu0 %v673
      %v753 = vpop.f32.mrf.mxu0
      %v754 = vadd.f32 0.0, %v753
      %755 = vmatmul.f32.gmra.mxu0 %v676
      %v756 = vpop.f32.mrf.mxu0
      %v757 = vadd.f32 0.0, %v756
      %758 = vdwg.mxu0
      %v759 = vadd.f32 %v302, %v700
      %v760 = vadd.f32 %v303, %v703
      %v761 = vadd.f32 %v304, %v706
      %v762 = vadd.f32 %v305, %v709
      %v763 = vadd.f32 %v306, %v712
      %v764 = vadd.f32 %v307, %v715
      %v765 = vadd.f32 %v308, %v718
      %v766 = vadd.f32 %v309, %v721
      %v767 = vadd.f32 %v310, %v724
      %v768 = vadd.f32 %v311, %v727
      %v769 = vadd.f32 %v312, %v730
      %v770 = vadd.f32 %v313, %v733
      %v771 = vadd.f32 %v314, %v736
      %v772 = vadd.f32 %v315, %v739
      %v773 = vadd.f32 %v316, %v742
      %v774 = vadd.f32 %v317, %v745
      %v775 = vadd.f32 %v318, %v748
      %v776 = vadd.f32 %v319, %v751
      %v777 = vadd.f32 %v320, %v754
      %v778 = vadd.f32 %v321, %v757
      %779 = vst.msk [vmem:[#allocation2] sm:$0xff] %vm249, %v759
      %780 = vst.msk [vmem:[#allocation2 + $0x8] sm:$0xff] %vm249, %v760
      %781 = vst.msk [vmem:[#allocation2 + $0x10] sm:$0xff] %vm249, %v761
      %782 = vst.msk [vmem:[#allocation2 + $0x18] sm:$0xff] %vm249, %v762
      %783 = vst.msk [vmem:[#allocation2 + $0x20] sm:$0xff] %vm249, %v763
      %784 = vst.msk [vmem:[#allocation2 + $0x28] sm:$0xff] %vm249, %v764
      %785 = vst.msk [vmem:[#allocation2 + $0x30] sm:$0xff] %vm249, %v765
      %786 = vst.msk [vmem:[#allocation2 + $0x38] sm:$0xff] %vm249, %v766
      %787 = vst.msk [vmem:[#allocation2 + $0x40] sm:$0xff] %vm249, %v767
      %788 = vst.msk [vmem:[#allocation2 + $0x48] sm:$0xff] %vm249, %v768
      %789 = vst.msk [vmem:[#allocation2 + $0x50] sm:$0xff] %vm249, %v769
      %790 = vst.msk [vmem:[#allocation2 + $0x58] sm:$0xff] %vm249, %v770
      %791 = vst.msk [vmem:[#allocation2 + $0x60] sm:$0xff] %vm249, %v771
      %792 = vst.msk [vmem:[#allocation2 + $0x68] sm:$0xff] %vm249, %v772
      %793 = vst.msk [vmem:[#allocation2 + $0x70] sm:$0xff] %vm249, %v773
      %794 = vst.msk [vmem:[#allocation2 + $0x78] sm:$0xff] %vm249, %v774
      %795 = vst.msk [vmem:[#allocation2 + $0x80] sm:$0xff] %vm249, %v775
      %796 = vst.msk [vmem:[#allocation2 + $0x88] sm:$0xff] %vm249, %v776
      %797 = vst.msk [vmem:[#allocation2 + $0x90] sm:$0xff] %vm249, %v777
      %798 = vst.msk [vmem:[#allocation2 + $0x98] sm:$0xff] %vm249, %v778
      %s799 = sadd.s32 %s248, 1
      %s800 = smul.u32 %s799, 24
      %s801 = scalar_lea.vmem %s237, %s800
      %v802 = vld [vmem:[%s801] sm:$0xff]
      %v803 = vld [vmem:[%s801 + $0x8] sm:$0xff]
      %v804 = vld [vmem:[%s801 + $0x10] sm:$0x3]
      %v805 = vld [vmem:[%s801 + $0x18] sm:$0xff]
      %v806 = vld [vmem:[%s801 + $0x20] sm:$0xff]
      %v807 = vld [vmem:[%s801 + $0x28] sm:$0x3]
      %v808 = vld [vmem:[%s801 + $0x30] sm:$0xff]
      %v809 = vld [vmem:[%s801 + $0x38] sm:$0xff]
      %v810 = vld [vmem:[%s801 + $0x40] sm:$0x3]
      %v811 = vld [vmem:[%s801 + $0x48] sm:$0xff]
      %v812 = vld [vmem:[%s801 + $0x50] sm:$0xff]
      %v813 = vld [vmem:[%s801 + $0x58] sm:$0x3]
      %v814 = vld [vmem:[%s801 + $0x60] sm:$0xff]
      %v815 = vld [vmem:[%s801 + $0x68] sm:$0xff]
      %v816 = vld [vmem:[%s801 + $0x70] sm:$0x3]
      %v817 = vld [vmem:[%s801 + $0x78] sm:$0xff]
      %v818 = vld [vmem:[%s801 + $0x80] sm:$0xff]
      %v819 = vld [vmem:[%s801 + $0x88] sm:$0x3]
      %v820 = vld [vmem:[%s801 + $0x90] sm:$0xff]
      %v821 = vld [vmem:[%s801 + $0x98] sm:$0xff]
      %v822 = vld [vmem:[%s801 + $0xa0] sm:$0x3]
      %v823 = vld [vmem:[%s801 + $0xa8] sm:$0xff]
      %v824 = vld [vmem:[%s801 + $0xb0] sm:$0xff]
      %v825 = vld [vmem:[%s801 + $0xb8] sm:$0x3]
      %v826 = vld [vmem:[%s801 + $0xc0] sm:$0xff]
      %v827 = vld [vmem:[%s801 + $0xc8] sm:$0xff]
      %v828 = vld [vmem:[%s801 + $0xd0] sm:$0x3]
      %v829 = vld [vmem:[%s801 + $0xd8] sm:$0xff]
      %v830 = vld [vmem:[%s801 + $0xe0] sm:$0xff]
      %v831 = vld [vmem:[%s801 + $0xe8] sm:$0x3]
      %v832 = vld [vmem:[#allocation2] sm:$0xff]
      %v833 = vld [vmem:[#allocation2 + $0x8] sm:$0xff]
      %v834 = vld [vmem:[#allocation2 + $0x10] sm:$0xff]
      %v835 = vld [vmem:[#allocation2 + $0x18] sm:$0xff]
      %v836 = vld [vmem:[#allocation2 + $0x20] sm:$0xff]
      %v837 = vld [vmem:[#allocation2 + $0x28] sm:$0xff]
      %v838 = vld [vmem:[#allocation2 + $0x30] sm:$0xff]
      %v839 = vld [vmem:[#allocation2 + $0x38] sm:$0xff]
      %v840 = vld [vmem:[#allocation2 + $0x40] sm:$0xff]
      %v841 = vld [vmem:[#allocation2 + $0x48] sm:$0xff]
      %v842 = vld [vmem:[#allocation2 + $0x50] sm:$0xff]
      %v843 = vld [vmem:[#allocation2 + $0x58] sm:$0xff]
      %v844 = vld [vmem:[#allocation2 + $0x60] sm:$0xff]
      %v845 = vld [vmem:[#allocation2 + $0x68] sm:$0xff]
      %v846 = vld [vmem:[#allocation2 + $0x70] sm:$0xff]
      %v847 = vld [vmem:[#allocation2 + $0x78] sm:$0xff]
      %v848 = vld [vmem:[#allocation2 + $0x80] sm:$0xff]
      %v849 = vld [vmem:[#allocation2 + $0x88] sm:$0xff]
      %v850 = vld [vmem:[#allocation2 + $0x90] sm:$0xff]
      %v851 = vld [vmem:[#allocation2 + $0x98] sm:$0xff]
      %v882 = vrot.slane %v802, 1
      %v883 = vrot.slane %v803, 1
      %v884 = vsel %vm352, %v882, %v883
      %v885 = vrot.slane %v804, 1
      %v886 = vsel %vm352, %v883, %v885
      %v887 = vrot.slane %v805, 1
      %v888 = vrot.slane %v806, 1
      %v889 = vsel %vm352, %v887, %v888
      %v890 = vrot.slane %v807, 1
      %v891 = vsel %vm352, %v888, %v890
      %v892 = vrot.slane %v808, 1
      %v893 = vrot.slane %v809, 1
      %v894 = vsel %vm352, %v892, %v893
      %v895 = vrot.slane %v810, 1
      %v896 = vsel %vm352, %v893, %v895
      %v897 = vrot.slane %v811, 1
      %v898 = vrot.slane %v812, 1
      %v899 = vsel %vm352, %v897, %v898
      %v900 = vrot.slane %v813, 1
      %v901 = vsel %vm352, %v898, %v900
      %v902 = vrot.slane %v814, 1
      %v903 = vrot.slane %v815, 1
      %v904 = vsel %vm352, %v902, %v903
      %v905 = vrot.slane %v816, 1
      %v906 = vsel %vm352, %v903, %v905
      %v907 = vrot.slane %v817, 1
      %v908 = vrot.slane %v818, 1
      %v909 = vsel %vm352, %v907, %v908
      %v910 = vrot.slane %v819, 1
      %v911 = vsel %vm352, %v908, %v910
      %v912 = vrot.slane %v820, 1
      %v913 = vrot.slane %v821, 1
      %v914 = vsel %vm352, %v912, %v913
      %v915 = vrot.slane %v822, 1
      %v916 = vsel %vm352, %v913, %v915
      %v917 = vrot.slane %v823, 1
      %v918 = vrot.slane %v824, 1
      %v919 = vsel %vm352, %v917, %v918
      %v920 = vrot.slane %v825, 1
      %v921 = vsel %vm352, %v918, %v920
      %v922 = vrot.slane %v826, 1
      %v923 = vrot.slane %v827, 1
      %v924 = vsel %vm352, %v922, %v923
      %v925 = vrot.slane %v828, 1
      %v926 = vsel %vm352, %v923, %v925
      %v927 = vrot.slane %v829, 1
      %v928 = vrot.slane %v830, 1
      %v929 = vsel %vm352, %v927, %v928
      %v930 = vrot.slane %v831, 1
      %v931 = vsel %vm352, %v928, %v930
      %932 = vrot.lane.b32.xlu0 %v884, 4
      %v933 = vpop.permute.xlu0 %932
      %934 = vrot.lane.b32.xlu0 %v886, 4
      %v935 = vpop.permute.xlu0 %934
      %936 = vrot.lane.b32.xlu0 %v889, 4
      %v937 = vpop.permute.xlu0 %936
      %938 = vrot.lane.b32.xlu0 %v891, 4
      %v939 = vpop.permute.xlu0 %938
      %940 = vrot.lane.b32.xlu0 %v894, 4
      %v941 = vpop.permute.xlu0 %940
      %942 = vrot.lane.b32.xlu0 %v896, 4
      %v943 = vpop.permute.xlu0 %942
      %944 = vrot.lane.b32.xlu0 %v899, 4
      %v945 = vpop.permute.xlu0 %944
      %946 = vrot.lane.b32.xlu0 %v901, 4
      %v947 = vpop.permute.xlu0 %946
      %948 = vrot.lane.b32.xlu0 %v904, 4
      %v949 = vpop.permute.xlu0 %948
      %950 = vrot.lane.b32.xlu0 %v906, 4
      %v951 = vpop.permute.xlu0 %950
      %952 = vrot.lane.b32.xlu0 %v909, 4
      %v953 = vpop.permute.xlu0 %952
      %954 = vrot.lane.b32.xlu0 %v911, 4
      %v955 = vpop.permute.xlu0 %954
      %956 = vrot.lane.b32.xlu0 %v914, 4
      %v957 = vpop.permute.xlu0 %956
      %958 = vrot.lane.b32.xlu0 %v916, 4
      %v959 = vpop.permute.xlu0 %958
      %960 = vrot.lane.b32.xlu0 %v919, 4
      %v961 = vpop.permute.xlu0 %960
      %962 = vrot.lane.b32.xlu0 %v921, 4
      %v963 = vpop.permute.xlu0 %962
      %964 = vrot.lane.b32.xlu0 %v924, 4
      %v965 = vpop.permute.xlu0 %964
      %966 = vrot.lane.b32.xlu0 %v926, 4
      %v967 = vpop.permute.xlu0 %966
      %968 = vrot.lane.b32.xlu0 %v929, 4
      %v969 = vpop.permute.xlu0 %968
      %970 = vrot.lane.b32.xlu0 %v931, 4
      %v971 = vpop.permute.xlu0 %970
      %v992 = vrot.slane %v802, 2
      %v993 = vrot.slane %v803, 2
      %v994 = vsel %vm463, %v992, %v993
      %v995 = vrot.slane %v804, 2
      %v996 = vsel %vm463, %v993, %v995
      %v997 = vrot.slane %v805, 2
      %v998 = vrot.slane %v806, 2
      %v999 = vsel %vm463, %v997, %v998
      %v1000 = vrot.slane %v807, 2
      %v1001 = vsel %vm463, %v998, %v1000
      %v1002 = vrot.slane %v808, 2
      %v1003 = vrot.slane %v809, 2
      %v1004 = vsel %vm463, %v1002, %v1003
      %v1005 = vrot.slane %v810, 2
      %v1006 = vsel %vm463, %v1003, %v1005
      %v1007 = vrot.slane %v811, 2
      %v1008 = vrot.slane %v812, 2
      %v1009 = vsel %vm463, %v1007, %v1008
      %v1010 = vrot.slane %v813, 2
      %v1011 = vsel %vm463, %v1008, %v1010
      %v1012 = vrot.slane %v814, 2
      %v1013 = vrot.slane %v815, 2
      %v1014 = vsel %vm463, %v1012, %v1013
      %v1015 = vrot.slane %v816, 2
      %v1016 = vsel %vm463, %v1013, %v1015
      %v1017 = vrot.slane %v817, 2
      %v1018 = vrot.slane %v818, 2
      %v1019 = vsel %vm463, %v1017, %v1018
      %v1020 = vrot.slane %v819, 2
      %v1021 = vsel %vm463, %v1018, %v1020
      %v1022 = vrot.slane %v820, 2
      %v1023 = vrot.slane %v821, 2
      %v1024 = vsel %vm463, %v1022, %v1023
      %v1025 = vrot.slane %v822, 2
      %v1026 = vsel %vm463, %v1023, %v1025
      %v1027 = vrot.slane %v823, 2
      %v1028 = vrot.slane %v824, 2
      %v1029 = vsel %vm463, %v1027, %v1028
      %v1030 = vrot.slane %v825, 2
      %v1031 = vsel %vm463, %v1028, %v1030
      %v1032 = vrot.slane %v826, 2
      %v1033 = vrot.slane %v827, 2
      %v1034 = vsel %vm463, %v1032, %v1033
      %v1035 = vrot.slane %v828, 2
      %v1036 = vsel %vm463, %v1033, %v1035
      %v1037 = vrot.slane %v829, 2
      %v1038 = vrot.slane %v830, 2
      %v1039 = vsel %vm463, %v1037, %v1038
      %v1040 = vrot.slane %v831, 2
      %v1041 = vsel %vm463, %v1038, %v1040
      %1042 = vrot.lane.b32.xlu0 %v994, 8
      %v1043 = vpop.permute.xlu0 %1042
      %1044 = vrot.lane.b32.xlu0 %v996, 8
      %v1045 = vpop.permute.xlu0 %1044
      %1046 = vrot.lane.b32.xlu0 %v999, 8
      %v1047 = vpop.permute.xlu0 %1046
      %1048 = vrot.lane.b32.xlu0 %v1001, 8
      %v1049 = vpop.permute.xlu0 %1048
      %1050 = vrot.lane.b32.xlu0 %v1004, 8
      %v1051 = vpop.permute.xlu0 %1050
      %1052 = vrot.lane.b32.xlu0 %v1006, 8
      %v1053 = vpop.permute.xlu0 %1052
      %1054 = vrot.lane.b32.xlu0 %v1009, 8
      %v1055 = vpop.permute.xlu0 %1054
      %1056 = vrot.lane.b32.xlu0 %v1011, 8
      %v1057 = vpop.permute.xlu0 %1056
      %1058 = vrot.lane.b32.xlu0 %v1014, 8
      %v1059 = vpop.permute.xlu0 %1058
      %1060 = vrot.lane.b32.xlu0 %v1016, 8
      %v1061 = vpop.permute.xlu0 %1060
      %1062 = vrot.lane.b32.xlu0 %v1019, 8
      %v1063 = vpop.permute.xlu0 %1062
      %1064 = vrot.lane.b32.xlu0 %v1021, 8
      %v1065 = vpop.permute.xlu0 %1064
      %1066 = vrot.lane.b32.xlu0 %v1024, 8
      %v1067 = vpop.permute.xlu0 %1066
      %1068 = vrot.lane.b32.xlu0 %v1026, 8
      %v1069 = vpop.permute.xlu0 %1068
      %1070 = vrot.lane.b32.xlu0 %v1029, 8
      %v1071 = vpop.permute.xlu0 %1070
      %1072 = vrot.lane.b32.xlu0 %v1031, 8
      %v1073 = vpop.permute.xlu0 %1072
      %1074 = vrot.lane.b32.xlu0 %v1034, 8
      %v1075 = vpop.permute.xlu0 %1074
      %1076 = vrot.lane.b32.xlu0 %v1036, 8
      %v1077 = vpop.permute.xlu0 %1076
      %1078 = vrot.lane.b32.xlu0 %v1039, 8
      %v1079 = vpop.permute.xlu0 %1078
      %1080 = vrot.lane.b32.xlu0 %v1041, 8
      %v1081 = vpop.permute.xlu0 %1080
      %v1102 = vsel %vm574, %v802, %v933
      %v1103 = vsel %vm574, %v803, %v935
      %v1104 = vsel %vm574, %v805, %v937
      %v1105 = vsel %vm574, %v806, %v939
      %v1106 = vsel %vm574, %v808, %v941
      %v1107 = vsel %vm574, %v809, %v943
      %v1108 = vsel %vm574, %v811, %v945
      %v1109 = vsel %vm574, %v812, %v947
      %v1110 = vsel %vm574, %v814, %v949
      %v1111 = vsel %vm574, %v815, %v951
      %v1112 = vsel %vm574, %v817, %v953
      %v1113 = vsel %vm574, %v818, %v955
      %v1114 = vsel %vm574, %v820, %v957
      %v1115 = vsel %vm574, %v821, %v959
      %v1116 = vsel %vm574, %v823, %v961
      %v1117 = vsel %vm574, %v824, %v963
      %v1118 = vsel %vm574, %v826, %v965
      %v1119 = vsel %vm574, %v827, %v967
      %v1120 = vsel %vm574, %v829, %v969
      %v1121 = vsel %vm574, %v830, %v971
      %v1122 = vsel %vm249, %v1102, %v1043
      %v1123 = vsel %vm249, %v1103, %v1045
      %v1124 = vsel %vm249, %v1104, %v1047
      %v1125 = vsel %vm249, %v1105, %v1049
      %v1126 = vsel %vm249, %v1106, %v1051
      %v1127 = vsel %vm249, %v1107, %v1053
      %v1128 = vsel %vm249, %v1108, %v1055
      %v1129 = vsel %vm249, %v1109, %v1057
      %v1130 = vsel %vm249, %v1110, %v1059
      %v1131 = vsel %vm249, %v1111, %v1061
      %v1132 = vsel %vm249, %v1112, %v1063
      %v1133 = vsel %vm249, %v1113, %v1065
      %v1134 = vsel %vm249, %v1114, %v1067
      %v1135 = vsel %vm249, %v1115, %v1069
      %v1136 = vsel %vm249, %v1116, %v1071
      %v1137 = vsel %vm249, %v1117, %v1073
      %v1138 = vsel %vm249, %v1118, %v1075
      %v1139 = vsel %vm249, %v1119, %v1077
      %v1140 = vsel %vm249, %v1120, %v1079
      %v1141 = vsel %vm249, %v1121, %v1081
      %s1142 = scalar_lea.vmem %s1, 16
      %v1143 = vld [vmem:[%s1142] sm:$0xff]
      %v1144 = vld [vmem:[%s1142 + $0x8] sm:$0xf]
      %v1146 = vsel %vm617, %v1122, 0
      %v1149 = vsel %vm617, %v1123, 0
      %v1152 = vsel %vm617, %v1124, 0
      %v1155 = vsel %vm617, %v1125, 0
      %v1158 = vsel %vm617, %v1126, 0
      %v1161 = vsel %vm617, %v1127, 0
      %v1164 = vsel %vm617, %v1128, 0
      %v1167 = vsel %vm617, %v1129, 0
      %v1170 = vsel %vm617, %v1130, 0
      %v1173 = vsel %vm617, %v1131, 0
      %v1176 = vsel %vm617, %v1132, 0
      %v1179 = vsel %vm617, %v1133, 0
      %v1182 = vsel %vm617, %v1134, 0
      %v1185 = vsel %vm617, %v1135, 0
      %v1188 = vsel %vm617, %v1136, 0
      %v1191 = vsel %vm617, %v1137, 0
      %v1194 = vsel %vm617, %v1138, 0
      %v1197 = vsel %vm617, %v1139, 0
      %v1200 = vsel %vm617, %v1140, 0
      %v1203 = vsel %vm617, %v1141, 0
      %v1206 = vsel %vm678, %v1144, 0
      %1208 = vmatpush.msra.mxu0 0.0
      %1209 = vmatpush.msra.mxu0 0.0
      %1210 = vmatpush.msra.mxu0 0.0
      %1211 = vmatpush.msra.mxu0 0.0
      %1212 = vmatpush.msra.mxu0 0.0
      %1213 = vmatpush.msra.mxu0 0.0
      %1214 = vmatpush.msra.mxu0 0.0
      %1215 = vmatpush.msra.mxu0 0.0
      %1216 = vmatpush.msra.mxu0 0.0
      %1217 = vmatpush.msra.mxu0 0.0
      %1218 = vmatpush.msra.mxu0 0.0
      %1219 = vmatpush.msra.mxu0 0.0
      %1220 = vmatpush.msra.mxu0 0.0
      %1221 = vmatpush.msra.mxu0 0.0
      %1222 = vmatpush.msra.mxu0 %v1206
      %1223 = vmatpush.msra.mxu0 %v1143
      %1224 = vmatmul.f32.gmra.mxu0 %v1146
      %v1225 = vpop.f32.mrf.mxu0
      %v1226 = vadd.f32 0.0, %v1225
      %1227 = vmatmul.f32.gmra.mxu0 %v1149
      %v1228 = vpop.f32.mrf.mxu0
      %v1229 = vadd.f32 0.0, %v1228
      %1230 = vmatmul.f32.gmra.mxu0 %v1152
      %v1231 = vpop.f32.mrf.mxu0
      %v1232 = vadd.f32 0.0, %v1231
      %1233 = vmatmul.f32.gmra.mxu0 %v1155
      %v1234 = vpop.f32.mrf.mxu0
      %v1235 = vadd.f32 0.0, %v1234
      %1236 = vmatmul.f32.gmra.mxu0 %v1158
      %v1237 = vpop.f32.mrf.mxu0
      %v1238 = vadd.f32 0.0, %v1237
      %1239 = vmatmul.f32.gmra.mxu0 %v1161
      %v1240 = vpop.f32.mrf.mxu0
      %v1241 = vadd.f32 0.0, %v1240
      %1242 = vmatmul.f32.gmra.mxu0 %v1164
      %v1243 = vpop.f32.mrf.mxu0
      %v1244 = vadd.f32 0.0, %v1243
      %1245 = vmatmul.f32.gmra.mxu0 %v1167
      %v1246 = vpop.f32.mrf.mxu0
      %v1247 = vadd.f32 0.0, %v1246
      %1248 = vmatmul.f32.gmra.mxu0 %v1170
      %v1249 = vpop.f32.mrf.mxu0
      %v1250 = vadd.f32 0.0, %v1249
      %1251 = vmatmul.f32.gmra.mxu0 %v1173
      %v1252 = vpop.f32.mrf.mxu0
      %v1253 = vadd.f32 0.0, %v1252
      %1254 = vmatmul.f32.gmra.mxu0 %v1176
      %v1255 = vpop.f32.mrf.mxu0
      %v1256 = vadd.f32 0.0, %v1255
      %1257 = vmatmul.f32.gmra.mxu0 %v1179
      %v1258 = vpop.f32.mrf.mxu0
      %v1259 = vadd.f32 0.0, %v1258
      %1260 = vmatmul.f32.gmra.mxu0 %v1182
      %v1261 = vpop.f32.mrf.mxu0
      %v1262 = vadd.f32 0.0, %v1261
      %1263 = vmatmul.f32.gmra.mxu0 %v1185
      %v1264 = vpop.f32.mrf.mxu0
      %v1265 = vadd.f32 0.0, %v1264
      %1266 = vmatmul.f32.gmra.mxu0 %v1188
      %v1267 = vpop.f32.mrf.mxu0
      %v1268 = vadd.f32 0.0, %v1267
      %1269 = vmatmul.f32.gmra.mxu0 %v1191
      %v1270 = vpop.f32.mrf.mxu0
      %v1271 = vadd.f32 0.0, %v1270
      %1272 = vmatmul.f32.gmra.mxu0 %v1194
      %v1273 = vpop.f32.mrf.mxu0
      %v1274 = vadd.f32 0.0, %v1273
      %1275 = vmatmul.f32.gmra.mxu0 %v1197
      %v1276 = vpop.f32.mrf.mxu0
      %v1277 = vadd.f32 0.0, %v1276
      %1278 = vmatmul.f32.gmra.mxu0 %v1200
      %v1279 = vpop.f32.mrf.mxu0
      %v1280 = vadd.f32 0.0, %v1279
      %1281 = vmatmul.f32.gmra.mxu0 %v1203
      %v1282 = vpop.f32.mrf.mxu0
      %v1283 = vadd.f32 0.0, %v1282
      %1284 = vdwg.mxu0
      %v1285 = vadd.f32 %v832, %v1226
      %v1286 = vadd.f32 %v833, %v1229
      %v1287 = vadd.f32 %v834, %v1232
      %v1288 = vadd.f32 %v835, %v1235
      %v1289 = vadd.f32 %v836, %v1238
      %v1290 = vadd.f32 %v837, %v1241
      %v1291 = vadd.f32 %v838, %v1244
      %v1292 = vadd.f32 %v839, %v1247
      %v1293 = vadd.f32 %v840, %v1250
      %v1294 = vadd.f32 %v841, %v1253
      %v1295 = vadd.f32 %v842, %v1256
      %v1296 = vadd.f32 %v843, %v1259
      %v1297 = vadd.f32 %v844, %v1262
      %v1298 = vadd.f32 %v845, %v1265
      %v1299 = vadd.f32 %v846, %v1268
      %v1300 = vadd.f32 %v847, %v1271
      %v1301 = vadd.f32 %v848, %v1274
      %v1302 = vadd.f32 %v849, %v1277
      %v1303 = vadd.f32 %v850, %v1280
      %v1304 = vadd.f32 %v851, %v1283
      %1305 = vst.msk [vmem:[#allocation2] sm:$0xff] %vm249, %v1285
      %1306 = vst.msk [vmem:[#allocation2 + $0x8] sm:$0xff] %vm249, %v1286
      %1307 = vst.msk [vmem:[#allocation2 + $0x10] sm:$0xff] %vm249, %v1287
      %1308 = vst.msk [vmem:[#allocation2 + $0x18] sm:$0xff] %vm249, %v1288
      %1309 = vst.msk [vmem:[#allocation2 + $0x20] sm:$0xff] %vm249, %v1289
      %1310 = vst.msk [vmem:[#allocation2 + $0x28] sm:$0xff] %vm249, %v1290
      %1311 = vst.msk [vmem:[#allocation2 + $0x30] sm:$0xff] %vm249, %v1291
      %1312 = vst.msk [vmem:[#allocation2 + $0x38] sm:$0xff] %vm249, %v1292
      %1313 = vst.msk [vmem:[#allocation2 + $0x40] sm:$0xff] %vm249, %v1293
      %1314 = vst.msk [vmem:[#allocation2 + $0x48] sm:$0xff] %vm249, %v1294
      %1315 = vst.msk [vmem:[#allocation2 + $0x50] sm:$0xff] %vm249, %v1295
      %1316 = vst.msk [vmem:[#allocation2 + $0x58] sm:$0xff] %vm249, %v1296
      %1317 = vst.msk [vmem:[#allocation2 + $0x60] sm:$0xff] %vm249, %v1297
      %1318 = vst.msk [vmem:[#allocation2 + $0x68] sm:$0xff] %vm249, %v1298
      %1319 = vst.msk [vmem:[#allocation2 + $0x70] sm:$0xff] %vm249, %v1299
      %1320 = vst.msk [vmem:[#allocation2 + $0x78] sm:$0xff] %vm249, %v1300
      %1321 = vst.msk [vmem:[#allocation2 + $0x80] sm:$0xff] %vm249, %v1301
      %1322 = vst.msk [vmem:[#allocation2 + $0x88] sm:$0xff] %vm249, %v1302
      %1323 = vst.msk [vmem:[#allocation2 + $0x90] sm:$0xff] %vm249, %v1303
      %1324 = vst.msk [vmem:[#allocation2 + $0x98] sm:$0xff] %vm249, %v1304
      %s1325 = sadd.s32 %s248, 2
      %s1326 = smul.u32 %s1325, 24
      %s1327 = scalar_lea.vmem %s237, %s1326
      %v1328 = vld [vmem:[%s1327] sm:$0xff]
      %v1329 = vld [vmem:[%s1327 + $0x8] sm:$0xff]
      %v1330 = vld [vmem:[%s1327 + $0x10] sm:$0x3]
      %v1331 = vld [vmem:[%s1327 + $0x18] sm:$0xff]
      %v1332 = vld [vmem:[%s1327 + $0x20] sm:$0xff]
      %v1333 = vld [vmem:[%s1327 + $0x28] sm:$0x3]
      %v1334 = vld [vmem:[%s1327 + $0x30] sm:$0xff]
      %v1335 = vld [vmem:[%s1327 + $0x38] sm:$0xff]
      %v1336 = vld [vmem:[%s1327 + $0x40] sm:$0x3]
      %v1337 = vld [vmem:[%s1327 + $0x48] sm:$0xff]
      %v1338 = vld [vmem:[%s1327 + $0x50] sm:$0xff]
      %v1339 = vld [vmem:[%s1327 + $0x58] sm:$0x3]
      %v1340 = vld [vmem:[%s1327 + $0x60] sm:$0xff]
      %v1341 = vld [vmem:[%s1327 + $0x68] sm:$0xff]
      %v1342 = vld [vmem:[%s1327 + $0x70] sm:$0x3]
      %v1343 = vld [vmem:[%s1327 + $0x78] sm:$0xff]
      %v1344 = vld [vmem:[%s1327 + $0x80] sm:$0xff]
      %v1345 = vld [vmem:[%s1327 + $0x88] sm:$0x3]
      %v1346 = vld [vmem:[%s1327 + $0x90] sm:$0xff]
      %v1347 = vld [vmem:[%s1327 + $0x98] sm:$0xff]
      %v1348 = vld [vmem:[%s1327 + $0xa0] sm:$0x3]
      %v1349 = vld [vmem:[%s1327 + $0xa8] sm:$0xff]
      %v1350 = vld [vmem:[%s1327 + $0xb0] sm:$0xff]
      %v1351 = vld [vmem:[%s1327 + $0xb8] sm:$0x3]
      %v1352 = vld [vmem:[%s1327 + $0xc0] sm:$0xff]
      %v1353 = vld [vmem:[%s1327 + $0xc8] sm:$0xff]
      %v1354 = vld [vmem:[%s1327 + $0xd0] sm:$0x3]
      %v1355 = vld [vmem:[%s1327 + $0xd8] sm:$0xff]
      %v1356 = vld [vmem:[%s1327 + $0xe0] sm:$0xff]
      %v1357 = vld [vmem:[%s1327 + $0xe8] sm:$0x3]
      %v1358 = vld [vmem:[#allocation2] sm:$0xff]
      %v1359 = vld [vmem:[#allocation2 + $0x8] sm:$0xff]
      %v1360 = vld [vmem:[#allocation2 + $0x10] sm:$0xff]
      %v1361 = vld [vmem:[#allocation2 + $0x18] sm:$0xff]
      %v1362 = vld [vmem:[#allocation2 + $0x20] sm:$0xff]
      %v1363 = vld [vmem:[#allocation2 + $0x28] sm:$0xff]
      %v1364 = vld [vmem:[#allocation2 + $0x30] sm:$0xff]
      %v1365 = vld [vmem:[#allocation2 + $0x38] sm:$0xff]
      %v1366 = vld [vmem:[#allocation2 + $0x40] sm:$0xff]
      %v1367 = vld [vmem:[#allocation2 + $0x48] sm:$0xff]
      %v1368 = vld [vmem:[#allocation2 + $0x50] sm:$0xff]
      %v1369 = vld [vmem:[#allocation2 + $0x58] sm:$0xff]
      %v1370 = vld [vmem:[#allocation2 + $0x60] sm:$0xff]
      %v1371 = vld [vmem:[#allocation2 + $0x68] sm:$0xff]
      %v1372 = vld [vmem:[#allocation2 + $0x70] sm:$0xff]
      %v1373 = vld [vmem:[#allocation2 + $0x78] sm:$0xff]
      %v1374 = vld [vmem:[#allocation2 + $0x80] sm:$0xff]
      %v1375 = vld [vmem:[#allocation2 + $0x88] sm:$0xff]
      %v1376 = vld [vmem:[#allocation2 + $0x90] sm:$0xff]
      %v1377 = vld [vmem:[#allocation2 + $0x98] sm:$0xff]
      %v1408 = vrot.slane %v1328, 1
      %v1409 = vrot.slane %v1329, 1
      %v1410 = vsel %vm352, %v1408, %v1409
      %v1411 = vrot.slane %v1330, 1
      %v1412 = vsel %vm352, %v1409, %v1411
      %v1413 = vrot.slane %v1331, 1
      %v1414 = vrot.slane %v1332, 1
      %v1415 = vsel %vm352, %v1413, %v1414
      %v1416 = vrot.slane %v1333, 1
      %v1417 = vsel %vm352, %v1414, %v1416
      %v1418 = vrot.slane %v1334, 1
      %v1419 = vrot.slane %v1335, 1
      %v1420 = vsel %vm352, %v1418, %v1419
      %v1421 = vrot.slane %v1336, 1
      %v1422 = vsel %vm352, %v1419, %v1421
      %v1423 = vrot.slane %v1337, 1
      %v1424 = vrot.slane %v1338, 1
      %v1425 = vsel %vm352, %v1423, %v1424
      %v1426 = vrot.slane %v1339, 1
      %v1427 = vsel %vm352, %v1424, %v1426
      %v1428 = vrot.slane %v1340, 1
      %v1429 = vrot.slane %v1341, 1
      %v1430 = vsel %vm352, %v1428, %v1429
      %v1431 = vrot.slane %v1342, 1
      %v1432 = vsel %vm352, %v1429, %v1431
      %v1433 = vrot.slane %v1343, 1
      %v1434 = vrot.slane %v1344, 1
      %v1435 = vsel %vm352, %v1433, %v1434
      %v1436 = vrot.slane %v1345, 1
      %v1437 = vsel %vm352, %v1434, %v1436
      %v1438 = vrot.slane %v1346, 1
      %v1439 = vrot.slane %v1347, 1
      %v1440 = vsel %vm352, %v1438, %v1439
      %v1441 = vrot.slane %v1348, 1
      %v1442 = vsel %vm352, %v1439, %v1441
      %v1443 = vrot.slane %v1349, 1
      %v1444 = vrot.slane %v1350, 1
      %v1445 = vsel %vm352, %v1443, %v1444
      %v1446 = vrot.slane %v1351, 1
      %v1447 = vsel %vm352, %v1444, %v1446
      %v1448 = vrot.slane %v1352, 1
      %v1449 = vrot.slane %v1353, 1
      %v1450 = vsel %vm352, %v1448, %v1449
      %v1451 = vrot.slane %v1354, 1
      %v1452 = vsel %vm352, %v1449, %v1451
      %v1453 = vrot.slane %v1355, 1
      %v1454 = vrot.slane %v1356, 1
      %v1455 = vsel %vm352, %v1453, %v1454
      %v1456 = vrot.slane %v1357, 1
      %v1457 = vsel %vm352, %v1454, %v1456
      %1458 = vrot.lane.b32.xlu0 %v1410, 4
      %v1459 = vpop.permute.xlu0 %1458
      %1460 = vrot.lane.b32.xlu0 %v1412, 4
      %v1461 = vpop.permute.xlu0 %1460
      %1462 = vrot.lane.b32.xlu0 %v1415, 4
      %v1463 = vpop.permute.xlu0 %1462
      %1464 = vrot.lane.b32.xlu0 %v1417, 4
      %v1465 = vpop.permute.xlu0 %1464
      %1466 = vrot.lane.b32.xlu0 %v1420, 4
      %v1467 = vpop.permute.xlu0 %1466
      %1468 = vrot.lane.b32.xlu0 %v1422, 4
      %v1469 = vpop.permute.xlu0 %1468
      %1470 = vrot.lane.b32.xlu0 %v1425, 4
      %v1471 = vpop.permute.xlu0 %1470
      %1472 = vrot.lane.b32.xlu0 %v1427, 4
      %v1473 = vpop.permute.xlu0 %1472
      %1474 = vrot.lane.b32.xlu0 %v1430, 4
      %v1475 = vpop.permute.xlu0 %1474
      %1476 = vrot.lane.b32.xlu0 %v1432, 4
      %v1477 = vpop.permute.xlu0 %1476
      %1478 = vrot.lane.b32.xlu0 %v1435, 4
      %v1479 = vpop.permute.xlu0 %1478
      %1480 = vrot.lane.b32.xlu0 %v1437, 4
      %v1481 = vpop.permute.xlu0 %1480
      %1482 = vrot.lane.b32.xlu0 %v1440, 4
      %v1483 = vpop.permute.xlu0 %1482
      %1484 = vrot.lane.b32.xlu0 %v1442, 4
      %v1485 = vpop.permute.xlu0 %1484
      %1486 = vrot.lane.b32.xlu0 %v1445, 4
      %v1487 = vpop.permute.xlu0 %1486
      %1488 = vrot.lane.b32.xlu0 %v1447, 4
      %v1489 = vpop.permute.xlu0 %1488
      %1490 = vrot.lane.b32.xlu0 %v1450, 4
      %v1491 = vpop.permute.xlu0 %1490
      %1492 = vrot.lane.b32.xlu0 %v1452, 4
      %v1493 = vpop.permute.xlu0 %1492
      %1494 = vrot.lane.b32.xlu0 %v1455, 4
      %v1495 = vpop.permute.xlu0 %1494
      %1496 = vrot.lane.b32.xlu0 %v1457, 4
      %v1497 = vpop.permute.xlu0 %1496
      %v1518 = vrot.slane %v1328, 2
      %v1519 = vrot.slane %v1329, 2
      %v1520 = vsel %vm463, %v1518, %v1519
      %v1521 = vrot.slane %v1330, 2
      %v1522 = vsel %vm463, %v1519, %v1521
      %v1523 = vrot.slane %v1331, 2
      %v1524 = vrot.slane %v1332, 2
      %v1525 = vsel %vm463, %v1523, %v1524
      %v1526 = vrot.slane %v1333, 2
      %v1527 = vsel %vm463, %v1524, %v1526
      %v1528 = vrot.slane %v1334, 2
      %v1529 = vrot.slane %v1335, 2
      %v1530 = vsel %vm463, %v1528, %v1529
      %v1531 = vrot.slane %v1336, 2
      %v1532 = vsel %vm463, %v1529, %v1531
      %v1533 = vrot.slane %v1337, 2
      %v1534 = vrot.slane %v1338, 2
      %v1535 = vsel %vm463, %v1533, %v1534
      %v1536 = vrot.slane %v1339, 2
      %v1537 = vsel %vm463, %v1534, %v1536
      %v1538 = vrot.slane %v1340, 2
      %v1539 = vrot.slane %v1341, 2
      %v1540 = vsel %vm463, %v1538, %v1539
      %v1541 = vrot.slane %v1342, 2
      %v1542 = vsel %vm463, %v1539, %v1541
      %v1543 = vrot.slane %v1343, 2
      %v1544 = vrot.slane %v1344, 2
      %v1545 = vsel %vm463, %v1543, %v1544
      %v1546 = vrot.slane %v1345, 2
      %v1547 = vsel %vm463, %v1544, %v1546
      %v1548 = vrot.slane %v1346, 2
      %v1549 = vrot.slane %v1347, 2
      %v1550 = vsel %vm463, %v1548, %v1549
      %v1551 = vrot.slane %v1348, 2
      %v1552 = vsel %vm463, %v1549, %v1551
      %v1553 = vrot.slane %v1349, 2
      %v1554 = vrot.slane %v1350, 2
      %v1555 = vsel %vm463, %v1553, %v1554
      %v1556 = vrot.slane %v1351, 2
      %v1557 = vsel %vm463, %v1554, %v1556
      %v1558 = vrot.slane %v1352, 2
      %v1559 = vrot.slane %v1353, 2
      %v1560 = vsel %vm463, %v1558, %v1559
      %v1561 = vrot.slane %v1354, 2
      %v1562 = vsel %vm463, %v1559, %v1561
      %v1563 = vrot.slane %v1355, 2
      %v1564 = vrot.slane %v1356, 2
      %v1565 = vsel %vm463, %v1563, %v1564
      %v1566 = vrot.slane %v1357, 2
      %v1567 = vsel %vm463, %v1564, %v1566
      %1568 = vrot.lane.b32.xlu0 %v1520, 8
      %v1569 = vpop.permute.xlu0 %1568
      %1570 = vrot.lane.b32.xlu0 %v1522, 8
      %v1571 = vpop.permute.xlu0 %1570
      %1572 = vrot.lane.b32.xlu0 %v1525, 8
      %v1573 = vpop.permute.xlu0 %1572
      %1574 = vrot.lane.b32.xlu0 %v1527, 8
      %v1575 = vpop.permute.xlu0 %1574
      %1576 = vrot.lane.b32.xlu0 %v1530, 8
      %v1577 = vpop.permute.xlu0 %1576
      %1578 = vrot.lane.b32.xlu0 %v1532, 8
      %v1579 = vpop.permute.xlu0 %1578
      %1580 = vrot.lane.b32.xlu0 %v1535, 8
      %v1581 = vpop.permute.xlu0 %1580
      %1582 = vrot.lane.b32.xlu0 %v1537, 8
      %v1583 = vpop.permute.xlu0 %1582
      %1584 = vrot.lane.b32.xlu0 %v1540, 8
      %v1585 = vpop.permute.xlu0 %1584
      %1586 = vrot.lane.b32.xlu0 %v1542, 8
      %v1587 = vpop.permute.xlu0 %1586
      %1588 = vrot.lane.b32.xlu0 %v1545, 8
      %v1589 = vpop.permute.xlu0 %1588
      %1590 = vrot.lane.b32.xlu0 %v1547, 8
      %v1591 = vpop.permute.xlu0 %1590
      %1592 = vrot.lane.b32.xlu0 %v1550, 8
      %v1593 = vpop.permute.xlu0 %1592
      %1594 = vrot.lane.b32.xlu0 %v1552, 8
      %v1595 = vpop.permute.xlu0 %1594
      %1596 = vrot.lane.b32.xlu0 %v1555, 8
      %v1597 = vpop.permute.xlu0 %1596
      %1598 = vrot.lane.b32.xlu0 %v1557, 8
      %v1599 = vpop.permute.xlu0 %1598
      %1600 = vrot.lane.b32.xlu0 %v1560, 8
      %v1601 = vpop.permute.xlu0 %1600
      %1602 = vrot.lane.b32.xlu0 %v1562, 8
      %v1603 = vpop.permute.xlu0 %1602
      %1604 = vrot.lane.b32.xlu0 %v1565, 8
      %v1605 = vpop.permute.xlu0 %1604
      %1606 = vrot.lane.b32.xlu0 %v1567, 8
      %v1607 = vpop.permute.xlu0 %1606
      %v1628 = vsel %vm574, %v1328, %v1459
      %v1629 = vsel %vm574, %v1329, %v1461
      %v1630 = vsel %vm574, %v1331, %v1463
      %v1631 = vsel %vm574, %v1332, %v1465
      %v1632 = vsel %vm574, %v1334, %v1467
      %v1633 = vsel %vm574, %v1335, %v1469
      %v1634 = vsel %vm574, %v1337, %v1471
      %v1635 = vsel %vm574, %v1338, %v1473
      %v1636 = vsel %vm574, %v1340, %v1475
      %v1637 = vsel %vm574, %v1341, %v1477
      %v1638 = vsel %vm574, %v1343, %v1479
      %v1639 = vsel %vm574, %v1344, %v1481
      %v1640 = vsel %vm574, %v1346, %v1483
      %v1641 = vsel %vm574, %v1347, %v1485
      %v1642 = vsel %vm574, %v1349, %v1487
      %v1643 = vsel %vm574, %v1350, %v1489
      %v1644 = vsel %vm574, %v1352, %v1491
      %v1645 = vsel %vm574, %v1353, %v1493
      %v1646 = vsel %vm574, %v1355, %v1495
      %v1647 = vsel %vm574, %v1356, %v1497
      %v1648 = vsel %vm249, %v1628, %v1569
      %v1649 = vsel %vm249, %v1629, %v1571
      %v1650 = vsel %vm249, %v1630, %v1573
      %v1651 = vsel %vm249, %v1631, %v1575
      %v1652 = vsel %vm249, %v1632, %v1577
      %v1653 = vsel %vm249, %v1633, %v1579
      %v1654 = vsel %vm249, %v1634, %v1581
      %v1655 = vsel %vm249, %v1635, %v1583
      %v1656 = vsel %vm249, %v1636, %v1585
      %v1657 = vsel %vm249, %v1637, %v1587
      %v1658 = vsel %vm249, %v1638, %v1589
      %v1659 = vsel %vm249, %v1639, %v1591
      %v1660 = vsel %vm249, %v1640, %v1593
      %v1661 = vsel %vm249, %v1641, %v1595
      %v1662 = vsel %vm249, %v1642, %v1597
      %v1663 = vsel %vm249, %v1643, %v1599
      %v1664 = vsel %vm249, %v1644, %v1601
      %v1665 = vsel %vm249, %v1645, %v1603
      %v1666 = vsel %vm249, %v1646, %v1605
      %v1667 = vsel %vm249, %v1647, %v1607
      %s1668 = scalar_lea.vmem %s1, 32
      %v1669 = vld [vmem:[%s1668] sm:$0xff]
      %v1670 = vld [vmem:[%s1668 + $0x8] sm:$0xf]
      %v1672 = vsel %vm617, %v1648, 0
      %v1675 = vsel %vm617, %v1649, 0
      %v1678 = vsel %vm617, %v1650, 0
      %v1681 = vsel %vm617, %v1651, 0
      %v1684 = vsel %vm617, %v1652, 0
      %v1687 = vsel %vm617, %v1653, 0
      %v1690 = vsel %vm617, %v1654, 0
      %v1693 = vsel %vm617, %v1655, 0
      %v1696 = vsel %vm617, %v1656, 0
      %v1699 = vsel %vm617, %v1657, 0
      %v1702 = vsel %vm617, %v1658, 0
      %v1705 = vsel %vm617, %v1659, 0
      %v1708 = vsel %vm617, %v1660, 0
      %v1711 = vsel %vm617, %v1661, 0
      %v1714 = vsel %vm617, %v1662, 0
      %v1717 = vsel %vm617, %v1663, 0
      %v1720 = vsel %vm617, %v1664, 0
      %v1723 = vsel %vm617, %v1665, 0
      %v1726 = vsel %vm617, %v1666, 0
      %v1729 = vsel %vm617, %v1667, 0
      %v1732 = vsel %vm678, %v1670, 0
      %1734 = vmatpush.msra.mxu0 0.0
      %1735 = vmatpush.msra.mxu0 0.0
      %1736 = vmatpush.msra.mxu0 0.0
      %1737 = vmatpush.msra.mxu0 0.0
      %1738 = vmatpush.msra.mxu0 0.0
      %1739 = vmatpush.msra.mxu0 0.0
      %1740 = vmatpush.msra.mxu0 0.0
      %1741 = vmatpush.msra.mxu0 0.0
      %1742 = vmatpush.msra.mxu0 0.0
      %1743 = vmatpush.msra.mxu0 0.0
      %1744 = vmatpush.msra.mxu0 0.0
      %1745 = vmatpush.msra.mxu0 0.0
      %1746 = vmatpush.msra.mxu0 0.0
      %1747 = vmatpush.msra.mxu0 0.0
      %1748 = vmatpush.msra.mxu0 %v1732
      %1749 = vmatpush.msra.mxu0 %v1669
      %1750 = vmatmul.f32.gmra.mxu0 %v1672
      %v1751 = vpop.f32.mrf.mxu0
      %v1752 = vadd.f32 0.0, %v1751
      %1753 = vmatmul.f32.gmra.mxu0 %v1675
      %v1754 = vpop.f32.mrf.mxu0
      %v1755 = vadd.f32 0.0, %v1754
      %1756 = vmatmul.f32.gmra.mxu0 %v1678
      %v1757 = vpop.f32.mrf.mxu0
      %v1758 = vadd.f32 0.0, %v1757
      %1759 = vmatmul.f32.gmra.mxu0 %v1681
      %v1760 = vpop.f32.mrf.mxu0
      %v1761 = vadd.f32 0.0, %v1760
      %1762 = vmatmul.f32.gmra.mxu0 %v1684
      %v1763 = vpop.f32.mrf.mxu0
      %v1764 = vadd.f32 0.0, %v1763
      %1765 = vmatmul.f32.gmra.mxu0 %v1687
      %v1766 = vpop.f32.mrf.mxu0
      %v1767 = vadd.f32 0.0, %v1766
      %1768 = vmatmul.f32.gmra.mxu0 %v1690
      %v1769 = vpop.f32.mrf.mxu0
      %v1770 = vadd.f32 0.0, %v1769
      %1771 = vmatmul.f32.gmra.mxu0 %v1693
      %v1772 = vpop.f32.mrf.mxu0
      %v1773 = vadd.f32 0.0, %v1772
      %1774 = vmatmul.f32.gmra.mxu0 %v1696
      %v1775 = vpop.f32.mrf.mxu0
      %v1776 = vadd.f32 0.0, %v1775
      %1777 = vmatmul.f32.gmra.mxu0 %v1699
      %v1778 = vpop.f32.mrf.mxu0
      %v1779 = vadd.f32 0.0, %v1778
      %1780 = vmatmul.f32.gmra.mxu0 %v1702
      %v1781 = vpop.f32.mrf.mxu0
      %v1782 = vadd.f32 0.0, %v1781
      %1783 = vmatmul.f32.gmra.mxu0 %v1705
      %v1784 = vpop.f32.mrf.mxu0
      %v1785 = vadd.f32 0.0, %v1784
      %1786 = vmatmul.f32.gmra.mxu0 %v1708
      %v1787 = vpop.f32.mrf.mxu0
      %v1788 = vadd.f32 0.0, %v1787
      %1789 = vmatmul.f32.gmra.mxu0 %v1711
      %v1790 = vpop.f32.mrf.mxu0
      %v1791 = vadd.f32 0.0, %v1790
      %1792 = vmatmul.f32.gmra.mxu0 %v1714
      %v1793 = vpop.f32.mrf.mxu0
      %v1794 = vadd.f32 0.0, %v1793
      %1795 = vmatmul.f32.gmra.mxu0 %v1717
      %v1796 = vpop.f32.mrf.mxu0
      %v1797 = vadd.f32 0.0, %v1796
      %1798 = vmatmul.f32.gmra.mxu0 %v1720
      %v1799 = vpop.f32.mrf.mxu0
      %v1800 = vadd.f32 0.0, %v1799
      %1801 = vmatmul.f32.gmra.mxu0 %v1723
      %v1802 = vpop.f32.mrf.mxu0
      %v1803 = vadd.f32 0.0, %v1802
      %1804 = vmatmul.f32.gmra.mxu0 %v1726
      %v1805 = vpop.f32.mrf.mxu0
      %v1806 = vadd.f32 0.0, %v1805
      %1807 = vmatmul.f32.gmra.mxu0 %v1729
      %v1808 = vpop.f32.mrf.mxu0
      %v1809 = vadd.f32 0.0, %v1808
      %1810 = vdwg.mxu0
      %v1811 = vadd.f32 %v1358, %v1752
      %v1812 = vadd.f32 %v1359, %v1755
      %v1813 = vadd.f32 %v1360, %v1758
      %v1814 = vadd.f32 %v1361, %v1761
      %v1815 = vadd.f32 %v1362, %v1764
      %v1816 = vadd.f32 %v1363, %v1767
      %v1817 = vadd.f32 %v1364, %v1770
      %v1818 = vadd.f32 %v1365, %v1773
      %v1819 = vadd.f32 %v1366, %v1776
      %v1820 = vadd.f32 %v1367, %v1779
      %v1821 = vadd.f32 %v1368, %v1782
      %v1822 = vadd.f32 %v1369, %v1785
      %v1823 = vadd.f32 %v1370, %v1788
      %v1824 = vadd.f32 %v1371, %v1791
      %v1825 = vadd.f32 %v1372, %v1794
      %v1826 = vadd.f32 %v1373, %v1797
      %v1827 = vadd.f32 %v1374, %v1800
      %v1828 = vadd.f32 %v1375, %v1803
      %v1829 = vadd.f32 %v1376, %v1806
      %v1830 = vadd.f32 %v1377, %v1809
      %1831 = vst.msk [vmem:[#allocation2] sm:$0xff] %vm249, %v1811
      %1832 = vst.msk [vmem:[#allocation2 + $0x8] sm:$0xff] %vm249, %v1812
      %1833 = vst.msk [vmem:[#allocation2 + $0x10] sm:$0xff] %vm249, %v1813
      %1834 = vst.msk [vmem:[#allocation2 + $0x18] sm:$0xff] %vm249, %v1814
      %1835 = vst.msk [vmem:[#allocation2 + $0x20] sm:$0xff] %vm249, %v1815
      %1836 = vst.msk [vmem:[#allocation2 + $0x28] sm:$0xff] %vm249, %v1816
      %1837 = vst.msk [vmem:[#allocation2 + $0x30] sm:$0xff] %vm249, %v1817
      %1838 = vst.msk [vmem:[#allocation2 + $0x38] sm:$0xff] %vm249, %v1818
      %1839 = vst.msk [vmem:[#allocation2 + $0x40] sm:$0xff] %vm249, %v1819
      %1840 = vst.msk [vmem:[#allocation2 + $0x48] sm:$0xff] %vm249, %v1820
      %1841 = vst.msk [vmem:[#allocation2 + $0x50] sm:$0xff] %vm249, %v1821
      %1842 = vst.msk [vmem:[#allocation2 + $0x58] sm:$0xff] %vm249, %v1822
      %1843 = vst.msk [vmem:[#allocation2 + $0x60] sm:$0xff] %vm249, %v1823
      %1844 = vst.msk [vmem:[#allocation2 + $0x68] sm:$0xff] %vm249, %v1824
      %1845 = vst.msk [vmem:[#allocation2 + $0x70] sm:$0xff] %vm249, %v1825
      %1846 = vst.msk [vmem:[#allocation2 + $0x78] sm:$0xff] %vm249, %v1826
      %1847 = vst.msk [vmem:[#allocation2 + $0x80] sm:$0xff] %vm249, %v1827
      %1848 = vst.msk [vmem:[#allocation2 + $0x88] sm:$0xff] %vm249, %v1828
      %1849 = vst.msk [vmem:[#allocation2 + $0x90] sm:$0xff] %vm249, %v1829
      %1850 = vst.msk [vmem:[#allocation2 + $0x98] sm:$0xff] %vm249, %v1830
      %v1851 = vld [vmem:[#allocation2] sm:$0xff]
      %v1852 = vld [vmem:[#allocation2 + $0x8] sm:$0xff]
      %v1853 = vld [vmem:[#allocation2 + $0x10] sm:$0xff]
      %v1854 = vld [vmem:[#allocation2 + $0x18] sm:$0xff]
      %v1855 = vld [vmem:[#allocation2 + $0x20] sm:$0xff]
      %v1856 = vld [vmem:[#allocation2 + $0x28] sm:$0xff]
      %v1857 = vld [vmem:[#allocation2 + $0x30] sm:$0xff]
      %v1858 = vld [vmem:[#allocation2 + $0x38] sm:$0xff]
      %v1859 = vld [vmem:[#allocation2 + $0x40] sm:$0xff]
      %v1860 = vld [vmem:[#allocation2 + $0x48] sm:$0xff]
      %v1861 = vld [vmem:[#allocation2 + $0x50] sm:$0xff]
      %v1862 = vld [vmem:[#allocation2 + $0x58] sm:$0xff]
      %v1863 = vld [vmem:[#allocation2 + $0x60] sm:$0xff]
      %v1864 = vld [vmem:[#allocation2 + $0x68] sm:$0xff]
      %v1865 = vld [vmem:[#allocation2 + $0x70] sm:$0xff]
      %v1866 = vld [vmem:[#allocation2 + $0x78] sm:$0xff]
      %v1867 = vld [vmem:[#allocation2 + $0x80] sm:$0xff]
      %v1868 = vld [vmem:[#allocation2 + $0x88] sm:$0xff]
      %v1869 = vld [vmem:[#allocation2 + $0x90] sm:$0xff]
      %v1870 = vld [vmem:[#allocation2 + $0x98] sm:$0xff]
      %v1871 = vld [vmem:[%s2] sm:$0x1]
      %v1872 = vperm.slane %v1871, 0
      %v1873 = vmul.f32 %v1851, %v1872
      %v1874 = vmul.f32 %v1852, %v1872
      %v1875 = vmul.f32 %v1853, %v1872
      %v1876 = vmul.f32 %v1854, %v1872
      %v1877 = vmul.f32 %v1855, %v1872
      %v1878 = vmul.f32 %v1856, %v1872
      %v1879 = vmul.f32 %v1857, %v1872
      %v1880 = vmul.f32 %v1858, %v1872
      %v1881 = vmul.f32 %v1859, %v1872
      %v1882 = vmul.f32 %v1860, %v1872
      %v1883 = vmul.f32 %v1861, %v1872
      %v1884 = vmul.f32 %v1862, %v1872
      %v1885 = vmul.f32 %v1863, %v1872
      %v1886 = vmul.f32 %v1864, %v1872
      %v1887 = vmul.f32 %v1865, %v1872
      %v1888 = vmul.f32 %v1866, %v1872
      %v1889 = vmul.f32 %v1867, %v1872
      %v1890 = vmul.f32 %v1868, %v1872
      %v1891 = vmul.f32 %v1869, %v1872
      %v1892 = vmul.f32 %v1870, %v1872
      %v1893 = vld [vmem:[%s2 + $0x1] sm:$0x1]
      %v1894 = vperm.slane %v1893, 0
      %v1895 = vadd.f32 %v1873, %v1894
      %v1896 = vadd.f32 %v1874, %v1894
      %v1897 = vadd.f32 %v1875, %v1894
      %v1898 = vadd.f32 %v1876, %v1894
      %v1899 = vadd.f32 %v1877, %v1894
      %v1900 = vadd.f32 %v1878, %v1894
      %v1901 = vadd.f32 %v1879, %v1894
      %v1902 = vadd.f32 %v1880, %v1894
      %v1903 = vadd.f32 %v1881, %v1894
      %v1904 = vadd.f32 %v1882, %v1894
      %v1905 = vadd.f32 %v1883, %v1894
      %v1906 = vadd.f32 %v1884, %v1894
      %v1907 = vadd.f32 %v1885, %v1894
      %v1908 = vadd.f32 %v1886, %v1894
      %v1909 = vadd.f32 %v1887, %v1894
      %v1910 = vadd.f32 %v1888, %v1894
      %v1911 = vadd.f32 %v1889, %v1894
      %v1912 = vadd.f32 %v1890, %v1894
      %v1913 = vadd.f32 %v1891, %v1894
      %v1914 = vadd.f32 %v1892, %v1894
      %v1915 = vmax.f32 %v1895, 0.0
      %v1916 = vmax.f32 %v1896, 0.0
      %v1917 = vmax.f32 %v1897, 0.0
      %v1918 = vmax.f32 %v1898, 0.0
      %v1919 = vmax.f32 %v1899, 0.0
      %v1920 = vmax.f32 %v1900, 0.0
      %v1921 = vmax.f32 %v1901, 0.0
      %v1922 = vmax.f32 %v1902, 0.0
      %v1923 = vmax.f32 %v1903, 0.0
      %v1924 = vmax.f32 %v1904, 0.0
      %v1925 = vmax.f32 %v1905, 0.0
      %v1926 = vmax.f32 %v1906, 0.0
      %v1927 = vmax.f32 %v1907, 0.0
      %v1928 = vmax.f32 %v1908, 0.0
      %v1929 = vmax.f32 %v1909, 0.0
      %v1930 = vmax.f32 %v1910, 0.0
      %v1931 = vmax.f32 %v1911, 0.0
      %v1932 = vmax.f32 %v1912, 0.0
      %v1933 = vmax.f32 %v1913, 0.0
      %v1934 = vmax.f32 %v1914, 0.0
      %1935 = vst.msk [vmem:[#allocation3 + $0x1] sm:$0xff] %vm249, %v1915
      %1936 = vst.msk [vmem:[#allocation3 + $0x9] sm:$0xff] %vm249, %v1916
      %1937 = vst.msk [vmem:[#allocation3 + $0x19] sm:$0xff] %vm249, %v1917
      %1938 = vst.msk [vmem:[#allocation3 + $0x21] sm:$0xff] %vm249, %v1918
      %1939 = vst.msk [vmem:[#allocation3 + $0x31] sm:$0xff] %vm249, %v1919
      %1940 = vst.msk [vmem:[#allocation3 + $0x39] sm:$0xff] %vm249, %v1920
      %1941 = vst.msk [vmem:[#allocation3 + $0x49] sm:$0xff] %vm249, %v1921
      %1942 = vst.msk [vmem:[#allocation3 + $0x51] sm:$0xff] %vm249, %v1922
      %1943 = vst.msk [vmem:[#allocation3 + $0x61] sm:$0xff] %vm249, %v1923
      %1944 = vst.msk [vmem:[#allocation3 + $0x69] sm:$0xff] %vm249, %v1924
      %1945 = vst.msk [vmem:[#allocation3 + $0x79] sm:$0xff] %vm249, %v1925
      %1946 = vst.msk [vmem:[#allocation3 + $0x81] sm:$0xff] %vm249, %v1926
      %1947 = vst.msk [vmem:[#allocation3 + $0x91] sm:$0xff] %vm249, %v1927
      %1948 = vst.msk [vmem:[#allocation3 + $0x99] sm:$0xff] %vm249, %v1928
      %1949 = vst.msk [vmem:[#allocation3 + $0xa9] sm:$0xff] %vm249, %v1929
      %1950 = vst.msk [vmem:[#allocation3 + $0xb1] sm:$0xff] %vm249, %v1930
      %1951 = vst.msk [vmem:[#allocation3 + $0xc1] sm:$0xff] %vm249, %v1931
      %1952 = vst.msk [vmem:[#allocation3 + $0xc9] sm:$0xff] %vm249, %v1932
      %1953 = vst.msk [vmem:[#allocation3 + $0xd9] sm:$0xff] %vm249, %v1933
      %1954 = vst.msk [vmem:[#allocation3 + $0xe1] sm:$0xff] %vm249, %v1934
      %vm1955 = vcmask 57344
      %1956 = vst.msk [vmem:[#allocation3] sm:$0x1] %vm1955, 0.0
      %1957 = vst.msk [vmem:[#allocation3 + $0x18] sm:$0x1] %vm1955, 0.0
      %1958 = vst.msk [vmem:[#allocation3 + $0x30] sm:$0x1] %vm1955, 0.0
      %1959 = vst.msk [vmem:[#allocation3 + $0x48] sm:$0x1] %vm1955, 0.0
      %1960 = vst.msk [vmem:[#allocation3 + $0x60] sm:$0x1] %vm1955, 0.0
      %1961 = vst.msk [vmem:[#allocation3 + $0x78] sm:$0x1] %vm1955, 0.0
      %1962 = vst.msk [vmem:[#allocation3 + $0x90] sm:$0x1] %vm1955, 0.0
      %1963 = vst.msk [vmem:[#allocation3 + $0xa8] sm:$0x1] %vm1955, 0.0
      %1964 = vst.msk [vmem:[#allocation3 + $0xc0] sm:$0x1] %vm1955, 0.0
      %1965 = vst.msk [vmem:[#allocation3 + $0xd8] sm:$0x1] %vm1955, 0.0
      %1966 = vst.msk [vmem:[#allocation3 + $0x11] sm:$0x1] %vm1955, 0.0
      %1967 = vst.msk [vmem:[#allocation3 + $0x29] sm:$0x1] %vm1955, 0.0
      %1968 = vst.msk [vmem:[#allocation3 + $0x41] sm:$0x1] %vm1955, 0.0
      %1969 = vst.msk [vmem:[#allocation3 + $0x59] sm:$0x1] %vm1955, 0.0
      %1970 = vst.msk [vmem:[#allocation3 + $0x71] sm:$0x1] %vm1955, 0.0
      %1971 = vst.msk [vmem:[#allocation3 + $0x89] sm:$0x1] %vm1955, 0.0
      %1972 = vst.msk [vmem:[#allocation3 + $0xa1] sm:$0x1] %vm1955, 0.0
      %1973 = vst.msk [vmem:[#allocation3 + $0xb9] sm:$0x1] %vm1955, 0.0
      %1974 = vst.msk [vmem:[#allocation3 + $0xd1] sm:$0x1] %vm1955, 0.0
      %1975 = vst.msk [vmem:[#allocation3 + $0xe9] sm:$0x1] %vm1955, 0.0
      %p1976 = scmp.eq.s32.totalorder %s21, 0
      // Predicated region
      $region41: #{inconv_forward.1} parent=39 // pred_check
        %p1977 = pneg %p1976
      $region42: #{inconv_forward.1} parent=39 // pred_check_branch
        %1979 = sbr.rel (%p1977) target = $region44
      $region43: #{inconv_forward.1} parent=39 // pred_region
        %1980 = vst.msk [vmem:[#allocation3] sm:$0xff] %vm249, 0.0
        %1981 = vst.msk [vmem:[#allocation3 + $0x8] sm:$0xff] %vm249, 0.0
        %vm1982 = vcmask 58368
        %1983 = vst.msk [vmem:[#allocation3 + $0x10] sm:$0x3] %vm1982, 0.0
      $region44: #{inconv_forward.1} parent=39 // pred_fallthru
        _
      %p1984 = scmp.eq.s32.totalorder %s21, 1
      // Predicated region
      $region45: #{inconv_forward.1} parent=39 // pred_check
        %p1985 = pneg %p1984
      $region46: #{inconv_forward.1} parent=39 // pred_check_branch
        %1987 = sbr.rel (%p1985) target = $region48
      $region47: #{inconv_forward.1} parent=39 // pred_region
        %s1988 = scalar_lea.vmem [#allocation3], 216
        %1989 = vst.msk [vmem:[%s1988] sm:$0xff] %vm249, 0.0
        %1990 = vst.msk [vmem:[%s1988 + $0x8] sm:$0xff] %vm249, 0.0
        %vm1991 = vcmask 58368
        %1992 = vst.msk [vmem:[%s1988 + $0x10] sm:$0x3] %vm1991, 0.0
      $region48: #{inconv_forward.1} parent=39 // pred_fallthru
        _
      %1993 = vst.msk [vmem:[#allocation4] sm:$0xff] %vm249, 0.0
      %1994 = vst.msk [vmem:[#allocation4 + $0x8] sm:$0xff] %vm249, 0.0
      %1995 = vst.msk [vmem:[#allocation4 + $0x10] sm:$0xff] %vm249, 0.0
      %1996 = vst.msk [vmem:[#allocation4 + $0x18] sm:$0xff] %vm249, 0.0
      %1997 = vst.msk [vmem:[#allocation4 + $0x20] sm:$0xff] %vm249, 0.0
      %1998 = vst.msk [vmem:[#allocation4 + $0x28] sm:$0xff] %vm249, 0.0
      %1999 = vst.msk [vmem:[#allocation4 + $0x30] sm:$0xff] %vm249, 0.0
      %2000 = vst.msk [vmem:[#allocation4 + $0x38] sm:$0xff] %vm249, 0.0
      %2001 = vst.msk [vmem:[#allocation4 + $0x40] sm:$0xff] %vm249, 0.0
      %2002 = vst.msk [vmem:[#allocation4 + $0x48] sm:$0xff] %vm249, 0.0
      %2003 = vst.msk [vmem:[#allocation4 + $0x50] sm:$0xff] %vm249, 0.0
      %2004 = vst.msk [vmem:[#allocation4 + $0x58] sm:$0xff] %vm249, 0.0
      %2005 = vst.msk [vmem:[#allocation4 + $0x60] sm:$0xff] %vm249, 0.0
      %2006 = vst.msk [vmem:[#allocation4 + $0x68] sm:$0xff] %vm249, 0.0
      %2007 = vst.msk [vmem:[#allocation4 + $0x70] sm:$0xff] %vm249, 0.0
      %2008 = vst.msk [vmem:[#allocation4 + $0x78] sm:$0xff] %vm249, 0.0
      %v2009 = vld [vmem:[#allocation3] sm:$0xff]
      %v2010 = vld [vmem:[#allocation3 + $0x8] sm:$0xff]
      %v2011 = vld [vmem:[#allocation3 + $0x10] sm:$0x3]
      %v2012 = vld [vmem:[#allocation3 + $0x18] sm:$0xff]
      %v2013 = vld [vmem:[#allocation3 + $0x20] sm:$0xff]
      %v2014 = vld [vmem:[#allocation3 + $0x28] sm:$0x3]
      %v2015 = vld [vmem:[#allocation3 + $0x30] sm:$0xff]
      %v2016 = vld [vmem:[#allocation3 + $0x38] sm:$0xff]
      %v2017 = vld [vmem:[#allocation3 + $0x40] sm:$0x3]
      %v2018 = vld [vmem:[#allocation3 + $0x48] sm:$0xff]
      %v2019 = vld [vmem:[#allocation3 + $0x50] sm:$0xff]
      %v2020 = vld [vmem:[#allocation3 + $0x58] sm:$0x3]
      %v2021 = vld [vmem:[#allocation3 + $0x60] sm:$0xff]
      %v2022 = vld [vmem:[#allocation3 + $0x68] sm:$0xff]
      %v2023 = vld [vmem:[#allocation3 + $0x70] sm:$0x3]
      %v2024 = vld [vmem:[#allocation3 + $0x78] sm:$0xff]
      %v2025 = vld [vmem:[#allocation3 + $0x80] sm:$0xff]
      %v2026 = vld [vmem:[#allocation3 + $0x88] sm:$0x3]
      %v2027 = vld [vmem:[#allocation3 + $0x90] sm:$0xff]
      %v2028 = vld [vmem:[#allocation3 + $0x98] sm:$0xff]
      %v2029 = vld [vmem:[#allocation3 + $0xa0] sm:$0x3]
      %v2030 = vld [vmem:[#allocation3 + $0xa8] sm:$0xff]
      %v2031 = vld [vmem:[#allocation3 + $0xb0] sm:$0xff]
      %v2032 = vld [vmem:[#allocation3 + $0xb8] sm:$0x3]
      %v2033 = vld [vmem:[#allocation4] sm:$0xff]
      %v2034 = vld [vmem:[#allocation4 + $0x8] sm:$0xff]
      %v2035 = vld [vmem:[#allocation4 + $0x10] sm:$0xff]
      %v2036 = vld [vmem:[#allocation4 + $0x18] sm:$0xff]
      %v2037 = vld [vmem:[#allocation4 + $0x20] sm:$0xff]
      %v2038 = vld [vmem:[#allocation4 + $0x28] sm:$0xff]
      %v2039 = vld [vmem:[#allocation4 + $0x30] sm:$0xff]
      %v2040 = vld [vmem:[#allocation4 + $0x38] sm:$0xff]
      %v2041 = vld [vmem:[#allocation4 + $0x40] sm:$0xff]
      %v2042 = vld [vmem:[#allocation4 + $0x48] sm:$0xff]
      %v2043 = vld [vmem:[#allocation4 + $0x50] sm:$0xff]
      %v2044 = vld [vmem:[#allocation4 + $0x58] sm:$0xff]
      %v2045 = vld [vmem:[#allocation4 + $0x60] sm:$0xff]
      %v2046 = vld [vmem:[#allocation4 + $0x68] sm:$0xff]
      %v2047 = vld [vmem:[#allocation4 + $0x70] sm:$0xff]
      %v2048 = vld [vmem:[#allocation4 + $0x78] sm:$0xff]
      %v2073 = vrot.slane %v2009, 1
      %v2074 = vrot.slane %v2010, 1
      %v2075 = vsel %vm352, %v2073, %v2074
      %v2076 = vrot.slane %v2011, 1
      %v2077 = vsel %vm352, %v2074, %v2076
      %v2078 = vrot.slane %v2012, 1
      %v2079 = vrot.slane %v2013, 1
      %v2080 = vsel %vm352, %v2078, %v2079
      %v2081 = vrot.slane %v2014, 1
      %v2082 = vsel %vm352, %v2079, %v2081
      %v2083 = vrot.slane %v2015, 1
      %v2084 = vrot.slane %v2016, 1
      %v2085 = vsel %vm352, %v2083, %v2084
      %v2086 = vrot.slane %v2017, 1
      %v2087 = vsel %vm352, %v2084, %v2086
      %v2088 = vrot.slane %v2018, 1
      %v2089 = vrot.slane %v2019, 1
      %v2090 = vsel %vm352, %v2088, %v2089
      %v2091 = vrot.slane %v2020, 1
      %v2092 = vsel %vm352, %v2089, %v2091
      %v2093 = vrot.slane %v2021, 1
      %v2094 = vrot.slane %v2022, 1
      %v2095 = vsel %vm352, %v2093, %v2094
      %v2096 = vrot.slane %v2023, 1
      %v2097 = vsel %vm352, %v2094, %v2096
      %v2098 = vrot.slane %v2024, 1
      %v2099 = vrot.slane %v2025, 1
      %v2100 = vsel %vm352, %v2098, %v2099
      %v2101 = vrot.slane %v2026, 1
      %v2102 = vsel %vm352, %v2099, %v2101
      %v2103 = vrot.slane %v2027, 1
      %v2104 = vrot.slane %v2028, 1
      %v2105 = vsel %vm352, %v2103, %v2104
      %v2106 = vrot.slane %v2029, 1
      %v2107 = vsel %vm352, %v2104, %v2106
      %v2108 = vrot.slane %v2030, 1
      %v2109 = vrot.slane %v2031, 1
      %v2110 = vsel %vm352, %v2108, %v2109
      %v2111 = vrot.slane %v2032, 1
      %v2112 = vsel %vm352, %v2109, %v2111
      %2113 = vrot.lane.b32.xlu0 %v2075, 8
      %v2114 = vpop.permute.xlu0 %2113
      %2115 = vrot.lane.b32.xlu0 %v2077, 8
      %v2116 = vpop.permute.xlu0 %2115
      %2117 = vrot.lane.b32.xlu0 %v2080, 8
      %v2118 = vpop.permute.xlu0 %2117
      %2119 = vrot.lane.b32.xlu0 %v2082, 8
      %v2120 = vpop.permute.xlu0 %2119
      %2121 = vrot.lane.b32.xlu0 %v2085, 8
      %v2122 = vpop.permute.xlu0 %2121
      %2123 = vrot.lane.b32.xlu0 %v2087, 8
      %v2124 = vpop.permute.xlu0 %2123
      %2125 = vrot.lane.b32.xlu0 %v2090, 8
      %v2126 = vpop.permute.xlu0 %2125
      %2127 = vrot.lane.b32.xlu0 %v2092, 8
      %v2128 = vpop.permute.xlu0 %2127
      %2129 = vrot.lane.b32.xlu0 %v2095, 8
      %v2130 = vpop.permute.xlu0 %2129
      %2131 = vrot.lane.b32.xlu0 %v2097, 8
      %v2132 = vpop.permute.xlu0 %2131
      %2133 = vrot.lane.b32.xlu0 %v2100, 8
      %v2134 = vpop.permute.xlu0 %2133
      %2135 = vrot.lane.b32.xlu0 %v2102, 8
      %v2136 = vpop.permute.xlu0 %2135
      %2137 = vrot.lane.b32.xlu0 %v2105, 8
      %v2138 = vpop.permute.xlu0 %2137
      %2139 = vrot.lane.b32.xlu0 %v2107, 8
      %v2140 = vpop.permute.xlu0 %2139
      %2141 = vrot.lane.b32.xlu0 %v2110, 8
      %v2142 = vpop.permute.xlu0 %2141
      %2143 = vrot.lane.b32.xlu0 %v2112, 8
      %v2144 = vpop.permute.xlu0 %2143
      %v2161 = vrot.slane %v2009, 2
      %v2162 = vrot.slane %v2010, 2
      %v2163 = vsel %vm463, %v2161, %v2162
      %v2164 = vrot.slane %v2011, 2
      %v2165 = vsel %vm463, %v2162, %v2164
      %v2166 = vrot.slane %v2012, 2
      %v2167 = vrot.slane %v2013, 2
      %v2168 = vsel %vm463, %v2166, %v2167
      %v2169 = vrot.slane %v2014, 2
      %v2170 = vsel %vm463, %v2167, %v2169
      %v2171 = vrot.slane %v2015, 2
      %v2172 = vrot.slane %v2016, 2
      %v2173 = vsel %vm463, %v2171, %v2172
      %v2174 = vrot.slane %v2017, 2
      %v2175 = vsel %vm463, %v2172, %v2174
      %v2176 = vrot.slane %v2018, 2
      %v2177 = vrot.slane %v2019, 2
      %v2178 = vsel %vm463, %v2176, %v2177
      %v2179 = vrot.slane %v2020, 2
      %v2180 = vsel %vm463, %v2177, %v2179
      %v2181 = vrot.slane %v2021, 2
      %v2182 = vrot.slane %v2022, 2
      %v2183 = vsel %vm463, %v2181, %v2182
      %v2184 = vrot.slane %v2023, 2
      %v2185 = vsel %vm463, %v2182, %v2184
      %v2186 = vrot.slane %v2024, 2
      %v2187 = vrot.slane %v2025, 2
      %v2188 = vsel %vm463, %v2186, %v2187
      %v2189 = vrot.slane %v2026, 2
      %v2190 = vsel %vm463, %v2187, %v2189
      %v2191 = vrot.slane %v2027, 2
      %v2192 = vrot.slane %v2028, 2
      %v2193 = vsel %vm463, %v2191, %v2192
      %v2194 = vrot.slane %v2029, 2
      %v2195 = vsel %vm463, %v2192, %v2194
      %v2196 = vrot.slane %v2030, 2
      %v2197 = vrot.slane %v2031, 2
      %v2198 = vsel %vm463, %v2196, %v2197
      %v2199 = vrot.slane %v2032, 2
      %v2200 = vsel %vm463, %v2197, %v2199
      %2201 = vrot.lane.b32.xlu0 %v2163, 16
      %v2202 = vpop.permute.xlu0 %2201
      %2203 = vrot.lane.b32.xlu0 %v2165, 16
      %v2204 = vpop.permute.xlu0 %2203
      %2205 = vrot.lane.b32.xlu0 %v2168, 16
      %v2206 = vpop.permute.xlu0 %2205
      %2207 = vrot.lane.b32.xlu0 %v2170, 16
      %v2208 = vpop.permute.xlu0 %2207
      %2209 = vrot.lane.b32.xlu0 %v2173, 16
      %v2210 = vpop.permute.xlu0 %2209
      %2211 = vrot.lane.b32.xlu0 %v2175, 16
      %v2212 = vpop.permute.xlu0 %2211
      %2213 = vrot.lane.b32.xlu0 %v2178, 16
      %v2214 = vpop.permute.xlu0 %2213
      %2215 = vrot.lane.b32.xlu0 %v2180, 16
      %v2216 = vpop.permute.xlu0 %2215
      %2217 = vrot.lane.b32.xlu0 %v2183, 16
      %v2218 = vpop.permute.xlu0 %2217
      %2219 = vrot.lane.b32.xlu0 %v2185, 16
      %v2220 = vpop.permute.xlu0 %2219
      %2221 = vrot.lane.b32.xlu0 %v2188, 16
      %v2222 = vpop.permute.xlu0 %2221
      %2223 = vrot.lane.b32.xlu0 %v2190, 16
      %v2224 = vpop.permute.xlu0 %2223
      %2225 = vrot.lane.b32.xlu0 %v2193, 16
      %v2226 = vpop.permute.xlu0 %2225
      %2227 = vrot.lane.b32.xlu0 %v2195, 16
      %v2228 = vpop.permute.xlu0 %2227
      %2229 = vrot.lane.b32.xlu0 %v2198, 16
      %v2230 = vpop.permute.xlu0 %2229
      %2231 = vrot.lane.b32.xlu0 %v2200, 16
      %v2232 = vpop.permute.xlu0 %2231
      %v2249 = vsel %vm249, %v2009, %v2114
      %v2250 = vsel %vm249, %v2010, %v2116
      %v2251 = vsel %vm249, %v2012, %v2118
      %v2252 = vsel %vm249, %v2013, %v2120
      %v2253 = vsel %vm249, %v2015, %v2122
      %v2254 = vsel %vm249, %v2016, %v2124
      %v2255 = vsel %vm249, %v2018, %v2126
      %v2256 = vsel %vm249, %v2019, %v2128
      %v2257 = vsel %vm249, %v2021, %v2130
      %v2258 = vsel %vm249, %v2022, %v2132
      %v2259 = vsel %vm249, %v2024, %v2134
      %v2260 = vsel %vm249, %v2025, %v2136
      %v2261 = vsel %vm249, %v2027, %v2138
      %v2262 = vsel %vm249, %v2028, %v2140
      %v2263 = vsel %vm249, %v2030, %v2142
      %v2264 = vsel %vm249, %v2031, %v2144
      %vm2265 = vcmask 130048
      %v2266 = vsel %vm2265, %v2249, %v2202
      %v2267 = vsel %vm2265, %v2250, %v2204
      %v2268 = vsel %vm2265, %v2251, %v2206
      %v2269 = vsel %vm2265, %v2252, %v2208
      %v2270 = vsel %vm2265, %v2253, %v2210
      %v2271 = vsel %vm2265, %v2254, %v2212
      %v2272 = vsel %vm2265, %v2255, %v2214
      %v2273 = vsel %vm2265, %v2256, %v2216
      %v2274 = vsel %vm2265, %v2257, %v2218
      %v2275 = vsel %vm2265, %v2258, %v2220
      %v2276 = vsel %vm2265, %v2259, %v2222
      %v2277 = vsel %vm2265, %v2260, %v2224
      %v2278 = vsel %vm2265, %v2261, %v2226
      %v2279 = vsel %vm2265, %v2262, %v2228
      %v2280 = vsel %vm2265, %v2263, %v2230
      %v2281 = vsel %vm2265, %v2264, %v2232
      %v2282 = vld [vmem:[%s3] sm:$0xff]
      %v2283 = vld [vmem:[%s3 + $0x8] sm:$0xff]
      %v2284 = vld [vmem:[%s3 + $0x10] sm:$0xff]
      %vm2285 = vcmask 195584
      %v2287 = vsel %vm2285, %v2266, 0
      %v2290 = vsel %vm2285, %v2267, 0
      %v2293 = vsel %vm2285, %v2268, 0
      %v2296 = vsel %vm2285, %v2269, 0
      %v2299 = vsel %vm2285, %v2270, 0
      %v2302 = vsel %vm2285, %v2271, 0
      %v2305 = vsel %vm2285, %v2272, 0
      %v2308 = vsel %vm2285, %v2273, 0
      %v2311 = vsel %vm2285, %v2274, 0
      %v2314 = vsel %vm2285, %v2275, 0
      %v2317 = vsel %vm2285, %v2276, 0
      %v2320 = vsel %vm2285, %v2277, 0
      %v2323 = vsel %vm2285, %v2278, 0
      %v2326 = vsel %vm2285, %v2279, 0
      %v2329 = vsel %vm2285, %v2280, 0
      %v2332 = vsel %vm2285, %v2281, 0
      %2334 = vmatpush.msra.mxu0 0.0
      %2335 = vmatpush.msra.mxu0 0.0
      %2336 = vmatpush.msra.mxu0 0.0
      %2337 = vmatpush.msra.mxu0 0.0
      %2338 = vmatpush.msra.mxu0 0.0
      %2339 = vmatpush.msra.mxu0 0.0
      %2340 = vmatpush.msra.mxu0 0.0
      %2341 = vmatpush.msra.mxu0 0.0
      %2342 = vmatpush.msra.mxu0 0.0
      %2343 = vmatpush.msra.mxu0 0.0
      %2344 = vmatpush.msra.mxu0 0.0
      %2345 = vmatpush.msra.mxu0 0.0
      %2346 = vmatpush.msra.mxu0 0.0
      %2347 = vmatpush.msra.mxu0 %v2284
      %2348 = vmatpush.msra.mxu0 %v2283
      %2349 = vmatpush.msra.mxu0 %v2282
      %2350 = vmatmul.f32.gmra.mxu0 %v2287
      %v2351 = vpop.f32.mrf.mxu0
      %v2352 = vadd.f32 0.0, %v2351
      %2353 = vmatmul.f32.gmra.mxu0 %v2290
      %v2354 = vpop.f32.mrf.mxu0
      %v2355 = vadd.f32 0.0, %v2354
      %2356 = vmatmul.f32.gmra.mxu0 %v2293
      %v2357 = vpop.f32.mrf.mxu0
      %v2358 = vadd.f32 0.0, %v2357
      %2359 = vmatmul.f32.gmra.mxu0 %v2296
      %v2360 = vpop.f32.mrf.mxu0
      %v2361 = vadd.f32 0.0, %v2360
      %2362 = vmatmul.f32.gmra.mxu0 %v2299
      %v2363 = vpop.f32.mrf.mxu0
      %v2364 = vadd.f32 0.0, %v2363
      %2365 = vmatmul.f32.gmra.mxu0 %v2302
      %v2366 = vpop.f32.mrf.mxu0
      %v2367 = vadd.f32 0.0, %v2366
      %2368 = vmatmul.f32.gmra.mxu0 %v2305
      %v2369 = vpop.f32.mrf.mxu0
      %v2370 = vadd.f32 0.0, %v2369
      %2371 = vmatmul.f32.gmra.mxu0 %v2308
      %v2372 = vpop.f32.mrf.mxu0
      %v2373 = vadd.f32 0.0, %v2372
      %2374 = vmatmul.f32.gmra.mxu0 %v2311
      %v2375 = vpop.f32.mrf.mxu0
      %v2376 = vadd.f32 0.0, %v2375
      %2377 = vmatmul.f32.gmra.mxu0 %v2314
      %v2378 = vpop.f32.mrf.mxu0
      %v2379 = vadd.f32 0.0, %v2378
      %2380 = vmatmul.f32.gmra.mxu0 %v2317
      %v2381 = vpop.f32.mrf.mxu0
      %v2382 = vadd.f32 0.0, %v2381
      %2383 = vmatmul.f32.gmra.mxu0 %v2320
      %v2384 = vpop.f32.mrf.mxu0
      %v2385 = vadd.f32 0.0, %v2384
      %2386 = vmatmul.f32.gmra.mxu0 %v2323
      %v2387 = vpop.f32.mrf.mxu0
      %v2388 = vadd.f32 0.0, %v2387
      %2389 = vmatmul.f32.gmra.mxu0 %v2326
      %v2390 = vpop.f32.mrf.mxu0
      %v2391 = vadd.f32 0.0, %v2390
      %2392 = vmatmul.f32.gmra.mxu0 %v2329
      %v2393 = vpop.f32.mrf.mxu0
      %v2394 = vadd.f32 0.0, %v2393
      %2395 = vmatmul.f32.gmra.mxu0 %v2332
      %v2396 = vpop.f32.mrf.mxu0
      %v2397 = vadd.f32 0.0, %v2396
      %2398 = vdwg.mxu0
      %v2399 = vadd.f32 %v2033, %v2352
      %v2400 = vadd.f32 %v2034, %v2355
      %v2401 = vadd.f32 %v2035, %v2358
      %v2402 = vadd.f32 %v2036, %v2361
      %v2403 = vadd.f32 %v2037, %v2364
      %v2404 = vadd.f32 %v2038, %v2367
      %v2405 = vadd.f32 %v2039, %v2370
      %v2406 = vadd.f32 %v2040, %v2373
      %v2407 = vadd.f32 %v2041, %v2376
      %v2408 = vadd.f32 %v2042, %v2379
      %v2409 = vadd.f32 %v2043, %v2382
      %v2410 = vadd.f32 %v2044, %v2385
      %v2411 = vadd.f32 %v2045, %v2388
      %v2412 = vadd.f32 %v2046, %v2391
      %v2413 = vadd.f32 %v2047, %v2394
      %v2414 = vadd.f32 %v2048, %v2397
      %2415 = vst.msk [vmem:[#allocation4] sm:$0xff] %vm249, %v2399
      %2416 = vst.msk [vmem:[#allocation4 + $0x8] sm:$0xff] %vm249, %v2400
      %2417 = vst.msk [vmem:[#allocation4 + $0x10] sm:$0xff] %vm249, %v2401
      %2418 = vst.msk [vmem:[#allocation4 + $0x18] sm:$0xff] %vm249, %v2402
      %2419 = vst.msk [vmem:[#allocation4 + $0x20] sm:$0xff] %vm249, %v2403
      %2420 = vst.msk [vmem:[#allocation4 + $0x28] sm:$0xff] %vm249, %v2404
      %2421 = vst.msk [vmem:[#allocation4 + $0x30] sm:$0xff] %vm249, %v2405
      %2422 = vst.msk [vmem:[#allocation4 + $0x38] sm:$0xff] %vm249, %v2406
      %2423 = vst.msk [vmem:[#allocation4 + $0x40] sm:$0xff] %vm249, %v2407
      %2424 = vst.msk [vmem:[#allocation4 + $0x48] sm:$0xff] %vm249, %v2408
      %2425 = vst.msk [vmem:[#allocation4 + $0x50] sm:$0xff] %vm249, %v2409
      %2426 = vst.msk [vmem:[#allocation4 + $0x58] sm:$0xff] %vm249, %v2410
      %2427 = vst.msk [vmem:[#allocation4 + $0x60] sm:$0xff] %vm249, %v2411
      %2428 = vst.msk [vmem:[#allocation4 + $0x68] sm:$0xff] %vm249, %v2412
      %2429 = vst.msk [vmem:[#allocation4 + $0x70] sm:$0xff] %vm249, %v2413
      %2430 = vst.msk [vmem:[#allocation4 + $0x78] sm:$0xff] %vm249, %v2414
      %s2431 = scalar_lea.vmem [#allocation3], 24
      %v2432 = vld [vmem:[%s2431] sm:$0xff]
      %v2433 = vld [vmem:[%s2431 + $0x8] sm:$0xff]
      %v2434 = vld [vmem:[%s2431 + $0x10] sm:$0x3]
      %v2435 = vld [vmem:[%s2431 + $0x18] sm:$0xff]
      %v2436 = vld [vmem:[%s2431 + $0x20] sm:$0xff]
      %v2437 = vld [vmem:[%s2431 + $0x28] sm:$0x3]
      %v2438 = vld [vmem:[%s2431 + $0x30] sm:$0xff]
      %v2439 = vld [vmem:[%s2431 + $0x38] sm:$0xff]
      %v2440 = vld [vmem:[%s2431 + $0x40] sm:$0x3]
      %v2441 = vld [vmem:[%s2431 + $0x48] sm:$0xff]
      %v2442 = vld [vmem:[%s2431 + $0x50] sm:$0xff]
      %v2443 = vld [vmem:[%s2431 + $0x58] sm:$0x3]
      %v2444 = vld [vmem:[%s2431 + $0x60] sm:$0xff]
      %v2445 = vld [vmem:[%s2431 + $0x68] sm:$0xff]
      %v2446 = vld [vmem:[%s2431 + $0x70] sm:$0x3]
      %v2447 = vld [vmem:[%s2431 + $0x78] sm:$0xff]
      %v2448 = vld [vmem:[%s2431 + $0x80] sm:$0xff]
      %v2449 = vld [vmem:[%s2431 + $0x88] sm:$0x3]
      %v2450 = vld [vmem:[%s2431 + $0x90] sm:$0xff]
      %v2451 = vld [vmem:[%s2431 + $0x98] sm:$0xff]
      %v2452 = vld [vmem:[%s2431 + $0xa0] sm:$0x3]
      %v2453 = vld [vmem:[%s2431 + $0xa8] sm:$0xff]
      %v2454 = vld [vmem:[%s2431 + $0xb0] sm:$0xff]
      %v2455 = vld [vmem:[%s2431 + $0xb8] sm:$0x3]
      %v2456 = vld [vmem:[#allocation4] sm:$0xff]
      %v2457 = vld [vmem:[#allocation4 + $0x8] sm:$0xff]
      %v2458 = vld [vmem:[#allocation4 + $0x10] sm:$0xff]
      %v2459 = vld [vmem:[#allocation4 + $0x18] sm:$0xff]
      %v2460 = vld [vmem:[#allocation4 + $0x20] sm:$0xff]
      %v2461 = vld [vmem:[#allocation4 + $0x28] sm:$0xff]
      %v2462 = vld [vmem:[#allocation4 + $0x30] sm:$0xff]
      %v2463 = vld [vmem:[#allocation4 + $0x38] sm:$0xff]
      %v2464 = vld [vmem:[#allocation4 + $0x40] sm:$0xff]
      %v2465 = vld [vmem:[#allocation4 + $0x48] sm:$0xff]
      %v2466 = vld [vmem:[#allocation4 + $0x50] sm:$0xff]
      %v2467 = vld [vmem:[#allocation4 + $0x58] sm:$0xff]
      %v2468 = vld [vmem:[#allocation4 + $0x60] sm:$0xff]
      %v2469 = vld [vmem:[#allocation4 + $0x68] sm:$0xff]
      %v2470 = vld [vmem:[#allocation4 + $0x70] sm:$0xff]
      %v2471 = vld [vmem:[#allocation4 + $0x78] sm:$0xff]
      %v2496 = vrot.slane %v2432, 1
      %v2497 = vrot.slane %v2433, 1
      %v2498 = vsel %vm352, %v2496, %v2497
      %v2499 = vrot.slane %v2434, 1
      %v2500 = vsel %vm352, %v2497, %v2499
      %v2501 = vrot.slane %v2435, 1
      %v2502 = vrot.slane %v2436, 1
      %v2503 = vsel %vm352, %v2501, %v2502
      %v2504 = vrot.slane %v2437, 1
      %v2505 = vsel %vm352, %v2502, %v2504
      %v2506 = vrot.slane %v2438, 1
      %v2507 = vrot.slane %v2439, 1
      %v2508 = vsel %vm352, %v2506, %v2507
      %v2509 = vrot.slane %v2440, 1
      %v2510 = vsel %vm352, %v2507, %v2509
      %v2511 = vrot.slane %v2441, 1
      %v2512 = vrot.slane %v2442, 1
      %v2513 = vsel %vm352, %v2511, %v2512
      %v2514 = vrot.slane %v2443, 1
      %v2515 = vsel %vm352, %v2512, %v2514
      %v2516 = vrot.slane %v2444, 1
      %v2517 = vrot.slane %v2445, 1
      %v2518 = vsel %vm352, %v2516, %v2517
      %v2519 = vrot.slane %v2446, 1
      %v2520 = vsel %vm352, %v2517, %v2519
      %v2521 = vrot.slane %v2447, 1
      %v2522 = vrot.slane %v2448, 1
      %v2523 = vsel %vm352, %v2521, %v2522
      %v2524 = vrot.slane %v2449, 1
      %v2525 = vsel %vm352, %v2522, %v2524
      %v2526 = vrot.slane %v2450, 1
      %v2527 = vrot.slane %v2451, 1
      %v2528 = vsel %vm352, %v2526, %v2527
      %v2529 = vrot.slane %v2452, 1
      %v2530 = vsel %vm352, %v2527, %v2529
      %v2531 = vrot.slane %v2453, 1
      %v2532 = vrot.slane %v2454, 1
      %v2533 = vsel %vm352, %v2531, %v2532
      %v2534 = vrot.slane %v2455, 1
      %v2535 = vsel %vm352, %v2532, %v2534
      %2536 = vrot.lane.b32.xlu0 %v2498, 8
      %v2537 = vpop.permute.xlu0 %2536
      %2538 = vrot.lane.b32.xlu0 %v2500, 8
      %v2539 = vpop.permute.xlu0 %2538
      %2540 = vrot.lane.b32.xlu0 %v2503, 8
      %v2541 = vpop.permute.xlu0 %2540
      %2542 = vrot.lane.b32.xlu0 %v2505, 8
      %v2543 = vpop.permute.xlu0 %2542
      %2544 = vrot.lane.b32.xlu0 %v2508, 8
      %v2545 = vpop.permute.xlu0 %2544
      %2546 = vrot.lane.b32.xlu0 %v2510, 8
      %v2547 = vpop.permute.xlu0 %2546
      %2548 = vrot.lane.b32.xlu0 %v2513, 8
      %v2549 = vpop.permute.xlu0 %2548
      %2550 = vrot.lane.b32.xlu0 %v2515, 8
      %v2551 = vpop.permute.xlu0 %2550
      %2552 = vrot.lane.b32.xlu0 %v2518, 8
      %v2553 = vpop.permute.xlu0 %2552
      %2554 = vrot.lane.b32.xlu0 %v2520, 8
      %v2555 = vpop.permute.xlu0 %2554
      %2556 = vrot.lane.b32.xlu0 %v2523, 8
      %v2557 = vpop.permute.xlu0 %2556
      %2558 = vrot.lane.b32.xlu0 %v2525, 8
      %v2559 = vpop.permute.xlu0 %2558
      %2560 = vrot.lane.b32.xlu0 %v2528, 8
      %v2561 = vpop.permute.xlu0 %2560
      %2562 = vrot.lane.b32.xlu0 %v2530, 8
      %v2563 = vpop.permute.xlu0 %2562
      %2564 = vrot.lane.b32.xlu0 %v2533, 8
      %v2565 = vpop.permute.xlu0 %2564
      %2566 = vrot.lane.b32.xlu0 %v2535, 8
      %v2567 = vpop.permute.xlu0 %2566
      %v2584 = vrot.slane %v2432, 2
      %v2585 = vrot.slane %v2433, 2
      %v2586 = vsel %vm463, %v2584, %v2585
      %v2587 = vrot.slane %v2434, 2
      %v2588 = vsel %vm463, %v2585, %v2587
      %v2589 = vrot.slane %v2435, 2
      %v2590 = vrot.slane %v2436, 2
      %v2591 = vsel %vm463, %v2589, %v2590
      %v2592 = vrot.slane %v2437, 2
      %v2593 = vsel %vm463, %v2590, %v2592
      %v2594 = vrot.slane %v2438, 2
      %v2595 = vrot.slane %v2439, 2
      %v2596 = vsel %vm463, %v2594, %v2595
      %v2597 = vrot.slane %v2440, 2
      %v2598 = vsel %vm463, %v2595, %v2597
      %v2599 = vrot.slane %v2441, 2
      %v2600 = vrot.slane %v2442, 2
      %v2601 = vsel %vm463, %v2599, %v2600
      %v2602 = vrot.slane %v2443, 2
      %v2603 = vsel %vm463, %v2600, %v2602
      %v2604 = vrot.slane %v2444, 2
      %v2605 = vrot.slane %v2445, 2
      %v2606 = vsel %vm463, %v2604, %v2605
      %v2607 = vrot.slane %v2446, 2
      %v2608 = vsel %vm463, %v2605, %v2607
      %v2609 = vrot.slane %v2447, 2
      %v2610 = vrot.slane %v2448, 2
      %v2611 = vsel %vm463, %v2609, %v2610
      %v2612 = vrot.slane %v2449, 2
      %v2613 = vsel %vm463, %v2610, %v2612
      %v2614 = vrot.slane %v2450, 2
      %v2615 = vrot.slane %v2451, 2
      %v2616 = vsel %vm463, %v2614, %v2615
      %v2617 = vrot.slane %v2452, 2
      %v2618 = vsel %vm463, %v2615, %v2617
      %v2619 = vrot.slane %v2453, 2
      %v2620 = vrot.slane %v2454, 2
      %v2621 = vsel %vm463, %v2619, %v2620
      %v2622 = vrot.slane %v2455, 2
      %v2623 = vsel %vm463, %v2620, %v2622
      %2624 = vrot.lane.b32.xlu0 %v2586, 16
      %v2625 = vpop.permute.xlu0 %2624
      %2626 = vrot.lane.b32.xlu0 %v2588, 16
      %v2627 = vpop.permute.xlu0 %2626
      %2628 = vrot.lane.b32.xlu0 %v2591, 16
      %v2629 = vpop.permute.xlu0 %2628
      %2630 = vrot.lane.b32.xlu0 %v2593, 16
      %v2631 = vpop.permute.xlu0 %2630
      %2632 = vrot.lane.b32.xlu0 %v2596, 16
      %v2633 = vpop.permute.xlu0 %2632
      %2634 = vrot.lane.b32.xlu0 %v2598, 16
      %v2635 = vpop.permute.xlu0 %2634
      %2636 = vrot.lane.b32.xlu0 %v2601, 16
      %v2637 = vpop.permute.xlu0 %2636
      %2638 = vrot.lane.b32.xlu0 %v2603, 16
      %v2639 = vpop.permute.xlu0 %2638
      %2640 = vrot.lane.b32.xlu0 %v2606, 16
      %v2641 = vpop.permute.xlu0 %2640
      %2642 = vrot.lane.b32.xlu0 %v2608, 16
      %v2643 = vpop.permute.xlu0 %2642
      %2644 = vrot.lane.b32.xlu0 %v2611, 16
      %v2645 = vpop.permute.xlu0 %2644
      %2646 = vrot.lane.b32.xlu0 %v2613, 16
      %v2647 = vpop.permute.xlu0 %2646
      %2648 = vrot.lane.b32.xlu0 %v2616, 16
      %v2649 = vpop.permute.xlu0 %2648
      %2650 = vrot.lane.b32.xlu0 %v2618, 16
      %v2651 = vpop.permute.xlu0 %2650
      %2652 = vrot.lane.b32.xlu0 %v2621, 16
      %v2653 = vpop.permute.xlu0 %2652
      %2654 = vrot.lane.b32.xlu0 %v2623, 16
      %v2655 = vpop.permute.xlu0 %2654
      %v2672 = vsel %vm249, %v2432, %v2537
      %v2673 = vsel %vm249, %v2433, %v2539
      %v2674 = vsel %vm249, %v2435, %v2541
      %v2675 = vsel %vm249, %v2436, %v2543
      %v2676 = vsel %vm249, %v2438, %v2545
      %v2677 = vsel %vm249, %v2439, %v2547
      %v2678 = vsel %vm249, %v2441, %v2549
      %v2679 = vsel %vm249, %v2442, %v2551
      %v2680 = vsel %vm249, %v2444, %v2553
      %v2681 = vsel %vm249, %v2445, %v2555
      %v2682 = vsel %vm249, %v2447, %v2557
      %v2683 = vsel %vm249, %v2448, %v2559
      %v2684 = vsel %vm249, %v2450, %v2561
      %v2685 = vsel %vm249, %v2451, %v2563
      %v2686 = vsel %vm249, %v2453, %v2565
      %v2687 = vsel %vm249, %v2454, %v2567
      %v2688 = vsel %vm2265, %v2672, %v2625
      %v2689 = vsel %vm2265, %v2673, %v2627
      %v2690 = vsel %vm2265, %v2674, %v2629
      %v2691 = vsel %vm2265, %v2675, %v2631
      %v2692 = vsel %vm2265, %v2676, %v2633
      %v2693 = vsel %vm2265, %v2677, %v2635
      %v2694 = vsel %vm2265, %v2678, %v2637
      %v2695 = vsel %vm2265, %v2679, %v2639
      %v2696 = vsel %vm2265, %v2680, %v2641
      %v2697 = vsel %vm2265, %v2681, %v2643
      %v2698 = vsel %vm2265, %v2682, %v2645
      %v2699 = vsel %vm2265, %v2683, %v2647
      %v2700 = vsel %vm2265, %v2684, %v2649
      %v2701 = vsel %vm2265, %v2685, %v2651
      %v2702 = vsel %vm2265, %v2686, %v2653
      %v2703 = vsel %vm2265, %v2687, %v2655
      %s2704 = scalar_lea.vmem %s3, 24
      %v2705 = vld [vmem:[%s2704] sm:$0xff]
      %v2706 = vld [vmem:[%s2704 + $0x8] sm:$0xff]
      %v2707 = vld [vmem:[%s2704 + $0x10] sm:$0xff]
      %v2709 = vsel %vm2285, %v2688, 0
      %v2712 = vsel %vm2285, %v2689, 0
      %v2715 = vsel %vm2285, %v2690, 0
      %v2718 = vsel %vm2285, %v2691, 0
      %v2721 = vsel %vm2285, %v2692, 0
      %v2724 = vsel %vm2285, %v2693, 0
      %v2727 = vsel %vm2285, %v2694, 0
      %v2730 = vsel %vm2285, %v2695, 0
      %v2733 = vsel %vm2285, %v2696, 0
      %v2736 = vsel %vm2285, %v2697, 0
      %v2739 = vsel %vm2285, %v2698, 0
      %v2742 = vsel %vm2285, %v2699, 0
      %v2745 = vsel %vm2285, %v2700, 0
      %v2748 = vsel %vm2285, %v2701, 0
      %v2751 = vsel %vm2285, %v2702, 0
      %v2754 = vsel %vm2285, %v2703, 0
      %2756 = vmatpush.msra.mxu0 0.0
      %2757 = vmatpush.msra.mxu0 0.0
      %2758 = vmatpush.msra.mxu0 0.0
      %2759 = vmatpush.msra.mxu0 0.0
      %2760 = vmatpush.msra.mxu0 0.0
      %2761 = vmatpush.msra.mxu0 0.0
      %2762 = vmatpush.msra.mxu0 0.0
      %2763 = vmatpush.msra.mxu0 0.0
      %2764 = vmatpush.msra.mxu0 0.0
      %2765 = vmatpush.msra.mxu0 0.0
      %2766 = vmatpush.msra.mxu0 0.0
      %2767 = vmatpush.msra.mxu0 0.0
      %2768 = vmatpush.msra.mxu0 0.0
      %2769 = vmatpush.msra.mxu0 %v2707
      %2770 = vmatpush.msra.mxu0 %v2706
      %2771 = vmatpush.msra.mxu0 %v2705
      %2772 = vmatmul.f32.gmra.mxu0 %v2709
      %v2773 = vpop.f32.mrf.mxu0
      %v2774 = vadd.f32 0.0, %v2773
      %2775 = vmatmul.f32.gmra.mxu0 %v2712
      %v2776 = vpop.f32.mrf.mxu0
      %v2777 = vadd.f32 0.0, %v2776
      %2778 = vmatmul.f32.gmra.mxu0 %v2715
      %v2779 = vpop.f32.mrf.mxu0
      %v2780 = vadd.f32 0.0, %v2779
      %2781 = vmatmul.f32.gmra.mxu0 %v2718
      %v2782 = vpop.f32.mrf.mxu0
      %v2783 = vadd.f32 0.0, %v2782
      %2784 = vmatmul.f32.gmra.mxu0 %v2721
      %v2785 = vpop.f32.mrf.mxu0
      %v2786 = vadd.f32 0.0, %v2785
      %2787 = vmatmul.f32.gmra.mxu0 %v2724
      %v2788 = vpop.f32.mrf.mxu0
      %v2789 = vadd.f32 0.0, %v2788
      %2790 = vmatmul.f32.gmra.mxu0 %v2727
      %v2791 = vpop.f32.mrf.mxu0
      %v2792 = vadd.f32 0.0, %v2791
      %2793 = vmatmul.f32.gmra.mxu0 %v2730
      %v2794 = vpop.f32.mrf.mxu0
      %v2795 = vadd.f32 0.0, %v2794
      %2796 = vmatmul.f32.gmra.mxu0 %v2733
      %v2797 = vpop.f32.mrf.mxu0
      %v2798 = vadd.f32 0.0, %v2797
      %2799 = vmatmul.f32.gmra.mxu0 %v2736
      %v2800 = vpop.f32.mrf.mxu0
      %v2801 = vadd.f32 0.0, %v2800
      %2802 = vmatmul.f32.gmra.mxu0 %v2739
      %v2803 = vpop.f32.mrf.mxu0
      %v2804 = vadd.f32 0.0, %v2803
      %2805 = vmatmul.f32.gmra.mxu0 %v2742
      %v2806 = vpop.f32.mrf.mxu0
      %v2807 = vadd.f32 0.0, %v2806
      %2808 = vmatmul.f32.gmra.mxu0 %v2745
      %v2809 = vpop.f32.mrf.mxu0
      %v2810 = vadd.f32 0.0, %v2809
      %2811 = vmatmul.f32.gmra.mxu0 %v2748
      %v2812 = vpop.f32.mrf.mxu0
      %v2813 = vadd.f32 0.0, %v2812
      %2814 = vmatmul.f32.gmra.mxu0 %v2751
      %v2815 = vpop.f32.mrf.mxu0
      %v2816 = vadd.f32 0.0, %v2815
      %2817 = vmatmul.f32.gmra.mxu0 %v2754
      %v2818 = vpop.f32.mrf.mxu0
      %v2819 = vadd.f32 0.0, %v2818
      %2820 = vdwg.mxu0
      %v2821 = vadd.f32 %v2456, %v2774
      %v2822 = vadd.f32 %v2457, %v2777
      %v2823 = vadd.f32 %v2458, %v2780
      %v2824 = vadd.f32 %v2459, %v2783
      %v2825 = vadd.f32 %v2460, %v2786
      %v2826 = vadd.f32 %v2461, %v2789
      %v2827 = vadd.f32 %v2462, %v2792
      %v2828 = vadd.f32 %v2463, %v2795
      %v2829 = vadd.f32 %v2464, %v2798
      %v2830 = vadd.f32 %v2465, %v2801
      %v2831 = vadd.f32 %v2466, %v2804
      %v2832 = vadd.f32 %v2467, %v2807
      %v2833 = vadd.f32 %v2468, %v2810
      %v2834 = vadd.f32 %v2469, %v2813
      %v2835 = vadd.f32 %v2470, %v2816
      %v2836 = vadd.f32 %v2471, %v2819
      %2837 = vst.msk [vmem:[#allocation4] sm:$0xff] %vm249, %v2821
      %2838 = vst.msk [vmem:[#allocation4 + $0x8] sm:$0xff] %vm249, %v2822
      %2839 = vst.msk [vmem:[#allocation4 + $0x10] sm:$0xff] %vm249, %v2823
      %2840 = vst.msk [vmem:[#allocation4 + $0x18] sm:$0xff] %vm249, %v2824
      %2841 = vst.msk [vmem:[#allocation4 + $0x20] sm:$0xff] %vm249, %v2825
      %2842 = vst.msk [vmem:[#allocation4 + $0x28] sm:$0xff] %vm249, %v2826
      %2843 = vst.msk [vmem:[#allocation4 + $0x30] sm:$0xff] %vm249, %v2827
      %2844 = vst.msk [vmem:[#allocation4 + $0x38] sm:$0xff] %vm249, %v2828
      %2845 = vst.msk [vmem:[#allocation4 + $0x40] sm:$0xff] %vm249, %v2829
      %2846 = vst.msk [vmem:[#allocation4 + $0x48] sm:$0xff] %vm249, %v2830
      %2847 = vst.msk [vmem:[#allocation4 + $0x50] sm:$0xff] %vm249, %v2831
      %2848 = vst.msk [vmem:[#allocation4 + $0x58] sm:$0xff] %vm249, %v2832
      %2849 = vst.msk [vmem:[#allocation4 + $0x60] sm:$0xff] %vm249, %v2833
      %2850 = vst.msk [vmem:[#allocation4 + $0x68] sm:$0xff] %vm249, %v2834
      %2851 = vst.msk [vmem:[#allocation4 + $0x70] sm:$0xff] %vm249, %v2835
      %2852 = vst.msk [vmem:[#allocation4 + $0x78] sm:$0xff] %vm249, %v2836
      %s2853 = scalar_lea.vmem [#allocation3], 48
      %v2854 = vld [vmem:[%s2853] sm:$0xff]
      %v2855 = vld [vmem:[%s2853 + $0x8] sm:$0xff]
      %v2856 = vld [vmem:[%s2853 + $0x10] sm:$0x3]
      %v2857 = vld [vmem:[%s2853 + $0x18] sm:$0xff]
      %v2858 = vld [vmem:[%s2853 + $0x20] sm:$0xff]
      %v2859 = vld [vmem:[%s2853 + $0x28] sm:$0x3]
      %v2860 = vld [vmem:[%s2853 + $0x30] sm:$0xff]
      %v2861 = vld [vmem:[%s2853 + $0x38] sm:$0xff]
      %v2862 = vld [vmem:[%s2853 + $0x40] sm:$0x3]
      %v2863 = vld [vmem:[%s2853 + $0x48] sm:$0xff]
      %v2864 = vld [vmem:[%s2853 + $0x50] sm:$0xff]
      %v2865 = vld [vmem:[%s2853 + $0x58] sm:$0x3]
      %v2866 = vld [vmem:[%s2853 + $0x60] sm:$0xff]
      %v2867 = vld [vmem:[%s2853 + $0x68] sm:$0xff]
      %v2868 = vld [vmem:[%s2853 + $0x70] sm:$0x3]
      %v2869 = vld [vmem:[%s2853 + $0x78] sm:$0xff]
      %v2870 = vld [vmem:[%s2853 + $0x80] sm:$0xff]
      %v2871 = vld [vmem:[%s2853 + $0x88] sm:$0x3]
      %v2872 = vld [vmem:[%s2853 + $0x90] sm:$0xff]
      %v2873 = vld [vmem:[%s2853 + $0x98] sm:$0xff]
      %v2874 = vld [vmem:[%s2853 + $0xa0] sm:$0x3]
      %v2875 = vld [vmem:[%s2853 + $0xa8] sm:$0xff]
      %v2876 = vld [vmem:[%s2853 + $0xb0] sm:$0xff]
      %v2877 = vld [vmem:[%s2853 + $0xb8] sm:$0x3]
      %v2878 = vld [vmem:[#allocation4] sm:$0xff]
      %v2879 = vld [vmem:[#allocation4 + $0x8] sm:$0xff]
      %v2880 = vld [vmem:[#allocation4 + $0x10] sm:$0xff]
      %v2881 = vld [vmem:[#allocation4 + $0x18] sm:$0xff]
      %v2882 = vld [vmem:[#allocation4 + $0x20] sm:$0xff]
      %v2883 = vld [vmem:[#allocation4 + $0x28] sm:$0xff]
      %v2884 = vld [vmem:[#allocation4 + $0x30] sm:$0xff]
      %v2885 = vld [vmem:[#allocation4 + $0x38] sm:$0xff]
      %v2886 = vld [vmem:[#allocation4 + $0x40] sm:$0xff]
      %v2887 = vld [vmem:[#allocation4 + $0x48] sm:$0xff]
      %v2888 = vld [vmem:[#allocation4 + $0x50] sm:$0xff]
      %v2889 = vld [vmem:[#allocation4 + $0x58] sm:$0xff]
      %v2890 = vld [vmem:[#allocation4 + $0x60] sm:$0xff]
      %v2891 = vld [vmem:[#allocation4 + $0x68] sm:$0xff]
      %v2892 = vld [vmem:[#allocation4 + $0x70] sm:$0xff]
      %v2893 = vld [vmem:[#allocation4 + $0x78] sm:$0xff]
      %v2918 = vrot.slane %v2854, 1
      %v2919 = vrot.slane %v2855, 1
      %v2920 = vsel %vm352, %v2918, %v2919
      %v2921 = vrot.slane %v2856, 1
      %v2922 = vsel %vm352, %v2919, %v2921
      %v2923 = vrot.slane %v2857, 1
      %v2924 = vrot.slane %v2858, 1
      %v2925 = vsel %vm352, %v2923, %v2924
      %v2926 = vrot.slane %v2859, 1
      %v2927 = vsel %vm352, %v2924, %v2926
      %v2928 = vrot.slane %v2860, 1
      %v2929 = vrot.slane %v2861, 1
      %v2930 = vsel %vm352, %v2928, %v2929
      %v2931 = vrot.slane %v2862, 1
      %v2932 = vsel %vm352, %v2929, %v2931
      %v2933 = vrot.slane %v2863, 1
      %v2934 = vrot.slane %v2864, 1
      %v2935 = vsel %vm352, %v2933, %v2934
      %v2936 = vrot.slane %v2865, 1
      %v2937 = vsel %vm352, %v2934, %v2936
      %v2938 = vrot.slane %v2866, 1
      %v2939 = vrot.slane %v2867, 1
      %v2940 = vsel %vm352, %v2938, %v2939
      %v2941 = vrot.slane %v2868, 1
      %v2942 = vsel %vm352, %v2939, %v2941
      %v2943 = vrot.slane %v2869, 1
      %v2944 = vrot.slane %v2870, 1
      %v2945 = vsel %vm352, %v2943, %v2944
      %v2946 = vrot.slane %v2871, 1
      %v2947 = vsel %vm352, %v2944, %v2946
      %v2948 = vrot.slane %v2872, 1
      %v2949 = vrot.slane %v2873, 1
      %v2950 = vsel %vm352, %v2948, %v2949
      %v2951 = vrot.slane %v2874, 1
      %v2952 = vsel %vm352, %v2949, %v2951
      %v2953 = vrot.slane %v2875, 1
      %v2954 = vrot.slane %v2876, 1
      %v2955 = vsel %vm352, %v2953, %v2954
      %v2956 = vrot.slane %v2877, 1
      %v2957 = vsel %vm352, %v2954, %v2956
      %2958 = vrot.lane.b32.xlu0 %v2920, 8
      %v2959 = vpop.permute.xlu0 %2958
      %2960 = vrot.lane.b32.xlu0 %v2922, 8
      %v2961 = vpop.permute.xlu0 %2960
      %2962 = vrot.lane.b32.xlu0 %v2925, 8
      %v2963 = vpop.permute.xlu0 %2962
      %2964 = vrot.lane.b32.xlu0 %v2927, 8
      %v2965 = vpop.permute.xlu0 %2964
      %2966 = vrot.lane.b32.xlu0 %v2930, 8
      %v2967 = vpop.permute.xlu0 %2966
      %2968 = vrot.lane.b32.xlu0 %v2932, 8
      %v2969 = vpop.permute.xlu0 %2968
      %2970 = vrot.lane.b32.xlu0 %v2935, 8
      %v2971 = vpop.permute.xlu0 %2970
      %2972 = vrot.lane.b32.xlu0 %v2937, 8
      %v2973 = vpop.permute.xlu0 %2972
      %2974 = vrot.lane.b32.xlu0 %v2940, 8
      %v2975 = vpop.permute.xlu0 %2974
      %2976 = vrot.lane.b32.xlu0 %v2942, 8
      %v2977 = vpop.permute.xlu0 %2976
      %2978 = vrot.lane.b32.xlu0 %v2945, 8
      %v2979 = vpop.permute.xlu0 %2978
      %2980 = vrot.lane.b32.xlu0 %v2947, 8
      %v2981 = vpop.permute.xlu0 %2980
      %2982 = vrot.lane.b32.xlu0 %v2950, 8
      %v2983 = vpop.permute.xlu0 %2982
      %2984 = vrot.lane.b32.xlu0 %v2952, 8
      %v2985 = vpop.permute.xlu0 %2984
      %2986 = vrot.lane.b32.xlu0 %v2955, 8
      %v2987 = vpop.permute.xlu0 %2986
      %2988 = vrot.lane.b32.xlu0 %v2957, 8
      %v2989 = vpop.permute.xlu0 %2988
      %v3006 = vrot.slane %v2854, 2
      %v3007 = vrot.slane %v2855, 2
      %v3008 = vsel %vm463, %v3006, %v3007
      %v3009 = vrot.slane %v2856, 2
      %v3010 = vsel %vm463, %v3007, %v3009
      %v3011 = vrot.slane %v2857, 2
      %v3012 = vrot.slane %v2858, 2
      %v3013 = vsel %vm463, %v3011, %v3012
      %v3014 = vrot.slane %v2859, 2
      %v3015 = vsel %vm463, %v3012, %v3014
      %v3016 = vrot.slane %v2860, 2
      %v3017 = vrot.slane %v2861, 2
      %v3018 = vsel %vm463, %v3016, %v3017
      %v3019 = vrot.slane %v2862, 2
      %v3020 = vsel %vm463, %v3017, %v3019
      %v3021 = vrot.slane %v2863, 2
      %v3022 = vrot.slane %v2864, 2
      %v3023 = vsel %vm463, %v3021, %v3022
      %v3024 = vrot.slane %v2865, 2
      %v3025 = vsel %vm463, %v3022, %v3024
      %v3026 = vrot.slane %v2866, 2
      %v3027 = vrot.slane %v2867, 2
      %v3028 = vsel %vm463, %v3026, %v3027
      %v3029 = vrot.slane %v2868, 2
      %v3030 = vsel %vm463, %v3027, %v3029
      %v3031 = vrot.slane %v2869, 2
      %v3032 = vrot.slane %v2870, 2
      %v3033 = vsel %vm463, %v3031, %v3032
      %v3034 = vrot.slane %v2871, 2
      %v3035 = vsel %vm463, %v3032, %v3034
      %v3036 = vrot.slane %v2872, 2
      %v3037 = vrot.slane %v2873, 2
      %v3038 = vsel %vm463, %v3036, %v3037
      %v3039 = vrot.slane %v2874, 2
      %v3040 = vsel %vm463, %v3037, %v3039
      %v3041 = vrot.slane %v2875, 2
      %v3042 = vrot.slane %v2876, 2
      %v3043 = vsel %vm463, %v3041, %v3042
      %v3044 = vrot.slane %v2877, 2
      %v3045 = vsel %vm463, %v3042, %v3044
      %3046 = vrot.lane.b32.xlu0 %v3008, 16
      %v3047 = vpop.permute.xlu0 %3046
      %3048 = vrot.lane.b32.xlu0 %v3010, 16
      %v3049 = vpop.permute.xlu0 %3048
      %3050 = vrot.lane.b32.xlu0 %v3013, 16
      %v3051 = vpop.permute.xlu0 %3050
      %3052 = vrot.lane.b32.xlu0 %v3015, 16
      %v3053 = vpop.permute.xlu0 %3052
      %3054 = vrot.lane.b32.xlu0 %v3018, 16
      %v3055 = vpop.permute.xlu0 %3054
      %3056 = vrot.lane.b32.xlu0 %v3020, 16
      %v3057 = vpop.permute.xlu0 %3056
      %3058 = vrot.lane.b32.xlu0 %v3023, 16
      %v3059 = vpop.permute.xlu0 %3058
      %3060 = vrot.lane.b32.xlu0 %v3025, 16
      %v3061 = vpop.permute.xlu0 %3060
      %3062 = vrot.lane.b32.xlu0 %v3028, 16
      %v3063 = vpop.permute.xlu0 %3062
      %3064 = vrot.lane.b32.xlu0 %v3030, 16
      %v3065 = vpop.permute.xlu0 %3064
      %3066 = vrot.lane.b32.xlu0 %v3033, 16
      %v3067 = vpop.permute.xlu0 %3066
      %3068 = vrot.lane.b32.xlu0 %v3035, 16
      %v3069 = vpop.permute.xlu0 %3068
      %3070 = vrot.lane.b32.xlu0 %v3038, 16
      %v3071 = vpop.permute.xlu0 %3070
      %3072 = vrot.lane.b32.xlu0 %v3040, 16
      %v3073 = vpop.permute.xlu0 %3072
      %3074 = vrot.lane.b32.xlu0 %v3043, 16
      %v3075 = vpop.permute.xlu0 %3074
      %3076 = vrot.lane.b32.xlu0 %v3045, 16
      %v3077 = vpop.permute.xlu0 %3076
      %v3094 = vsel %vm249, %v2854, %v2959
      %v3095 = vsel %vm249, %v2855, %v2961
      %v3096 = vsel %vm249, %v2857, %v2963
      %v3097 = vsel %vm249, %v2858, %v2965
      %v3098 = vsel %vm249, %v2860, %v2967
      %v3099 = vsel %vm249, %v2861, %v2969
      %v3100 = vsel %vm249, %v2863, %v2971
      %v3101 = vsel %vm249, %v2864, %v2973
      %v3102 = vsel %vm249, %v2866, %v2975
      %v3103 = vsel %vm249, %v2867, %v2977
      %v3104 = vsel %vm249, %v2869, %v2979
      %v3105 = vsel %vm249, %v2870, %v2981
      %v3106 = vsel %vm249, %v2872, %v2983
      %v3107 = vsel %vm249, %v2873, %v2985
      %v3108 = vsel %vm249, %v2875, %v2987
      %v3109 = vsel %vm249, %v2876, %v2989
      %v3110 = vsel %vm2265, %v3094, %v3047
      %v3111 = vsel %vm2265, %v3095, %v3049
      %v3112 = vsel %vm2265, %v3096, %v3051
      %v3113 = vsel %vm2265, %v3097, %v3053
      %v3114 = vsel %vm2265, %v3098, %v3055
      %v3115 = vsel %vm2265, %v3099, %v3057
      %v3116 = vsel %vm2265, %v3100, %v3059
      %v3117 = vsel %vm2265, %v3101, %v3061
      %v3118 = vsel %vm2265, %v3102, %v3063
      %v3119 = vsel %vm2265, %v3103, %v3065
      %v3120 = vsel %vm2265, %v3104, %v3067
      %v3121 = vsel %vm2265, %v3105, %v3069
      %v3122 = vsel %vm2265, %v3106, %v3071
      %v3123 = vsel %vm2265, %v3107, %v3073
      %v3124 = vsel %vm2265, %v3108, %v3075
      %v3125 = vsel %vm2265, %v3109, %v3077
      %s3126 = scalar_lea.vmem %s3, 48
      %v3127 = vld [vmem:[%s3126] sm:$0xff]
      %v3128 = vld [vmem:[%s3126 + $0x8] sm:$0xff]
      %v3129 = vld [vmem:[%s3126 + $0x10] sm:$0xff]
      %v3131 = vsel %vm2285, %v3110, 0
      %v3134 = vsel %vm2285, %v3111, 0
      %v3137 = vsel %vm2285, %v3112, 0
      %v3140 = vsel %vm2285, %v3113, 0
      %v3143 = vsel %vm2285, %v3114, 0
      %v3146 = vsel %vm2285, %v3115, 0
      %v3149 = vsel %vm2285, %v3116, 0
      %v3152 = vsel %vm2285, %v3117, 0
      %v3155 = vsel %vm2285, %v3118, 0
      %v3158 = vsel %vm2285, %v3119, 0
      %v3161 = vsel %vm2285, %v3120, 0
      %v3164 = vsel %vm2285, %v3121, 0
      %v3167 = vsel %vm2285, %v3122, 0
      %v3170 = vsel %vm2285, %v3123, 0
      %v3173 = vsel %vm2285, %v3124, 0
      %v3176 = vsel %vm2285, %v3125, 0
      %3178 = vmatpush.msra.mxu0 0.0
      %3179 = vmatpush.msra.mxu0 0.0
      %3180 = vmatpush.msra.mxu0 0.0
      %3181 = vmatpush.msra.mxu0 0.0
      %3182 = vmatpush.msra.mxu0 0.0
      %3183 = vmatpush.msra.mxu0 0.0
      %3184 = vmatpush.msra.mxu0 0.0
      %3185 = vmatpush.msra.mxu0 0.0
      %3186 = vmatpush.msra.mxu0 0.0
      %3187 = vmatpush.msra.mxu0 0.0
      %3188 = vmatpush.msra.mxu0 0.0
      %3189 = vmatpush.msra.mxu0 0.0
      %3190 = vmatpush.msra.mxu0 0.0
      %3191 = vmatpush.msra.mxu0 %v3129
      %3192 = vmatpush.msra.mxu0 %v3128
      %3193 = vmatpush.msra.mxu0 %v3127
      %3194 = vmatmul.f32.gmra.mxu0 %v3131
      %v3195 = vpop.f32.mrf.mxu0
      %v3196 = vadd.f32 0.0, %v3195
      %3197 = vmatmul.f32.gmra.mxu0 %v3134
      %v3198 = vpop.f32.mrf.mxu0
      %v3199 = vadd.f32 0.0, %v3198
      %3200 = vmatmul.f32.gmra.mxu0 %v3137
      %v3201 = vpop.f32.mrf.mxu0
      %v3202 = vadd.f32 0.0, %v3201
      %3203 = vmatmul.f32.gmra.mxu0 %v3140
      %v3204 = vpop.f32.mrf.mxu0
      %v3205 = vadd.f32 0.0, %v3204
      %3206 = vmatmul.f32.gmra.mxu0 %v3143
      %v3207 = vpop.f32.mrf.mxu0
      %v3208 = vadd.f32 0.0, %v3207
      %3209 = vmatmul.f32.gmra.mxu0 %v3146
      %v3210 = vpop.f32.mrf.mxu0
      %v3211 = vadd.f32 0.0, %v3210
      %3212 = vmatmul.f32.gmra.mxu0 %v3149
      %v3213 = vpop.f32.mrf.mxu0
      %v3214 = vadd.f32 0.0, %v3213
      %3215 = vmatmul.f32.gmra.mxu0 %v3152
      %v3216 = vpop.f32.mrf.mxu0
      %v3217 = vadd.f32 0.0, %v3216
      %3218 = vmatmul.f32.gmra.mxu0 %v3155
      %v3219 = vpop.f32.mrf.mxu0
      %v3220 = vadd.f32 0.0, %v3219
      %3221 = vmatmul.f32.gmra.mxu0 %v3158
      %v3222 = vpop.f32.mrf.mxu0
      %v3223 = vadd.f32 0.0, %v3222
      %3224 = vmatmul.f32.gmra.mxu0 %v3161
      %v3225 = vpop.f32.mrf.mxu0
      %v3226 = vadd.f32 0.0, %v3225
      %3227 = vmatmul.f32.gmra.mxu0 %v3164
      %v3228 = vpop.f32.mrf.mxu0
      %v3229 = vadd.f32 0.0, %v3228
      %3230 = vmatmul.f32.gmra.mxu0 %v3167
      %v3231 = vpop.f32.mrf.mxu0
      %v3232 = vadd.f32 0.0, %v3231
      %3233 = vmatmul.f32.gmra.mxu0 %v3170
      %v3234 = vpop.f32.mrf.mxu0
      %v3235 = vadd.f32 0.0, %v3234
      %3236 = vmatmul.f32.gmra.mxu0 %v3173
      %v3237 = vpop.f32.mrf.mxu0
      %v3238 = vadd.f32 0.0, %v3237
      %3239 = vmatmul.f32.gmra.mxu0 %v3176
      %v3240 = vpop.f32.mrf.mxu0
      %v3241 = vadd.f32 0.0, %v3240
      %3242 = vdwg.mxu0
      %v3243 = vadd.f32 %v2878, %v3196
      %v3244 = vadd.f32 %v2879, %v3199
      %v3245 = vadd.f32 %v2880, %v3202
      %v3246 = vadd.f32 %v2881, %v3205
      %v3247 = vadd.f32 %v2882, %v3208
      %v3248 = vadd.f32 %v2883, %v3211
      %v3249 = vadd.f32 %v2884, %v3214
      %v3250 = vadd.f32 %v2885, %v3217
      %v3251 = vadd.f32 %v2886, %v3220
      %v3252 = vadd.f32 %v2887, %v3223
      %v3253 = vadd.f32 %v2888, %v3226
      %v3254 = vadd.f32 %v2889, %v3229
      %v3255 = vadd.f32 %v2890, %v3232
      %v3256 = vadd.f32 %v2891, %v3235
      %v3257 = vadd.f32 %v2892, %v3238
      %v3258 = vadd.f32 %v2893, %v3241
      %3259 = vst.msk [vmem:[#allocation4] sm:$0xff] %vm249, %v3243
      %3260 = vst.msk [vmem:[#allocation4 + $0x8] sm:$0xff] %vm249, %v3244
      %3261 = vst.msk [vmem:[#allocation4 + $0x10] sm:$0xff] %vm249, %v3245
      %3262 = vst.msk [vmem:[#allocation4 + $0x18] sm:$0xff] %vm249, %v3246
      %3263 = vst.msk [vmem:[#allocation4 + $0x20] sm:$0xff] %vm249, %v3247
      %3264 = vst.msk [vmem:[#allocation4 + $0x28] sm:$0xff] %vm249, %v3248
      %3265 = vst.msk [vmem:[#allocation4 + $0x30] sm:$0xff] %vm249, %v3249
      %3266 = vst.msk [vmem:[#allocation4 + $0x38] sm:$0xff] %vm249, %v3250
      %3267 = vst.msk [vmem:[#allocation4 + $0x40] sm:$0xff] %vm249, %v3251
      %3268 = vst.msk [vmem:[#allocation4 + $0x48] sm:$0xff] %vm249, %v3252
      %3269 = vst.msk [vmem:[#allocation4 + $0x50] sm:$0xff] %vm249, %v3253
      %3270 = vst.msk [vmem:[#allocation4 + $0x58] sm:$0xff] %vm249, %v3254
      %3271 = vst.msk [vmem:[#allocation4 + $0x60] sm:$0xff] %vm249, %v3255
      %3272 = vst.msk [vmem:[#allocation4 + $0x68] sm:$0xff] %vm249, %v3256
      %3273 = vst.msk [vmem:[#allocation4 + $0x70] sm:$0xff] %vm249, %v3257
      %3274 = vst.msk [vmem:[#allocation4 + $0x78] sm:$0xff] %vm249, %v3258
      %v3275 = vld [vmem:[#allocation4] sm:$0xff]
      %v3276 = vld [vmem:[#allocation4 + $0x8] sm:$0xff]
      %v3277 = vld [vmem:[#allocation4 + $0x10] sm:$0xff]
      %v3278 = vld [vmem:[#allocation4 + $0x18] sm:$0xff]
      %v3279 = vld [vmem:[#allocation4 + $0x20] sm:$0xff]
      %v3280 = vld [vmem:[#allocation4 + $0x28] sm:$0xff]
      %v3281 = vld [vmem:[#allocation4 + $0x30] sm:$0xff]
      %v3282 = vld [vmem:[#allocation4 + $0x38] sm:$0xff]
      %v3283 = vld [vmem:[#allocation4 + $0x40] sm:$0xff]
      %v3284 = vld [vmem:[#allocation4 + $0x48] sm:$0xff]
      %v3285 = vld [vmem:[#allocation4 + $0x50] sm:$0xff]
      %v3286 = vld [vmem:[#allocation4 + $0x58] sm:$0xff]
      %v3287 = vld [vmem:[#allocation4 + $0x60] sm:$0xff]
      %v3288 = vld [vmem:[#allocation4 + $0x68] sm:$0xff]
      %v3289 = vld [vmem:[#allocation4 + $0x70] sm:$0xff]
      %v3290 = vld [vmem:[#allocation4 + $0x78] sm:$0xff]
      %v3291 = vld [vmem:[%s4] sm:$0x1]
      %v3292 = vperm.slane %v3291, 0
      %v3293 = vmul.f32 %v3275, %v3292
      %v3294 = vmul.f32 %v3276, %v3292
      %v3295 = vmul.f32 %v3277, %v3292
      %v3296 = vmul.f32 %v3278, %v3292
      %v3297 = vmul.f32 %v3279, %v3292
      %v3298 = vmul.f32 %v3280, %v3292
      %v3299 = vmul.f32 %v3281, %v3292
      %v3300 = vmul.f32 %v3282, %v3292
      %v3301 = vmul.f32 %v3283, %v3292
      %v3302 = vmul.f32 %v3284, %v3292
      %v3303 = vmul.f32 %v3285, %v3292
      %v3304 = vmul.f32 %v3286, %v3292
      %v3305 = vmul.f32 %v3287, %v3292
      %v3306 = vmul.f32 %v3288, %v3292
      %v3307 = vmul.f32 %v3289, %v3292
      %v3308 = vmul.f32 %v3290, %v3292
      %v3309 = vld [vmem:[%s4 + $0x1] sm:$0x1]
      %v3310 = vperm.slane %v3309, 0
      %v3311 = vadd.f32 %v3293, %v3310
      %v3312 = vadd.f32 %v3294, %v3310
      %v3313 = vadd.f32 %v3295, %v3310
      %v3314 = vadd.f32 %v3296, %v3310
      %v3315 = vadd.f32 %v3297, %v3310
      %v3316 = vadd.f32 %v3298, %v3310
      %v3317 = vadd.f32 %v3299, %v3310
      %v3318 = vadd.f32 %v3300, %v3310
      %v3319 = vadd.f32 %v3301, %v3310
      %v3320 = vadd.f32 %v3302, %v3310
      %v3321 = vadd.f32 %v3303, %v3310
      %v3322 = vadd.f32 %v3304, %v3310
      %v3323 = vadd.f32 %v3305, %v3310
      %v3324 = vadd.f32 %v3306, %v3310
      %v3325 = vadd.f32 %v3307, %v3310
      %v3326 = vadd.f32 %v3308, %v3310
      %v3327 = vmax.f32 %v3311, 0.0
      %v3328 = vmax.f32 %v3312, 0.0
      %v3329 = vmax.f32 %v3313, 0.0
      %v3330 = vmax.f32 %v3314, 0.0
      %v3331 = vmax.f32 %v3315, 0.0
      %v3332 = vmax.f32 %v3316, 0.0
      %v3333 = vmax.f32 %v3317, 0.0
      %v3334 = vmax.f32 %v3318, 0.0
      %v3335 = vmax.f32 %v3319, 0.0
      %v3336 = vmax.f32 %v3320, 0.0
      %v3337 = vmax.f32 %v3321, 0.0
      %v3338 = vmax.f32 %v3322, 0.0
      %v3339 = vmax.f32 %v3323, 0.0
      %v3340 = vmax.f32 %v3324, 0.0
      %v3341 = vmax.f32 %v3325, 0.0
      %v3342 = vmax.f32 %v3326, 0.0
      %3343 = vst.msk [vmem:[%s246] sm:$0xff] %vm249, %v3327
      %3344 = vst.msk [vmem:[%s246 + $0x8] sm:$0xff] %vm249, %v3328
      %3345 = vst.msk [vmem:[%s246 + $0x10] sm:$0xff] %vm249, %v3329
      %3346 = vst.msk [vmem:[%s246 + $0x18] sm:$0xff] %vm249, %v3330
      %3347 = vst.msk [vmem:[%s246 + $0x20] sm:$0xff] %vm249, %v3331
      %3348 = vst.msk [vmem:[%s246 + $0x28] sm:$0xff] %vm249, %v3332
      %3349 = vst.msk [vmem:[%s246 + $0x30] sm:$0xff] %vm249, %v3333
      %3350 = vst.msk [vmem:[%s246 + $0x38] sm:$0xff] %vm249, %v3334
      %3351 = vst.msk [vmem:[%s246 + $0x40] sm:$0xff] %vm249, %v3335
      %3352 = vst.msk [vmem:[%s246 + $0x48] sm:$0xff] %vm249, %v3336
      %3353 = vst.msk [vmem:[%s246 + $0x50] sm:$0xff] %vm249, %v3337
      %3354 = vst.msk [vmem:[%s246 + $0x58] sm:$0xff] %vm249, %v3338
      %3355 = vst.msk [vmem:[%s246 + $0x60] sm:$0xff] %vm249, %v3339
      %3356 = vst.msk [vmem:[%s246 + $0x68] sm:$0xff] %vm249, %v3340
      %3357 = vst.msk [vmem:[%s246 + $0x70] sm:$0xff] %vm249, %v3341
      %3358 = vst.msk [vmem:[%s246 + $0x78] sm:$0xff] %vm249, %v3342
      %s3359 = smul.u32 16, %s21
      %p3360 = scmp.lt.s32.totalorder %s20, 1
      %s3361 = scalar_select %p3360, %s20, 1
      %p3362 = scmp.lt.s32.totalorder %s3359, 31
      %s3363 = scalar_select %p3362, %s3359, 31
      %s3364 = smul.addr %s3361, 32
      %s3365 = sadd.s32 %s3363, %s3364
      %s3366 = smul.addr %s3365, 8
      %s3367 = scalar_lea.vmem %s5, %s3366
      // Predicated region
      $region49: #{inconv_forward.1} parent=39 // pred_check
        %p3368 = pneg %p158
      $region50: #{inconv_forward.1} parent=39 // pred_check_branch
        %3370 = sbr.rel (%p3368) target = $region52
      $region51: #{inconv_forward.1} parent=39 // pred_region
        %s3371 = smul.u32 16, %s21
      $region52: #{inconv_forward.1} parent=39 // pred_fallthru
        _
    $region40: #{inconv_forward.1} parent=5 // pred_fallthru
      _
    %p3372 = scmp.le.s32.totalorder 2, %s11
    // Predicated region
    $region53: #{inconv_forward.1} parent=5 // pred_check
      %p3373 = pneg %p3372
    $region54: #{inconv_forward.1} parent=5 // pred_check_branch
      %3375 = sbr.rel (%p3373) target = $region56
    $region55: #{inconv_forward.1} parent=5 // pred_region
      %s3376 = ssub.s32 %s11, 2
      // Predicated region
      $region57: #{inconv_forward.1} parent=55 // pred_check
        %p3377 = pneg %p164
      $region58: #{inconv_forward.1} parent=55 // pred_check_branch
        %3379 = sbr.rel (%p3377) target = $region60
      $region59: #{inconv_forward.1} parent=55 // pred_region
        %s3380 = smul.u32 16, %s23
        %p3381 = scmp.lt.s32.totalorder %s22, 1
        %s3382 = scalar_select %p3381, %s22, 1
        %p3383 = scmp.lt.s32.totalorder %s3380, 31
        %s3384 = scalar_select %p3383, %s3380, 31
        %s3385 = smul.addr %s3382, 32
        %s3386 = sadd.s32 %s3384, %s3385
        %s3387 = smul.addr %s3386, 8
        %s3388 = scalar_lea.vmem %s5, %s3387
      $region60: #{inconv_forward.1} parent=55 // pred_fallthru
        _
    $region56: #{inconv_forward.1} parent=5 // pred_fallthru
      _
  $region6: #{inconv_forward.1} parent=0 // loop_footer
    %s15 = sadd.s32 1, %s11
  $region7: #{inconv_forward.1} parent=0 // loop_footer_branch
    %10 = sbr.rel target = $region3
  $region8: #{inconv_forward.1} parent=0 // loop_exit
    _

</llo_original>
